<compile_context>
chip_gen: v5e
topology: v5e:2x2
jax: 0.10.0
libtpu: 0.0.40
codegen_flags: <defaults>
</compile_context>

<pallas_src>
import functools

import numpy as np
import jax
import jax.numpy as jnp
from jax.experimental import pallas as pl
from jax.experimental.pallas import tpu as pltpu

# ---------------- model sizes (small, consistent with the module) ----------------
VOCAB = 32
EMBED = 32
HIDDEN = 32
Z_DIM = 8
BATCH = 8           # fills all 8 sublanes of every vreg
SEQ = 8
LAMB = 1.0          # free-bits lambda (k = 1)

# ---------------- packed-slab layout (all offsets static Python ints) ----------------
GB = 128                    # lanes per gate block (r / z / n each get a 128-lane block)
HPAD = 128                  # padded hidden-state lane width (real: 2H=64 enc, H=32 dec)
ENC_COL = 0                 # encoder gate blocks occupy lanes [0, 384)
DEC_COL = 3 * GB            # decoder gate blocks occupy lanes [384, 768)
SLAB_COLS = 6 * GB          # 768

ROW_GX = 0                  # (2V, 768)  fused onehot -> gx weights (embeds folded in)
ROW_HH = ROW_GX + 2 * VOCAB     # 64   (128, 768): [W_hh_enc | W_hh_dec]
ROW_HEAD = ROW_HH + HPAD        # 192  (128, 768): W_out | W_mean_std | W_up
ROW_BGX = ROW_HEAD + HPAD       # 320  (1, 768): hoisted gx bias (b_ih + b_hh[r,z])
ROW_BMISC = ROW_BGX + 8         # 328  (1, 768): b_hn_enc | b_hn_dec | b_up | b_out | b_ms
SLAB_ROWS = ROW_BMISC + 8       # 336


# ---------------------------------------------------------------------------
# Fused forward kernel
# ---------------------------------------------------------------------------
def _vae_fused_kernel(ids_ref, eps_ref, slab_ref, elbo_ref, kld_ref,
                      gx_scr, h_scr, *, B, S, H, V, Z, lamb):
    f32 = jnp.float32
    N = S * B  # time-major flat token count; row index = t * B + b

    ids = ids_ref[...]                       # (N, 4) int32
    tok = ids[:, 0:1]                        # token at time t       (time-major)
    tok_r = ids[:, 1:2]                      # token at time S-1-t   (reversed order)
    tgt = ids[:, 2:3]                        # target at time t

    # ---- one fused matmul: embeddings + ALL GRU input projections + hoisted biases ----
    col2 = jax.lax.broadcasted_iota(jnp.int32, (N, 2 * V), 1)
    oh2 = jnp.logical_or(col2 == tok, col2 == tok_r + V).astype(f32)   # (N, 2V)
    w_gx = slab_ref[ROW_GX:ROW_GX + 2 * V, :]                          # (2V, 768)
    b_gx = slab_ref[ROW_BGX:ROW_BGX + 1, :]                            # (1, 768)
    gx_scr[...] = jnp.dot(oh2, w_gx, preferred_element_type=f32) + b_gx

    # ---- merged fwd+bwd encoder GRU (one matmul / step, lane-aligned gates) ----
    whh_e = slab_ref[ROW_HH:ROW_HH + HPAD, ENC_COL:ENC_COL + 3 * GB]   # (128, 384)
    bhn_e = slab_ref[ROW_BMISC:ROW_BMISC + 1, 0:GB]                    # (1, 128)
    h2 = jnp.zeros((B, HPAD), f32)           # lanes [0:H)=h_fwd, [H:2H)=h_bwd, rest 0
    for t in range(S):
        r0 = t * B
        gr = gx_scr[r0:r0 + B, ENC_COL + 0 * GB:ENC_COL + 1 * GB]
        gz = gx_scr[r0:r0 + B, ENC_COL + 1 * GB:ENC_COL + 2 * GB]
        gn = gx_scr[r0:r0 + B, ENC_COL + 2 * GB:ENC_COL + 3 * GB]
        gh = jnp.dot(h2, whh_e, preferred_element_type=f32)            # (B, 384)
        r = jax.nn.sigmoid(gr + gh[:, 0:GB])
        z = jax.nn.sigmoid(gz + gh[:, GB:2 * GB])
        n = jnp.tanh(gn + r * (gh[:, 2 * GB:3 * GB] + bhn_e))
        h2 = (1.0 - z) * n + z * h2

    # h2 lanes [0:2H) == torch.cat((hidden[0], hidden[1]), dim=1)

    # ---- mean / softplus std / rsample / KL (free bits) / h0 = tanh(upscale(z)) ----
    w_ms = slab_ref[ROW_HEAD:ROW_HEAD + HPAD, GB:2 * GB]               # (128, 128)
    b_ms = slab_ref[ROW_BMISC:ROW_BMISC + 1, 4 * GB:5 * GB]            # (1, 128)
    ms = jnp.dot(h2, w_ms, preferred_element_type=f32) + b_ms          # (B, 128)
    mean = ms[:, 0:Z]
    s_pre = ms[:, Z:2 * Z]
    # numerically-stable softplus (matches torch.nn.functional.softplus, threshold=20)
    std = jnp.where(s_pre > 20.0, s_pre,
                    jnp.log1p(jnp.exp(jnp.minimum(s_pre, 20.0))))
    z_lat = mean + std * eps_ref[...]                                  # rsample
    kl = -jnp.log(std) + 0.5 * (std * std + mean * mean - 1.0)         # per-dim KL vs N(0,1)
    kld_b = jnp.sum(jnp.maximum(kl, f32(lamb)), axis=1, keepdims=True)  # free bits, (B,1)

    w_up = slab_ref[ROW_HEAD:ROW_HEAD + Z, 2 * GB:3 * GB]              # (Z, 128)
    b_up = slab_ref[ROW_BMISC:ROW_BMISC + 1, 2 * GB:3 * GB]            # (1, 128)
    h = jnp.tanh(jnp.dot(z_lat, w_up, preferred_element_type=f32) + b_up)  # (B, 128)

    # ---- decoder GRU (initial hidden = h); per-step states stored to VMEM scratch ----
    whh_d = slab_ref[ROW_HH:ROW_HH + HPAD, DEC_COL:DEC_COL + 3 * GB]   # (128, 384)
    bhn_d = slab_ref[ROW_BMISC:ROW_BMISC + 1, GB:2 * GB]               # (1, 128)
    for t in range(S):
        r0 = t * B
        gr = gx_scr[r0:r0 + B, DEC_COL + 0 * GB:DEC_COL + 1 * GB]
        gz = gx_scr[r0:r0 + B, DEC_COL + 1 * GB:DEC_COL + 2 * GB]
        gn = gx_scr[r0:r0 + B, DEC_COL + 2 * GB:DEC_COL + 3 * GB]
        gh = jnp.dot(h, whh_d, preferred_element_type=f32)             # (B, 384)
        r = jax.nn.sigmoid(gr + gh[:, 0:GB])
        z = jax.nn.sigmoid(gz + gh[:, GB:2 * GB])
        n = jnp.tanh(gn + r * (gh[:, 2 * GB:3 * GB] + bhn_d))
        h = (1.0 - z) * n + z * h
        h_scr[r0:r0 + B, :] = h

    # ---- vocab projection + cross-entropy (ignore_index=0, mean over valid tokens) ----
    w_out = slab_ref[ROW_HEAD:ROW_HEAD + HPAD, 0:GB]                   # (128, 128)
    b_out = slab_ref[ROW_BMISC:ROW_BMISC + 1, 3 * GB:4 * GB]           # (1, 128)
    h_all = h_scr[...]                                                 # (N, 128)
    logits = jnp.dot(h_all, w_out, preferred_element_type=f32) + b_out  # (N, 128)
    col = jax.lax.broadcasted_iota(jnp.int32, (N, GB), 1)
    logits = jnp.where(col < V, logits, f32(-1e30))                    # mask pad lanes
    mx = jnp.max(logits, axis=1, keepdims=True)
    lse = mx + jnp.log(jnp.sum(jnp.exp(logits - mx), axis=1, keepdims=True))
    picked = jnp.sum(jnp.where(col == tgt, logits, 0.0), axis=1, keepdims=True)
    valid = (tgt != 0).astype(f32)
    n_valid = jnp.maximum(jnp.sum(valid), 1.0)                         # guard all-ignored
    ce_mean = jnp.sum((lse - picked) * valid) / n_valid
    recon_loss = ce_mean * f32(S)                                      # criterion(...) * seq_len

    kld_ref[...] = kld_b
    elbo_ref[...] = jnp.reshape(jnp.sum(kld_b) / f32(B) + recon_loss, (1, 1))


# ---------------------------------------------------------------------------
# Parameter init (deterministic, PyTorch-like uniform(-1/sqrt(fan_in), ...)).
# GRU weights are (in_dim, 3H), gate order r | z | n; biases are (3H,).
# ---------------------------------------------------------------------------
def init_params(key):
    def unif(k, shape, fan_in):
        s = 1.0 / np.sqrt(np.float32(fan_in))
        return jax.random.uniform(k, shape, jnp.float32, -s, s)

    keys = jax.random.split(key, 24)
    H3 = 3 * HIDDEN
    p = {}
    p["enc_embed"] = jax.random.normal(keys[0], (VOCAB, EMBED), jnp.float32) * 0.1
    p["enc_wih_f"] = unif(keys[1], (EMBED, H3), HIDDEN)
    p["enc_whh_f"] = unif(keys[2], (HIDDEN, H3), HIDDEN)
    p["enc_bih_f"] = unif(keys[3], (H3,), HIDDEN)
    p["enc_bhh_f"] = unif(keys[4], (H3,), HIDDEN)
    p["enc_wih_b"] = unif(keys[5], (EMBED, H3), HIDDEN)
    p["enc_whh_b"] = unif(keys[6], (HIDDEN, H3), HIDDEN)
    p["enc_bih_b"] = unif(keys[7], (H3,), HIDDEN)
    p["enc_bhh_b"] = unif(keys[8], (H3,), HIDDEN)
    p["mean_w"] = unif(keys[9], (2 * HIDDEN, Z_DIM), 2 * HIDDEN)
    p["mean_b"] = unif(keys[10], (Z_DIM,), 2 * HIDDEN)
    p["std_w"] = unif(keys[11], (2 * HIDDEN, Z_DIM), 2 * HIDDEN)
    p["std_b"] = unif(keys[12], (Z_DIM,), 2 * HIDDEN)
    p["up_w"] = unif(keys[13], (Z_DIM, HIDDEN), Z_DIM)
    p["up_b"] = unif(keys[14], (HIDDEN,), Z_DIM)
    p["dec_embed"] = jax.random.normal(keys[15], (VOCAB, EMBED), jnp.float32) * 0.1
    p["dec_wih"] = unif(keys[16], (EMBED, H3), HIDDEN)
    p["dec_whh"] = unif(keys[17], (HIDDEN, H3), HIDDEN)
    p["dec_bih"] = unif(keys[18], (H3,), HIDDEN)
    p["dec_bhh"] = unif(keys[19], (H3,), HIDDEN)
    p["out_w"] = unif(keys[20], (HIDDEN, VOCAB), HIDDEN)
    p["out_b"] = unif(keys[21], (VOCAB,), HIDDEN)
    return p


# ---------------------------------------------------------------------------
# Offline packing: fold embeddings into W_ih, merge fwd/bwd encoder weights
# block-diagonally, hoist r/z hidden biases, pad gates to 128-lane blocks,
# and pack EVERYTHING into one lane-dense f32 slab.
# ---------------------------------------------------------------------------
def build_slab(p):
    H, V, Z = HIDDEN, VOCAB, Z_DIM
    npf = lambda x: np.asarray(x, np.float32)
    slab = np.zeros((SLAB_ROWS, SLAB_COLS), np.float32)

    # Fused input-projection weights: onehot . (embed @ W_ih)
    Wf = npf(p["enc_embed"]) @ npf(p["enc_wih_f"])     # (V, 3H)  r|z|n
    Wb = npf(p["enc_embed"]) @ npf(p["enc_wih_b"])
    Wd = npf(p["dec_embed"]) @ npf(p["dec_wih"])
    for g in range(3):
        # encoder fwd gates (matched against time-major tokens)
        slab[0:V, ENC_COL + g * GB:ENC_COL + g * GB + H] = Wf[:, g * H:(g + 1) * H]
        # encoder bwd gates (matched against reversed tokens), lane offset +H
        slab[V:2 * V, ENC_COL + g * GB + H:ENC_COL + g * GB + 2 * H] = Wb[:, g * H:(g + 1) * H]
        # decoder gates (time-major tokens)
        slab[0:V, DEC_COL + g * GB:DEC_COL + g * GB + H] = Wd[:, g * H:(g + 1) * H]

    # Hidden-to-hidden weights (block-diagonal fwd/bwd merge for the encoder)
    Wef, Web, Wdd = npf(p["enc_whh_f"]), npf(p["enc_whh_b"]), npf(p["dec_whh"])
    for g in range(3):
        slab[ROW_HH:ROW_HH + H, ENC_COL + g * GB:ENC_COL + g * GB + H] = Wef[:, g * H:(g + 1) * H]
        slab[ROW_HH + H:ROW_HH + 2 * H,
             ENC_COL + g * GB + H:ENC_COL + g * GB + 2 * H] = Web[:, g * H:(g + 1) * H]
        slab[ROW_HH:ROW_HH + H, DEC_COL + g * GB:DEC_COL + g * GB + H] = Wdd[:, g * H:(g + 1) * H]

    # Head weights
    slab[ROW_HEAD:ROW_HEAD + H, 0:V] = npf(p["out_w"])                         # (H, V)
    slab[ROW_HEAD:ROW_HEAD + 2 * H, GB:GB + Z] = npf(p["mean_w"])              # (2H, Z)
    slab[ROW_HEAD:ROW_HEAD + 2 * H, GB + Z:GB + 2 * Z] = npf(p["std_w"])       # (2H, Z)
    slab[ROW_HEAD:ROW_HEAD + Z, 2 * GB:2 * GB + H] = npf(p["up_w"])            # (Z, H)

    # Hoisted gx bias: b_ih (all gates) + b_hh (r, z only; b_hn stays in the loop)
    bihf, bhhf = npf(p["enc_bih_f"]), npf(p["enc_bhh_f"])
    bihb, bhhb = npf(p["enc_bih_b"]), npf(p["enc_bhh_b"])
    bihd, bhhd = npf(p["dec_bih"]), npf(p["dec_bhh"])
    for g in range(3):
        hh = 1.0 if g < 2 else 0.0
        slab[ROW_BGX, ENC_COL + g * GB:ENC_COL + g * GB + H] = \
            bihf[g * H:(g + 1) * H] + hh * bhhf[g * H:(g + 1) * H]
        slab[ROW_BGX, ENC_COL + g * GB + H:ENC_COL + g * GB + 2 * H] = \
            bihb[g * H:(g + 1) * H] + hh * bhhb[g * H:(g + 1) * H]
        slab[ROW_BGX, DEC_COL + g * GB:DEC_COL + g * GB + H] = \
            bihd[g * H:(g + 1) * H] + hh * bhhd[g * H:(g + 1) * H]

    # Misc biases: b_hn (enc fwd|bwd), b_hn (dec), up_b, out_b, mean_b|std_b
    slab[ROW_BMISC, 0:H] = bhhf[2 * H:3 * H]
    slab[ROW_BMISC, H:2 * H] = bhhb[2 * H:3 * H]
    slab[ROW_BMISC, GB:GB + H] = bhhd[2 * H:3 * H]
    slab[ROW_BMISC, 2 * GB:2 * GB + H] = npf(p["up_b"])
    slab[ROW_BMISC, 3 * GB:3 * GB + V] = npf(p["out_b"])
    slab[ROW_BMISC, 4 * GB:4 * GB + Z] = npf(p["mean_b"])
    slab[ROW_BMISC, 4 * GB + Z:4 * GB + 2 * Z] = npf(p["std_b"])
    return jnp.asarray(slab)


# ---------------------------------------------------------------------------
# Full forward pass (== FreeBitsVAE.forward; `lengths` unused, as in the module)
# ---------------------------------------------------------------------------
@jax.jit
def free_bits_vae_forward(slab, tokens, targets, eps):
    B, S = tokens.shape
    N = S * B
    # Only tiny (B, S) int32 id arrays are reordered (time-major + reversed copy)
    # outside the kernel; all activation-sized work is inside the fused kernel.
    tok_tm = jnp.transpose(tokens).reshape(N).astype(jnp.int32)            # row t*B+b = tokens[b, t]
    tok_rev = jnp.transpose(tokens[:, ::-1]).reshape(N).astype(jnp.int32)  # row t*B+b = tokens[b, S-1-t]
    tgt_tm = jnp.transpose(targets).reshape(N).astype(jnp.int32)
    ids = jnp.stack([tok_tm, tok_rev, tgt_tm, jnp.zeros((N,), jnp.int32)], axis=1)  # (N, 4)

    kernel = functools.partial(_vae_fused_kernel, B=B, S=S, H=HIDDEN, V=VOCAB,
                               Z=Z_DIM, lamb=LAMB)
    elbo, kld = pl.pallas_call(
        kernel,
        out_shape=(
            jax.ShapeDtypeStruct((1, 1), jnp.float32),   # average negative ELBO
            jax.ShapeDtypeStruct((B, 1), jnp.float32),   # per-sequence free-bits KLD
        ),
        scratch_shapes=[
            pltpu.VMEM((N, SLAB_COLS), jnp.float32),     # hoisted gx projections (all GRUs)
            pltpu.VMEM((N, HPAD), jnp.float32),          # decoder hidden states
        ],
    )(ids, eps, slab)
    return elbo[0, 0], kld[:, 0]


if __name__ == "__main__":
    key = jax.random.PRNGKey(0)
    k_par, k_in, k_tgt, k_eps = jax.random.split(key, 4)

    params = init_params(k_par)
    slab = build_slab(params)
    tokens = jax.random.randint(k_in, (BATCH, SEQ), 1, VOCAB, dtype=jnp.int32)
    targets = jax.random.randint(k_tgt, (BATCH, SEQ), 0, VOCAB, dtype=jnp.int32)  # 0 = ignore_index
    eps = jax.random.normal(k_eps, (BATCH, Z_DIM), jnp.float32)  # reparameterization noise

    elbo, KLD = free_bits_vae_forward(slab, tokens, targets, eps)
    jax.block_until_ready((elbo, KLD))

    assert elbo.shape == () and KLD.shape == (BATCH,)
    assert bool(jnp.isfinite(elbo))
    assert bool(jnp.all(jnp.isfinite(KLD)))
    # free-bits floor: each of Z_DIM dims is clamped at >= LAMB before summing
    assert bool(jnp.all(KLD >= Z_DIM * LAMB - 1e-3))
    print("KERNEL_OK")
</pallas_src>

<mosaic_0001>
module attributes {stable_mosaic.version = 11 : i64} {
  func.func @_vae_fused_kernel(%arg0: memref<64x4xi32, #tpu.memory_space<vmem>>, %arg1: memref<8x8xf32, #tpu.memory_space<vmem>>, %arg2: memref<336x768xf32, #tpu.memory_space<vmem>>, %arg3: memref<1x1xf32, #tpu.memory_space<vmem>>, %arg4: memref<8x1xf32, #tpu.memory_space<vmem>>, %arg5: memref<64x768xf32, #tpu.memory_space<vmem>>, %arg6: memref<64x128xf32, #tpu.memory_space<vmem>>) attributes {dimension_semantics = [], scalar_prefetch = 0 : i64, scratch_operands = 2 : i64, tpu.core_type = #tpu.core_type<tc>} {
    %c0 = arith.constant 0 : index
    %c0_0 = arith.constant 0 : index
    %0 = vector.load %arg0[%c0, %c0_0] : memref<64x4xi32, #tpu.memory_space<vmem>>, vector<64x4xi32>
    %1 = vector.extract_strided_slice %0 {offsets = [0, 0], sizes = [64, 1], strides = [1, 1]} : vector<64x4xi32> to vector<64x1xi32>
    %2 = vector.extract_strided_slice %0 {offsets = [0, 1], sizes = [64, 1], strides = [1, 1]} : vector<64x4xi32> to vector<64x1xi32>
    %3 = vector.extract_strided_slice %0 {offsets = [0, 2], sizes = [64, 1], strides = [1, 1]} : vector<64x4xi32> to vector<64x1xi32>
    %4 = tpu.iota {dimensions = array<i32: 1>} : vector<64x64xi32>
    %5 = vector.broadcast %1 : vector<64x1xi32> to vector<64x64xi32>
    %6 = arith.cmpi eq, %4, %5 : vector<64x64xi32>
    %c32_i32 = arith.constant 32 : i32
    %7 = vector.broadcast %c32_i32 : i32 to vector<64x1xi32>
    %8 = arith.addi %2, %7 : vector<64x1xi32>
    %9 = vector.broadcast %8 : vector<64x1xi32> to vector<64x64xi32>
    %10 = arith.cmpi eq, %4, %9 : vector<64x64xi32>
    %11 = arith.ori %6, %10 : vector<64x64xi1>
    %12 = arith.extui %11 : vector<64x64xi1> to vector<64x64xi32>
    %13 = arith.sitofp %12 : vector<64x64xi32> to vector<64x64xf32>
    %c0_1 = arith.constant 0 : index
    %c0_2 = arith.constant 0 : index
    %14 = vector.load %arg2[%c0_1, %c0_2] : memref<336x768xf32, #tpu.memory_space<vmem>>, vector<64x768xf32>
    %c320 = arith.constant 320 : index
    %c0_3 = arith.constant 0 : index
    %15 = vector.load %arg2[%c320, %c0_3] : memref<336x768xf32, #tpu.memory_space<vmem>>, vector<1x768xf32>
    %cst = arith.constant dense<0.000000e+00> : vector<64x768xf32>
    %16 = tpu.matmul %13, %14, %cst {dimension_numbers = #tpu.dot_dimension_numbers<[1], [0], [0], [1], [0, 0, 1, 1], [], []>} : vector<64x64xf32>, vector<64x768xf32>, vector<64x768xf32> -> vector<64x768xf32>
    %17 = vector.broadcast %15 : vector<1x768xf32> to vector<64x768xf32>
    %18 = arith.addf %16, %17 : vector<64x768xf32>
    %c0_4 = arith.constant 0 : index
    %c0_5 = arith.constant 0 : index
    %19 = vector.load %arg5[%c0_4, %c0_5] : memref<64x768xf32, #tpu.memory_space<vmem>>, vector<64x768xf32>
    tpu.vector_store %arg5[%c0_4, %c0_5], %18 {strides = array<i32>} : memref<64x768xf32, #tpu.memory_space<vmem>>, vector<64x768xf32>,
    %c64 = arith.constant 64 : index
    %c0_6 = arith.constant 0 : index
    %20 = vector.load %arg2[%c64, %c0_6] : memref<336x768xf32, #tpu.memory_space<vmem>>, vector<128x384xf32>
    %c328 = arith.constant 328 : index
    %c0_7 = arith.constant 0 : index
    %21 = vector.load %arg2[%c328, %c0_7] : memref<336x768xf32, #tpu.memory_space<vmem>>, vector<1x128xf32>
    %cst_8 = arith.constant 0.000000e+00 : f32
    %22 = vector.broadcast %cst_8 : f32 to vector<8x128xf32>
    %c0_9 = arith.constant 0 : index
    %c0_10 = arith.constant 0 : index
    %23 = vector.load %arg5[%c0_9, %c0_10] : memref<64x768xf32, #tpu.memory_space<vmem>>, vector<8x128xf32>
    %c0_11 = arith.constant 0 : index
    %c128 = arith.constant 128 : index
    %24 = vector.load %arg5[%c0_11, %c128] : memref<64x768xf32, #tpu.memory_space<vmem>>, vector<8x128xf32>
    %c0_12 = arith.constant 0 : index
    %c256 = arith.constant 256 : index
    %25 = vector.load %arg5[%c0_12, %c256] : memref<64x768xf32, #tpu.memory_space<vmem>>, vector<8x128xf32>
    %cst_13 = arith.constant dense<0.000000e+00> : vector<8x384xf32>
    %26 = tpu.matmul %22, %20, %cst_13 {dimension_numbers = #tpu.dot_dimension_numbers<[1], [0], [0], [1], [0, 0, 1, 1], [], []>} : vector<8x128xf32>, vector<128x384xf32>, vector<8x384xf32> -> vector<8x384xf32>
    %27 = vector.extract_strided_slice %26 {offsets = [0, 0], sizes = [8, 128], strides = [1, 1]} : vector<8x384xf32> to vector<8x128xf32>
    %28 = arith.addf %23, %27 : vector<8x128xf32>
    %29 = arith.negf %28 : vector<8x128xf32>
    %30 = math.exp %29 : vector<8x128xf32>
    %cst_14 = arith.constant 1.000000e+00 : f32
    %31 = vector.broadcast %cst_14 : f32 to vector<8x128xf32>
    %32 = arith.addf %31, %30 : vector<8x128xf32>
    %33 = arith.divf %31, %32 : vector<8x128xf32>
    %34 = vector.extract_strided_slice %26 {offsets = [0, 128], sizes = [8, 128], strides = [1, 1]} : vector<8x384xf32> to vector<8x128xf32>
    %35 = arith.addf %24, %34 : vector<8x128xf32>
    %36 = arith.negf %35 : vector<8x128xf32>
    %37 = math.exp %36 : vector<8x128xf32>
    %cst_15 = arith.constant 1.000000e+00 : f32
    %38 = vector.broadcast %cst_15 : f32 to vector<8x128xf32>
    %39 = arith.addf %38, %37 : vector<8x128xf32>
    %40 = arith.divf %38, %39 : vector<8x128xf32>
    %41 = vector.extract_strided_slice %26 {offsets = [0, 256], sizes = [8, 128], strides = [1, 1]} : vector<8x384xf32> to vector<8x128xf32>
    %42 = vector.broadcast %21 : vector<1x128xf32> to vector<8x128xf32>
    %43 = arith.addf %41, %42 : vector<8x128xf32>
    %44 = arith.mulf %33, %43 : vector<8x128xf32>
    %45 = arith.addf %25, %44 : vector<8x128xf32>
    %46 = math.tanh %45 : vector<8x128xf32>
    %cst_16 = arith.constant 1.000000e+00 : f32
    %47 = vector.broadcast %cst_16 : f32 to vector<8x128xf32>
    %48 = arith.subf %47, %40 : vector<8x128xf32>
    %49 = arith.mulf %48, %46 : vector<8x128xf32>
    %50 = arith.mulf %40, %22 : vector<8x128xf32>
    %51 = arith.addf %49, %50 : vector<8x128xf32>
    %c8 = arith.constant 8 : index
    %c0_17 = arith.constant 0 : index
    %52 = vector.load %arg5[%c8, %c0_17] : memref<64x768xf32, #tpu.memory_space<vmem>>, vector<8x128xf32>
    %c8_18 = arith.constant 8 : index
    %c128_19 = arith.constant 128 : index
    %53 = vector.load %arg5[%c8_18, %c128_19] : memref<64x768xf32, #tpu.memory_space<vmem>>, vector<8x128xf32>
    %c8_20 = arith.constant 8 : index
    %c256_21 = arith.constant 256 : index
    %54 = vector.load %arg5[%c8_20, %c256_21] : memref<64x768xf32, #tpu.memory_space<vmem>>, vector<8x128xf32>
    %cst_22 = arith.constant dense<0.000000e+00> : vector<8x384xf32>
    %55 = tpu.matmul %51, %20, %cst_22 {dimension_numbers = #tpu.dot_dimension_numbers<[1], [0], [0], [1], [0, 0, 1, 1], [], []>} : vector<8x128xf32>, vector<128x384xf32>, vector<8x384xf32> -> vector<8x384xf32>
    %56 = vector.extract_strided_slice %55 {offsets = [0, 0], sizes = [8, 128], strides = [1, 1]} : vector<8x384xf32> to vector<8x128xf32>
    %57 = arith.addf %52, %56 : vector<8x128xf32>
    %58 = arith.negf %57 : vector<8x128xf32>
    %59 = math.exp %58 : vector<8x128xf32>
    %cst_23 = arith.constant 1.000000e+00 : f32
    %60 = vector.broadcast %cst_23 : f32 to vector<8x128xf32>
    %61 = arith.addf %60, %59 : vector<8x128xf32>
    %62 = arith.divf %60, %61 : vector<8x128xf32>
    %63 = vector.extract_strided_slice %55 {offsets = [0, 128], sizes = [8, 128], strides = [1, 1]} : vector<8x384xf32> to vector<8x128xf32>
    %64 = arith.addf %53, %63 : vector<8x128xf32>
    %65 = arith.negf %64 : vector<8x128xf32>
    %66 = math.exp %65 : vector<8x128xf32>
    %cst_24 = arith.constant 1.000000e+00 : f32
    %67 = vector.broadcast %cst_24 : f32 to vector<8x128xf32>
    %68 = arith.addf %67, %66 : vector<8x128xf32>
    %69 = arith.divf %67, %68 : vector<8x128xf32>
    %70 = vector.extract_strided_slice %55 {offsets = [0, 256], sizes = [8, 128], strides = [1, 1]} : vector<8x384xf32> to vector<8x128xf32>
    %71 = vector.broadcast %21 : vector<1x128xf32> to vector<8x128xf32>
    %72 = arith.addf %70, %71 : vector<8x128xf32>
    %73 = arith.mulf %62, %72 : vector<8x128xf32>
    %74 = arith.addf %54, %73 : vector<8x128xf32>
    %75 = math.tanh %74 : vector<8x128xf32>
    %cst_25 = arith.constant 1.000000e+00 : f32
    %76 = vector.broadcast %cst_25 : f32 to vector<8x128xf32>
    %77 = arith.subf %76, %69 : vector<8x128xf32>
    %78 = arith.mulf %77, %75 : vector<8x128xf32>
    %79 = arith.mulf %69, %51 : vector<8x128xf32>
    %80 = arith.addf %78, %79 : vector<8x128xf32>
    %c16 = arith.constant 16 : index
    %c0_26 = arith.constant 0 : index
    %81 = vector.load %arg5[%c16, %c0_26] : memref<64x768xf32, #tpu.memory_space<vmem>>, vector<8x128xf32>
    %c16_27 = arith.constant 16 : index
    %c128_28 = arith.constant 128 : index
    %82 = vector.load %arg5[%c16_27, %c128_28] : memref<64x768xf32, #tpu.memory_space<vmem>>, vector<8x128xf32>
    %c16_29 = arith.constant 16 : index
    %c256_30 = arith.constant 256 : index
    %83 = vector.load %arg5[%c16_29, %c256_30] : memref<64x768xf32, #tpu.memory_space<vmem>>, vector<8x128xf32>
    %cst_31 = arith.constant dense<0.000000e+00> : vector<8x384xf32>
    %84 = tpu.matmul %80, %20, %cst_31 {dimension_numbers = #tpu.dot_dimension_numbers<[1], [0], [0], [1], [0, 0, 1, 1], [], []>} : vector<8x128xf32>, vector<128x384xf32>, vector<8x384xf32> -> vector<8x384xf32>
    %85 = vector.extract_strided_slice %84 {offsets = [0, 0], sizes = [8, 128], strides = [1, 1]} : vector<8x384xf32> to vector<8x128xf32>
    %86 = arith.addf %81, %85 : vector<8x128xf32>
    %87 = arith.negf %86 : vector<8x128xf32>
    %88 = math.exp %87 : vector<8x128xf32>
    %cst_32 = arith.constant 1.000000e+00 : f32
    %89 = vector.broadcast %cst_32 : f32 to vector<8x128xf32>
    %90 = arith.addf %89, %88 : vector<8x128xf32>
    %91 = arith.divf %89, %90 : vector<8x128xf32>
    %92 = vector.extract_strided_slice %84 {offsets = [0, 128], sizes = [8, 128], strides = [1, 1]} : vector<8x384xf32> to vector<8x128xf32>
    %93 = arith.addf %82, %92 : vector<8x128xf32>
    %94 = arith.negf %93 : vector<8x128xf32>
    %95 = math.exp %94 : vector<8x128xf32>
    %cst_33 = arith.constant 1.000000e+00 : f32
    %96 = vector.broadcast %cst_33 : f32 to vector<8x128xf32>
    %97 = arith.addf %96, %95 : vector<8x128xf32>
    %98 = arith.divf %96, %97 : vector<8x128xf32>
    %99 = vector.extract_strided_slice %84 {offsets = [0, 256], sizes = [8, 128], strides = [1, 1]} : vector<8x384xf32> to vector<8x128xf32>
    %100 = vector.broadcast %21 : vector<1x128xf32> to vector<8x128xf32>
    %101 = arith.addf %99, %100 : vector<8x128xf32>
    %102 = arith.mulf %91, %101 : vector<8x128xf32>
    %103 = arith.addf %83, %102 : vector<8x128xf32>
    %104 = math.tanh %103 : vector<8x128xf32>
    %cst_34 = arith.constant 1.000000e+00 : f32
    %105 = vector.broadcast %cst_34 : f32 to vector<8x128xf32>
    %106 = arith.subf %105, %98 : vector<8x128xf32>
    %107 = arith.mulf %106, %104 : vector<8x128xf32>
    %108 = arith.mulf %98, %80 : vector<8x128xf32>
    %109 = arith.addf %107, %108 : vector<8x128xf32>
    %c24 = arith.constant 24 : index
    %c0_35 = arith.constant 0 : index
    %110 = vector.load %arg5[%c24, %c0_35] : memref<64x768xf32, #tpu.memory_space<vmem>>, vector<8x128xf32>
    %c24_36 = arith.constant 24 : index
    %c128_37 = arith.constant 128 : index
    %111 = vector.load %arg5[%c24_36, %c128_37] : memref<64x768xf32, #tpu.memory_space<vmem>>, vector<8x128xf32>
    %c24_38 = arith.constant 24 : index
    %c256_39 = arith.constant 256 : index
    %112 = vector.load %arg5[%c24_38, %c256_39] : memref<64x768xf32, #tpu.memory_space<vmem>>, vector<8x128xf32>
    %cst_40 = arith.constant dense<0.000000e+00> : vector<8x384xf32>
    %113 = tpu.matmul %109, %20, %cst_40 {dimension_numbers = #tpu.dot_dimension_numbers<[1], [0], [0], [1], [0, 0, 1, 1], [], []>} : vector<8x128xf32>, vector<128x384xf32>, vector<8x384xf32> -> vector<8x384xf32>
    %114 = vector.extract_strided_slice %113 {offsets = [0, 0], sizes = [8, 128], strides = [1, 1]} : vector<8x384xf32> to vector<8x128xf32>
    %115 = arith.addf %110, %114 : vector<8x128xf32>
    %116 = arith.negf %115 : vector<8x128xf32>
    %117 = math.exp %116 : vector<8x128xf32>
    %cst_41 = arith.constant 1.000000e+00 : f32
    %118 = vector.broadcast %cst_41 : f32 to vector<8x128xf32>
    %119 = arith.addf %118, %117 : vector<8x128xf32>
    %120 = arith.divf %118, %119 : vector<8x128xf32>
    %121 = vector.extract_strided_slice %113 {offsets = [0, 128], sizes = [8, 128], strides = [1, 1]} : vector<8x384xf32> to vector<8x128xf32>
    %122 = arith.addf %111, %121 : vector<8x128xf32>
    %123 = arith.negf %122 : vector<8x128xf32>
    %124 = math.exp %123 : vector<8x128xf32>
    %cst_42 = arith.constant 1.000000e+00 : f32
    %125 = vector.broadcast %cst_42 : f32 to vector<8x128xf32>
    %126 = arith.addf %125, %124 : vector<8x128xf32>
    %127 = arith.divf %125, %126 : vector<8x128xf32>
    %128 = vector.extract_strided_slice %113 {offsets = [0, 256], sizes = [8, 128], strides = [1, 1]} : vector<8x384xf32> to vector<8x128xf32>
    %129 = vector.broadcast %21 : vector<1x128xf32> to vector<8x128xf32>
    %130 = arith.addf %128, %129 : vector<8x128xf32>
    %131 = arith.mulf %120, %130 : vector<8x128xf32>
    %132 = arith.addf %112, %131 : vector<8x128xf32>
    %133 = math.tanh %132 : vector<8x128xf32>
    %cst_43 = arith.constant 1.000000e+00 : f32
    %134 = vector.broadcast %cst_43 : f32 to vector<8x128xf32>
    %135 = arith.subf %134, %127 : vector<8x128xf32>
    %136 = arith.mulf %135, %133 : vector<8x128xf32>
    %137 = arith.mulf %127, %109 : vector<8x128xf32>
    %138 = arith.addf %136, %137 : vector<8x128xf32>
    %c32 = arith.constant 32 : index
    %c0_44 = arith.constant 0 : index
    %139 = vector.load %arg5[%c32, %c0_44] : memref<64x768xf32, #tpu.memory_space<vmem>>, vector<8x128xf32>
    %c32_45 = arith.constant 32 : index
    %c128_46 = arith.constant 128 : index
    %140 = vector.load %arg5[%c32_45, %c128_46] : memref<64x768xf32, #tpu.memory_space<vmem>>, vector<8x128xf32>
    %c32_47 = arith.constant 32 : index
    %c256_48 = arith.constant 256 : index
    %141 = vector.load %arg5[%c32_47, %c256_48] : memref<64x768xf32, #tpu.memory_space<vmem>>, vector<8x128xf32>
    %cst_49 = arith.constant dense<0.000000e+00> : vector<8x384xf32>
    %142 = tpu.matmul %138, %20, %cst_49 {dimension_numbers = #tpu.dot_dimension_numbers<[1], [0], [0], [1], [0, 0, 1, 1], [], []>} : vector<8x128xf32>, vector<128x384xf32>, vector<8x384xf32> -> vector<8x384xf32>
    %143 = vector.extract_strided_slice %142 {offsets = [0, 0], sizes = [8, 128], strides = [1, 1]} : vector<8x384xf32> to vector<8x128xf32>
    %144 = arith.addf %139, %143 : vector<8x128xf32>
    %145 = arith.negf %144 : vector<8x128xf32>
    %146 = math.exp %145 : vector<8x128xf32>
    %cst_50 = arith.constant 1.000000e+00 : f32
    %147 = vector.broadcast %cst_50 : f32 to vector<8x128xf32>
    %148 = arith.addf %147, %146 : vector<8x128xf32>
    %149 = arith.divf %147, %148 : vector<8x128xf32>
    %150 = vector.extract_strided_slice %142 {offsets = [0, 128], sizes = [8, 128], strides = [1, 1]} : vector<8x384xf32> to vector<8x128xf32>
    %151 = arith.addf %140, %150 : vector<8x128xf32>
    %152 = arith.negf %151 : vector<8x128xf32>
    %153 = math.exp %152 : vector<8x128xf32>
    %cst_51 = arith.constant 1.000000e+00 : f32
    %154 = vector.broadcast %cst_51 : f32 to vector<8x128xf32>
    %155 = arith.addf %154, %153 : vector<8x128xf32>
    %156 = arith.divf %154, %155 : vector<8x128xf32>
    %157 = vector.extract_strided_slice %142 {offsets = [0, 256], sizes = [8, 128], strides = [1, 1]} : vector<8x384xf32> to vector<8x128xf32>
    %158 = vector.broadcast %21 : vector<1x128xf32> to vector<8x128xf32>
    %159 = arith.addf %157, %158 : vector<8x128xf32>
    %160 = arith.mulf %149, %159 : vector<8x128xf32>
    %161 = arith.addf %141, %160 : vector<8x128xf32>
    %162 = math.tanh %161 : vector<8x128xf32>
    %cst_52 = arith.constant 1.000000e+00 : f32
    %163 = vector.broadcast %cst_52 : f32 to vector<8x128xf32>
    %164 = arith.subf %163, %156 : vector<8x128xf32>
    %165 = arith.mulf %164, %162 : vector<8x128xf32>
    %166 = arith.mulf %156, %138 : vector<8x128xf32>
    %167 = arith.addf %165, %166 : vector<8x128xf32>
    %c40 = arith.constant 40 : index
    %c0_53 = arith.constant 0 : index
    %168 = vector.load %arg5[%c40, %c0_53] : memref<64x768xf32, #tpu.memory_space<vmem>>, vector<8x128xf32>
    %c40_54 = arith.constant 40 : index
    %c128_55 = arith.constant 128 : index
    %169 = vector.load %arg5[%c40_54, %c128_55] : memref<64x768xf32, #tpu.memory_space<vmem>>, vector<8x128xf32>
    %c40_56 = arith.constant 40 : index
    %c256_57 = arith.constant 256 : index
    %170 = vector.load %arg5[%c40_56, %c256_57] : memref<64x768xf32, #tpu.memory_space<vmem>>, vector<8x128xf32>
    %cst_58 = arith.constant dense<0.000000e+00> : vector<8x384xf32>
    %171 = tpu.matmul %167, %20, %cst_58 {dimension_numbers = #tpu.dot_dimension_numbers<[1], [0], [0], [1], [0, 0, 1, 1], [], []>} : vector<8x128xf32>, vector<128x384xf32>, vector<8x384xf32> -> vector<8x384xf32>
    %172 = vector.extract_strided_slice %171 {offsets = [0, 0], sizes = [8, 128], strides = [1, 1]} : vector<8x384xf32> to vector<8x128xf32>
    %173 = arith.addf %168, %172 : vector<8x128xf32>
    %174 = arith.negf %173 : vector<8x128xf32>
    %175 = math.exp %174 : vector<8x128xf32>
    %cst_59 = arith.constant 1.000000e+00 : f32
    %176 = vector.broadcast %cst_59 : f32 to vector<8x128xf32>
    %177 = arith.addf %176, %175 : vector<8x128xf32>
    %178 = arith.divf %176, %177 : vector<8x128xf32>
    %179 = vector.extract_strided_slice %171 {offsets = [0, 128], sizes = [8, 128], strides = [1, 1]} : vector<8x384xf32> to vector<8x128xf32>
    %180 = arith.addf %169, %179 : vector<8x128xf32>
    %181 = arith.negf %180 : vector<8x128xf32>
    %182 = math.exp %181 : vector<8x128xf32>
    %cst_60 = arith.constant 1.000000e+00 : f32
    %183 = vector.broadcast %cst_60 : f32 to vector<8x128xf32>
    %184 = arith.addf %183, %182 : vector<8x128xf32>
    %185 = arith.divf %183, %184 : vector<8x128xf32>
    %186 = vector.extract_strided_slice %171 {offsets = [0, 256], sizes = [8, 128], strides = [1, 1]} : vector<8x384xf32> to vector<8x128xf32>
    %187 = vector.broadcast %21 : vector<1x128xf32> to vector<8x128xf32>
    %188 = arith.addf %186, %187 : vector<8x128xf32>
    %189 = arith.mulf %178, %188 : vector<8x128xf32>
    %190 = arith.addf %170, %189 : vector<8x128xf32>
    %191 = math.tanh %190 : vector<8x128xf32>
    %cst_61 = arith.constant 1.000000e+00 : f32
    %192 = vector.broadcast %cst_61 : f32 to vector<8x128xf32>
    %193 = arith.subf %192, %185 : vector<8x128xf32>
    %194 = arith.mulf %193, %191 : vector<8x128xf32>
    %195 = arith.mulf %185, %167 : vector<8x128xf32>
    %196 = arith.addf %194, %195 : vector<8x128xf32>
    %c48 = arith.constant 48 : index
    %c0_62 = arith.constant 0 : index
    %197 = vector.load %arg5[%c48, %c0_62] : memref<64x768xf32, #tpu.memory_space<vmem>>, vector<8x128xf32>
    %c48_63 = arith.constant 48 : index
    %c128_64 = arith.constant 128 : index
    %198 = vector.load %arg5[%c48_63, %c128_64] : memref<64x768xf32, #tpu.memory_space<vmem>>, vector<8x128xf32>
    %c48_65 = arith.constant 48 : index
    %c256_66 = arith.constant 256 : index
    %199 = vector.load %arg5[%c48_65, %c256_66] : memref<64x768xf32, #tpu.memory_space<vmem>>, vector<8x128xf32>
    %cst_67 = arith.constant dense<0.000000e+00> : vector<8x384xf32>
    %200 = tpu.matmul %196, %20, %cst_67 {dimension_numbers = #tpu.dot_dimension_numbers<[1], [0], [0], [1], [0, 0, 1, 1], [], []>} : vector<8x128xf32>, vector<128x384xf32>, vector<8x384xf32> -> vector<8x384xf32>
    %201 = vector.extract_strided_slice %200 {offsets = [0, 0], sizes = [8, 128], strides = [1, 1]} : vector<8x384xf32> to vector<8x128xf32>
    %202 = arith.addf %197, %201 : vector<8x128xf32>
    %203 = arith.negf %202 : vector<8x128xf32>
    %204 = math.exp %203 : vector<8x128xf32>
    %cst_68 = arith.constant 1.000000e+00 : f32
    %205 = vector.broadcast %cst_68 : f32 to vector<8x128xf32>
    %206 = arith.addf %205, %204 : vector<8x128xf32>
    %207 = arith.divf %205, %206 : vector<8x128xf32>
    %208 = vector.extract_strided_slice %200 {offsets = [0, 128], sizes = [8, 128], strides = [1, 1]} : vector<8x384xf32> to vector<8x128xf32>
    %209 = arith.addf %198, %208 : vector<8x128xf32>
    %210 = arith.negf %209 : vector<8x128xf32>
    %211 = math.exp %210 : vector<8x128xf32>
    %cst_69 = arith.constant 1.000000e+00 : f32
    %212 = vector.broadcast %cst_69 : f32 to vector<8x128xf32>
    %213 = arith.addf %212, %211 : vector<8x128xf32>
    %214 = arith.divf %212, %213 : vector<8x128xf32>
    %215 = vector.extract_strided_slice %200 {offsets = [0, 256], sizes = [8, 128], strides = [1, 1]} : vector<8x384xf32> to vector<8x128xf32>
    %216 = vector.broadcast %21 : vector<1x128xf32> to vector<8x128xf32>
    %217 = arith.addf %215, %216 : vector<8x128xf32>
    %218 = arith.mulf %207, %217 : vector<8x128xf32>
    %219 = arith.addf %199, %218 : vector<8x128xf32>
    %220 = math.tanh %219 : vector<8x128xf32>
    %cst_70 = arith.constant 1.000000e+00 : f32
    %221 = vector.broadcast %cst_70 : f32 to vector<8x128xf32>
    %222 = arith.subf %221, %214 : vector<8x128xf32>
    %223 = arith.mulf %222, %220 : vector<8x128xf32>
    %224 = arith.mulf %214, %196 : vector<8x128xf32>
    %225 = arith.addf %223, %224 : vector<8x128xf32>
    %c56 = arith.constant 56 : index
    %c0_71 = arith.constant 0 : index
    %226 = vector.load %arg5[%c56, %c0_71] : memref<64x768xf32, #tpu.memory_space<vmem>>, vector<8x128xf32>
    %c56_72 = arith.constant 56 : index
    %c128_73 = arith.constant 128 : index
    %227 = vector.load %arg5[%c56_72, %c128_73] : memref<64x768xf32, #tpu.memory_space<vmem>>, vector<8x128xf32>
    %c56_74 = arith.constant 56 : index
    %c256_75 = arith.constant 256 : index
    %228 = vector.load %arg5[%c56_74, %c256_75] : memref<64x768xf32, #tpu.memory_space<vmem>>, vector<8x128xf32>
    %cst_76 = arith.constant dense<0.000000e+00> : vector<8x384xf32>
    %229 = tpu.matmul %225, %20, %cst_76 {dimension_numbers = #tpu.dot_dimension_numbers<[1], [0], [0], [1], [0, 0, 1, 1], [], []>} : vector<8x128xf32>, vector<128x384xf32>, vector<8x384xf32> -> vector<8x384xf32>
    %230 = vector.extract_strided_slice %229 {offsets = [0, 0], sizes = [8, 128], strides = [1, 1]} : vector<8x384xf32> to vector<8x128xf32>
    %231 = arith.addf %226, %230 : vector<8x128xf32>
    %232 = arith.negf %231 : vector<8x128xf32>
    %233 = math.exp %232 : vector<8x128xf32>
    %cst_77 = arith.constant 1.000000e+00 : f32
    %234 = vector.broadcast %cst_77 : f32 to vector<8x128xf32>
    %235 = arith.addf %234, %233 : vector<8x128xf32>
    %236 = arith.divf %234, %235 : vector<8x128xf32>
    %237 = vector.extract_strided_slice %229 {offsets = [0, 128], sizes = [8, 128], strides = [1, 1]} : vector<8x384xf32> to vector<8x128xf32>
    %238 = arith.addf %227, %237 : vector<8x128xf32>
    %239 = arith.negf %238 : vector<8x128xf32>
    %240 = math.exp %239 : vector<8x128xf32>
    %cst_78 = arith.constant 1.000000e+00 : f32
    %241 = vector.broadcast %cst_78 : f32 to vector<8x128xf32>
    %242 = arith.addf %241, %240 : vector<8x128xf32>
    %243 = arith.divf %241, %242 : vector<8x128xf32>
    %244 = vector.extract_strided_slice %229 {offsets = [0, 256], sizes = [8, 128], strides = [1, 1]} : vector<8x384xf32> to vector<8x128xf32>
    %245 = vector.broadcast %21 : vector<1x128xf32> to vector<8x128xf32>
    %246 = arith.addf %244, %245 : vector<8x128xf32>
    %247 = arith.mulf %236, %246 : vector<8x128xf32>
    %248 = arith.addf %228, %247 : vector<8x128xf32>
    %249 = math.tanh %248 : vector<8x128xf32>
    %cst_79 = arith.constant 1.000000e+00 : f32
    %250 = vector.broadcast %cst_79 : f32 to vector<8x128xf32>
    %251 = arith.subf %250, %243 : vector<8x128xf32>
    %252 = arith.mulf %251, %249 : vector<8x128xf32>
    %253 = arith.mulf %243, %225 : vector<8x128xf32>
    %254 = arith.addf %252, %253 : vector<8x128xf32>
    %c192 = arith.constant 192 : index
    %c128_80 = arith.constant 128 : index
    %255 = vector.load %arg2[%c192, %c128_80] : memref<336x768xf32, #tpu.memory_space<vmem>>, vector<128x128xf32>
    %c328_81 = arith.constant 328 : index
    %c512 = arith.constant 512 : index
    %256 = vector.load %arg2[%c328_81, %c512] : memref<336x768xf32, #tpu.memory_space<vmem>>, vector<1x128xf32>
    %cst_82 = arith.constant dense<0.000000e+00> : vector<8x128xf32>
    %257 = tpu.matmul %254, %255, %cst_82 {dimension_numbers = #tpu.dot_dimension_numbers<[1], [0], [0], [1], [0, 0, 1, 1], [], []>} : vector<8x128xf32>, vector<128x128xf32>, vector<8x128xf32> -> vector<8x128xf32>
    %258 = vector.broadcast %256 : vector<1x128xf32> to vector<8x128xf32>
    %259 = arith.addf %257, %258 : vector<8x128xf32>
    %260 = vector.extract_strided_slice %259 {offsets = [0, 0], sizes = [8, 8], strides = [1, 1]} : vector<8x128xf32> to vector<8x8xf32>
    %261 = vector.extract_strided_slice %259 {offsets = [0, 8], sizes = [8, 8], strides = [1, 1]} : vector<8x128xf32> to vector<8x8xf32>
    %cst_83 = arith.constant 2.000000e+01 : f32
    %262 = vector.broadcast %cst_83 : f32 to vector<8x8xf32>
    %263 = arith.cmpf ogt, %261, %262 : vector<8x8xf32>
    %cst_84 = arith.constant 2.000000e+01 : f32
    %264 = vector.broadcast %cst_84 : f32 to vector<8x8xf32>
    %265 = arith.minimumf %261, %264 : vector<8x8xf32>
    %266 = math.exp %265 : vector<8x8xf32>
    %267 = math.log1p %266 : vector<8x8xf32>
    %268 = arith.select %263, %261, %267 : vector<8x8xi1>, vector<8x8xf32>
    %c0_85 = arith.constant 0 : index
    %c0_86 = arith.constant 0 : index
    %269 = vector.load %arg1[%c0_85, %c0_86] : memref<8x8xf32, #tpu.memory_space<vmem>>, vector<8x8xf32>
    %270 = arith.mulf %268, %269 : vector<8x8xf32>
    %271 = arith.addf %260, %270 : vector<8x8xf32>
    %272 = math.log %268 : vector<8x8xf32>
    %cst_87 = arith.constant 0.000000e+00 : f32
    %273 = vector.broadcast %cst_87 : f32 to vector<8x8xf32>
    %274 = arith.subf %273, %272 : vector<8x8xf32>
    %275 = arith.mulf %268, %268 : vector<8x8xf32>
    %276 = arith.mulf %260, %260 : vector<8x8xf32>
    %277 = arith.addf %275, %276 : vector<8x8xf32>
    %cst_88 = arith.constant 1.000000e+00 : f32
    %278 = vector.broadcast %cst_88 : f32 to vector<8x8xf32>
    %279 = arith.subf %277, %278 : vector<8x8xf32>
    %cst_89 = arith.constant 5.000000e-01 : f32
    %280 = vector.broadcast %cst_89 : f32 to vector<8x8xf32>
    %281 = arith.mulf %280, %279 : vector<8x8xf32>
    %282 = arith.addf %274, %281 : vector<8x8xf32>
    %cst_90 = arith.constant 1.000000e+00 : f32
    %283 = vector.broadcast %cst_90 : f32 to vector<8x8xf32>
    %284 = arith.maximumf %282, %283 : vector<8x8xf32>
    %cst_91 = arith.constant dense<0.000000e+00> : vector<8xf32>
    %285 = vector.multi_reduction <add>, %284, %cst_91 [1] : vector<8x8xf32> to vector<8xf32>
    %286 = vector.shape_cast %285 : vector<8xf32> to vector<8x1xf32>
    %c192_92 = arith.constant 192 : index
    %c256_93 = arith.constant 256 : index
    %287 = vector.load %arg2[%c192_92, %c256_93] : memref<336x768xf32, #tpu.memory_space<vmem>>, vector<8x128xf32>
    %c328_94 = arith.constant 328 : index
    %c256_95 = arith.constant 256 : index
    %288 = vector.load %arg2[%c328_94, %c256_95] : memref<336x768xf32, #tpu.memory_space<vmem>>, vector<1x128xf32>
    %cst_96 = arith.constant dense<0.000000e+00> : vector<8x128xf32>
    %289 = tpu.matmul %271, %287, %cst_96 {dimension_numbers = #tpu.dot_dimension_numbers<[1], [0], [0], [1], [0, 0, 1, 1], [], []>} : vector<8x8xf32>, vector<8x128xf32>, vector<8x128xf32> -> vector<8x128xf32>
    %290 = vector.broadcast %288 : vector<1x128xf32> to vector<8x128xf32>
    %291 = arith.addf %289, %290 : vector<8x128xf32>
    %292 = math.tanh %291 : vector<8x128xf32>
    %c64_97 = arith.constant 64 : index
    %c384 = arith.constant 384 : index
    %293 = vector.load %arg2[%c64_97, %c384] : memref<336x768xf32, #tpu.memory_space<vmem>>, vector<128x384xf32>
    %c328_98 = arith.constant 328 : index
    %c128_99 = arith.constant 128 : index
    %294 = vector.load %arg2[%c328_98, %c128_99] : memref<336x768xf32, #tpu.memory_space<vmem>>, vector<1x128xf32>
    %c0_100 = arith.constant 0 : index
    %c384_101 = arith.constant 384 : index
    %295 = vector.load %arg5[%c0_100, %c384_101] : memref<64x768xf32, #tpu.memory_space<vmem>>, vector<8x128xf32>
    %c0_102 = arith.constant 0 : index
    %c512_103 = arith.constant 512 : index
    %296 = vector.load %arg5[%c0_102, %c512_103] : memref<64x768xf32, #tpu.memory_space<vmem>>, vector<8x128xf32>
    %c0_104 = arith.constant 0 : index
    %c640 = arith.constant 640 : index
    %297 = vector.load %arg5[%c0_104, %c640] : memref<64x768xf32, #tpu.memory_space<vmem>>, vector<8x128xf32>
    %cst_105 = arith.constant dense<0.000000e+00> : vector<8x384xf32>
    %298 = tpu.matmul %292, %293, %cst_105 {dimension_numbers = #tpu.dot_dimension_numbers<[1], [0], [0], [1], [0, 0, 1, 1], [], []>} : vector<8x128xf32>, vector<128x384xf32>, vector<8x384xf32> -> vector<8x384xf32>
    %299 = vector.extract_strided_slice %298 {offsets = [0, 0], sizes = [8, 128], strides = [1, 1]} : vector<8x384xf32> to vector<8x128xf32>
    %300 = arith.addf %295, %299 : vector<8x128xf32>
    %301 = arith.negf %300 : vector<8x128xf32>
    %302 = math.exp %301 : vector<8x128xf32>
    %cst_106 = arith.constant 1.000000e+00 : f32
    %303 = vector.broadcast %cst_106 : f32 to vector<8x128xf32>
    %304 = arith.addf %303, %302 : vector<8x128xf32>
    %305 = arith.divf %303, %304 : vector<8x128xf32>
    %306 = vector.extract_strided_slice %298 {offsets = [0, 128], sizes = [8, 128], strides = [1, 1]} : vector<8x384xf32> to vector<8x128xf32>
    %307 = arith.addf %296, %306 : vector<8x128xf32>
    %308 = arith.negf %307 : vector<8x128xf32>
    %309 = math.exp %308 : vector<8x128xf32>
    %cst_107 = arith.constant 1.000000e+00 : f32
    %310 = vector.broadcast %cst_107 : f32 to vector<8x128xf32>
    %311 = arith.addf %310, %309 : vector<8x128xf32>
    %312 = arith.divf %310, %311 : vector<8x128xf32>
    %313 = vector.extract_strided_slice %298 {offsets = [0, 256], sizes = [8, 128], strides = [1, 1]} : vector<8x384xf32> to vector<8x128xf32>
    %314 = vector.broadcast %294 : vector<1x128xf32> to vector<8x128xf32>
    %315 = arith.addf %313, %314 : vector<8x128xf32>
    %316 = arith.mulf %305, %315 : vector<8x128xf32>
    %317 = arith.addf %297, %316 : vector<8x128xf32>
    %318 = math.tanh %317 : vector<8x128xf32>
    %cst_108 = arith.constant 1.000000e+00 : f32
    %319 = vector.broadcast %cst_108 : f32 to vector<8x128xf32>
    %320 = arith.subf %319, %312 : vector<8x128xf32>
    %321 = arith.mulf %320, %318 : vector<8x128xf32>
    %322 = arith.mulf %312, %292 : vector<8x128xf32>
    %323 = arith.addf %321, %322 : vector<8x128xf32>
    %c0_109 = arith.constant 0 : index
    %c0_110 = arith.constant 0 : index
    %324 = vector.load %arg6[%c0_109, %c0_110] : memref<64x128xf32, #tpu.memory_space<vmem>>, vector<8x128xf32>
    tpu.vector_store %arg6[%c0_109, %c0_110], %323 {strides = array<i32>} : memref<64x128xf32, #tpu.memory_space<vmem>>, vector<8x128xf32>,
    %c8_111 = arith.constant 8 : index
    %c384_112 = arith.constant 384 : index
    %325 = vector.load %arg5[%c8_111, %c384_112] : memref<64x768xf32, #tpu.memory_space<vmem>>, vector<8x128xf32>
    %c8_113 = arith.constant 8 : index
    %c512_114 = arith.constant 512 : index
    %326 = vector.load %arg5[%c8_113, %c512_114] : memref<64x768xf32, #tpu.memory_space<vmem>>, vector<8x128xf32>
    %c8_115 = arith.constant 8 : index
    %c640_116 = arith.constant 640 : index
    %327 = vector.load %arg5[%c8_115, %c640_116] : memref<64x768xf32, #tpu.memory_space<vmem>>, vector<8x128xf32>
    %cst_117 = arith.constant dense<0.000000e+00> : vector<8x384xf32>
    %328 = tpu.matmul %323, %293, %cst_117 {dimension_numbers = #tpu.dot_dimension_numbers<[1], [0], [0], [1], [0, 0, 1, 1], [], []>} : vector<8x128xf32>, vector<128x384xf32>, vector<8x384xf32> -> vector<8x384xf32>
    %329 = vector.extract_strided_slice %328 {offsets = [0, 0], sizes = [8, 128], strides = [1, 1]} : vector<8x384xf32> to vector<8x128xf32>
    %330 = arith.addf %325, %329 : vector<8x128xf32>
    %331 = arith.negf %330 : vector<8x128xf32>
    %332 = math.exp %331 : vector<8x128xf32>
    %cst_118 = arith.constant 1.000000e+00 : f32
    %333 = vector.broadcast %cst_118 : f32 to vector<8x128xf32>
    %334 = arith.addf %333, %332 : vector<8x128xf32>
    %335 = arith.divf %333, %334 : vector<8x128xf32>
    %336 = vector.extract_strided_slice %328 {offsets = [0, 128], sizes = [8, 128], strides = [1, 1]} : vector<8x384xf32> to vector<8x128xf32>
    %337 = arith.addf %326, %336 : vector<8x128xf32>
    %338 = arith.negf %337 : vector<8x128xf32>
    %339 = math.exp %338 : vector<8x128xf32>
    %cst_119 = arith.constant 1.000000e+00 : f32
    %340 = vector.broadcast %cst_119 : f32 to vector<8x128xf32>
    %341 = arith.addf %340, %339 : vector<8x128xf32>
    %342 = arith.divf %340, %341 : vector<8x128xf32>
    %343 = vector.extract_strided_slice %328 {offsets = [0, 256], sizes = [8, 128], strides = [1, 1]} : vector<8x384xf32> to vector<8x128xf32>
    %344 = vector.broadcast %294 : vector<1x128xf32> to vector<8x128xf32>
    %345 = arith.addf %343, %344 : vector<8x128xf32>
    %346 = arith.mulf %335, %345 : vector<8x128xf32>
    %347 = arith.addf %327, %346 : vector<8x128xf32>
    %348 = math.tanh %347 : vector<8x128xf32>
    %cst_120 = arith.constant 1.000000e+00 : f32
    %349 = vector.broadcast %cst_120 : f32 to vector<8x128xf32>
    %350 = arith.subf %349, %342 : vector<8x128xf32>
    %351 = arith.mulf %350, %348 : vector<8x128xf32>
    %352 = arith.mulf %342, %323 : vector<8x128xf32>
    %353 = arith.addf %351, %352 : vector<8x128xf32>
    %c8_121 = arith.constant 8 : index
    %c0_122 = arith.constant 0 : index
    %354 = vector.load %arg6[%c8_121, %c0_122] : memref<64x128xf32, #tpu.memory_space<vmem>>, vector<8x128xf32>
    tpu.vector_store %arg6[%c8_121, %c0_122], %353 {strides = array<i32>} : memref<64x128xf32, #tpu.memory_space<vmem>>, vector<8x128xf32>,
    %c16_123 = arith.constant 16 : index
    %c384_124 = arith.constant 384 : index
    %355 = vector.load %arg5[%c16_123, %c384_124] : memref<64x768xf32, #tpu.memory_space<vmem>>, vector<8x128xf32>
    %c16_125 = arith.constant 16 : index
    %c512_126 = arith.constant 512 : index
    %356 = vector.load %arg5[%c16_125, %c512_126] : memref<64x768xf32, #tpu.memory_space<vmem>>, vector<8x128xf32>
    %c16_127 = arith.constant 16 : index
    %c640_128 = arith.constant 640 : index
    %357 = vector.load %arg5[%c16_127, %c640_128] : memref<64x768xf32, #tpu.memory_space<vmem>>, vector<8x128xf32>
    %cst_129 = arith.constant dense<0.000000e+00> : vector<8x384xf32>
    %358 = tpu.matmul %353, %293, %cst_129 {dimension_numbers = #tpu.dot_dimension_numbers<[1], [0], [0], [1], [0, 0, 1, 1], [], []>} : vector<8x128xf32>, vector<128x384xf32>, vector<8x384xf32> -> vector<8x384xf32>
    %359 = vector.extract_strided_slice %358 {offsets = [0, 0], sizes = [8, 128], strides = [1, 1]} : vector<8x384xf32> to vector<8x128xf32>
    %360 = arith.addf %355, %359 : vector<8x128xf32>
    %361 = arith.negf %360 : vector<8x128xf32>
    %362 = math.exp %361 : vector<8x128xf32>
    %cst_130 = arith.constant 1.000000e+00 : f32
    %363 = vector.broadcast %cst_130 : f32 to vector<8x128xf32>
    %364 = arith.addf %363, %362 : vector<8x128xf32>
    %365 = arith.divf %363, %364 : vector<8x128xf32>
    %366 = vector.extract_strided_slice %358 {offsets = [0, 128], sizes = [8, 128], strides = [1, 1]} : vector<8x384xf32> to vector<8x128xf32>
    %367 = arith.addf %356, %366 : vector<8x128xf32>
    %368 = arith.negf %367 : vector<8x128xf32>
    %369 = math.exp %368 : vector<8x128xf32>
    %cst_131 = arith.constant 1.000000e+00 : f32
    %370 = vector.broadcast %cst_131 : f32 to vector<8x128xf32>
    %371 = arith.addf %370, %369 : vector<8x128xf32>
    %372 = arith.divf %370, %371 : vector<8x128xf32>
    %373 = vector.extract_strided_slice %358 {offsets = [0, 256], sizes = [8, 128], strides = [1, 1]} : vector<8x384xf32> to vector<8x128xf32>
    %374 = vector.broadcast %294 : vector<1x128xf32> to vector<8x128xf32>
    %375 = arith.addf %373, %374 : vector<8x128xf32>
    %376 = arith.mulf %365, %375 : vector<8x128xf32>
    %377 = arith.addf %357, %376 : vector<8x128xf32>
    %378 = math.tanh %377 : vector<8x128xf32>
    %cst_132 = arith.constant 1.000000e+00 : f32
    %379 = vector.broadcast %cst_132 : f32 to vector<8x128xf32>
    %380 = arith.subf %379, %372 : vector<8x128xf32>
    %381 = arith.mulf %380, %378 : vector<8x128xf32>
    %382 = arith.mulf %372, %353 : vector<8x128xf32>
    %383 = arith.addf %381, %382 : vector<8x128xf32>
    %c16_133 = arith.constant 16 : index
    %c0_134 = arith.constant 0 : index
    %384 = vector.load %arg6[%c16_133, %c0_134] : memref<64x128xf32, #tpu.memory_space<vmem>>, vector<8x128xf32>
    tpu.vector_store %arg6[%c16_133, %c0_134], %383 {strides = array<i32>} : memref<64x128xf32, #tpu.memory_space<vmem>>, vector<8x128xf32>,
    %c24_135 = arith.constant 24 : index
    %c384_136 = arith.constant 384 : index
    %385 = vector.load %arg5[%c24_135, %c384_136] : memref<64x768xf32, #tpu.memory_space<vmem>>, vector<8x128xf32>
    %c24_137 = arith.constant 24 : index
    %c512_138 = arith.constant 512 : index
    %386 = vector.load %arg5[%c24_137, %c512_138] : memref<64x768xf32, #tpu.memory_space<vmem>>, vector<8x128xf32>
    %c24_139 = arith.constant 24 : index
    %c640_140 = arith.constant 640 : index
    %387 = vector.load %arg5[%c24_139, %c640_140] : memref<64x768xf32, #tpu.memory_space<vmem>>, vector<8x128xf32>
    %cst_141 = arith.constant dense<0.000000e+00> : vector<8x384xf32>
    %388 = tpu.matmul %383, %293, %cst_141 {dimension_numbers = #tpu.dot_dimension_numbers<[1], [0], [0], [1], [0, 0, 1, 1], [], []>} : vector<8x128xf32>, vector<128x384xf32>, vector<8x384xf32> -> vector<8x384xf32>
    %389 = vector.extract_strided_slice %388 {offsets = [0, 0], sizes = [8, 128], strides = [1, 1]} : vector<8x384xf32> to vector<8x128xf32>
    %390 = arith.addf %385, %389 : vector<8x128xf32>
    %391 = arith.negf %390 : vector<8x128xf32>
    %392 = math.exp %391 : vector<8x128xf32>
    %cst_142 = arith.constant 1.000000e+00 : f32
    %393 = vector.broadcast %cst_142 : f32 to vector<8x128xf32>
    %394 = arith.addf %393, %392 : vector<8x128xf32>
    %395 = arith.divf %393, %394 : vector<8x128xf32>
    %396 = vector.extract_strided_slice %388 {offsets = [0, 128], sizes = [8, 128], strides = [1, 1]} : vector<8x384xf32> to vector<8x128xf32>
    %397 = arith.addf %386, %396 : vector<8x128xf32>
    %398 = arith.negf %397 : vector<8x128xf32>
    %399 = math.exp %398 : vector<8x128xf32>
    %cst_143 = arith.constant 1.000000e+00 : f32
    %400 = vector.broadcast %cst_143 : f32 to vector<8x128xf32>
    %401 = arith.addf %400, %399 : vector<8x128xf32>
    %402 = arith.divf %400, %401 : vector<8x128xf32>
    %403 = vector.extract_strided_slice %388 {offsets = [0, 256], sizes = [8, 128], strides = [1, 1]} : vector<8x384xf32> to vector<8x128xf32>
    %404 = vector.broadcast %294 : vector<1x128xf32> to vector<8x128xf32>
    %405 = arith.addf %403, %404 : vector<8x128xf32>
    %406 = arith.mulf %395, %405 : vector<8x128xf32>
    %407 = arith.addf %387, %406 : vector<8x128xf32>
    %408 = math.tanh %407 : vector<8x128xf32>
    %cst_144 = arith.constant 1.000000e+00 : f32
    %409 = vector.broadcast %cst_144 : f32 to vector<8x128xf32>
    %410 = arith.subf %409, %402 : vector<8x128xf32>
    %411 = arith.mulf %410, %408 : vector<8x128xf32>
    %412 = arith.mulf %402, %383 : vector<8x128xf32>
    %413 = arith.addf %411, %412 : vector<8x128xf32>
    %c24_145 = arith.constant 24 : index
    %c0_146 = arith.constant 0 : index
    %414 = vector.load %arg6[%c24_145, %c0_146] : memref<64x128xf32, #tpu.memory_space<vmem>>, vector<8x128xf32>
    tpu.vector_store %arg6[%c24_145, %c0_146], %413 {strides = array<i32>} : memref<64x128xf32, #tpu.memory_space<vmem>>, vector<8x128xf32>,
    %c32_147 = arith.constant 32 : index
    %c384_148 = arith.constant 384 : index
    %415 = vector.load %arg5[%c32_147, %c384_148] : memref<64x768xf32, #tpu.memory_space<vmem>>, vector<8x128xf32>
    %c32_149 = arith.constant 32 : index
    %c512_150 = arith.constant 512 : index
    %416 = vector.load %arg5[%c32_149, %c512_150] : memref<64x768xf32, #tpu.memory_space<vmem>>, vector<8x128xf32>
    %c32_151 = arith.constant 32 : index
    %c640_152 = arith.constant 640 : index
    %417 = vector.load %arg5[%c32_151, %c640_152] : memref<64x768xf32, #tpu.memory_space<vmem>>, vector<8x128xf32>
    %cst_153 = arith.constant dense<0.000000e+00> : vector<8x384xf32>
    %418 = tpu.matmul %413, %293, %cst_153 {dimension_numbers = #tpu.dot_dimension_numbers<[1], [0], [0], [1], [0, 0, 1, 1], [], []>} : vector<8x128xf32>, vector<128x384xf32>, vector<8x384xf32> -> vector<8x384xf32>
    %419 = vector.extract_strided_slice %418 {offsets = [0, 0], sizes = [8, 128], strides = [1, 1]} : vector<8x384xf32> to vector<8x128xf32>
    %420 = arith.addf %415, %419 : vector<8x128xf32>
    %421 = arith.negf %420 : vector<8x128xf32>
    %422 = math.exp %421 : vector<8x128xf32>
    %cst_154 = arith.constant 1.000000e+00 : f32
    %423 = vector.broadcast %cst_154 : f32 to vector<8x128xf32>
    %424 = arith.addf %423, %422 : vector<8x128xf32>
    %425 = arith.divf %423, %424 : vector<8x128xf32>
    %426 = vector.extract_strided_slice %418 {offsets = [0, 128], sizes = [8, 128], strides = [1, 1]} : vector<8x384xf32> to vector<8x128xf32>
    %427 = arith.addf %416, %426 : vector<8x128xf32>
    %428 = arith.negf %427 : vector<8x128xf32>
    %429 = math.exp %428 : vector<8x128xf32>
    %cst_155 = arith.constant 1.000000e+00 : f32
    %430 = vector.broadcast %cst_155 : f32 to vector<8x128xf32>
    %431 = arith.addf %430, %429 : vector<8x128xf32>
    %432 = arith.divf %430, %431 : vector<8x128xf32>
    %433 = vector.extract_strided_slice %418 {offsets = [0, 256], sizes = [8, 128], strides = [1, 1]} : vector<8x384xf32> to vector<8x128xf32>
    %434 = vector.broadcast %294 : vector<1x128xf32> to vector<8x128xf32>
    %435 = arith.addf %433, %434 : vector<8x128xf32>
    %436 = arith.mulf %425, %435 : vector<8x128xf32>
    %437 = arith.addf %417, %436 : vector<8x128xf32>
    %438 = math.tanh %437 : vector<8x128xf32>
    %cst_156 = arith.constant 1.000000e+00 : f32
    %439 = vector.broadcast %cst_156 : f32 to vector<8x128xf32>
    %440 = arith.subf %439, %432 : vector<8x128xf32>
    %441 = arith.mulf %440, %438 : vector<8x128xf32>
    %442 = arith.mulf %432, %413 : vector<8x128xf32>
    %443 = arith.addf %441, %442 : vector<8x128xf32>
    %c32_157 = arith.constant 32 : index
    %c0_158 = arith.constant 0 : index
    %444 = vector.load %arg6[%c32_157, %c0_158] : memref<64x128xf32, #tpu.memory_space<vmem>>, vector<8x128xf32>
    tpu.vector_store %arg6[%c32_157, %c0_158], %443 {strides = array<i32>} : memref<64x128xf32, #tpu.memory_space<vmem>>, vector<8x128xf32>,
    %c40_159 = arith.constant 40 : index
    %c384_160 = arith.constant 384 : index
    %445 = vector.load %arg5[%c40_159, %c384_160] : memref<64x768xf32, #tpu.memory_space<vmem>>, vector<8x128xf32>
    %c40_161 = arith.constant 40 : index
    %c512_162 = arith.constant 512 : index
    %446 = vector.load %arg5[%c40_161, %c512_162] : memref<64x768xf32, #tpu.memory_space<vmem>>, vector<8x128xf32>
    %c40_163 = arith.constant 40 : index
    %c640_164 = arith.constant 640 : index
    %447 = vector.load %arg5[%c40_163, %c640_164] : memref<64x768xf32, #tpu.memory_space<vmem>>, vector<8x128xf32>
    %cst_165 = arith.constant dense<0.000000e+00> : vector<8x384xf32>
    %448 = tpu.matmul %443, %293, %cst_165 {dimension_numbers = #tpu.dot_dimension_numbers<[1], [0], [0], [1], [0, 0, 1, 1], [], []>} : vector<8x128xf32>, vector<128x384xf32>, vector<8x384xf32> -> vector<8x384xf32>
    %449 = vector.extract_strided_slice %448 {offsets = [0, 0], sizes = [8, 128], strides = [1, 1]} : vector<8x384xf32> to vector<8x128xf32>
    %450 = arith.addf %445, %449 : vector<8x128xf32>
    %451 = arith.negf %450 : vector<8x128xf32>
    %452 = math.exp %451 : vector<8x128xf32>
    %cst_166 = arith.constant 1.000000e+00 : f32
    %453 = vector.broadcast %cst_166 : f32 to vector<8x128xf32>
    %454 = arith.addf %453, %452 : vector<8x128xf32>
    %455 = arith.divf %453, %454 : vector<8x128xf32>
    %456 = vector.extract_strided_slice %448 {offsets = [0, 128], sizes = [8, 128], strides = [1, 1]} : vector<8x384xf32> to vector<8x128xf32>
    %457 = arith.addf %446, %456 : vector<8x128xf32>
    %458 = arith.negf %457 : vector<8x128xf32>
    %459 = math.exp %458 : vector<8x128xf32>
    %cst_167 = arith.constant 1.000000e+00 : f32
    %460 = vector.broadcast %cst_167 : f32 to vector<8x128xf32>
    %461 = arith.addf %460, %459 : vector<8x128xf32>
    %462 = arith.divf %460, %461 : vector<8x128xf32>
    %463 = vector.extract_strided_slice %448 {offsets = [0, 256], sizes = [8, 128], strides = [1, 1]} : vector<8x384xf32> to vector<8x128xf32>
    %464 = vector.broadcast %294 : vector<1x128xf32> to vector<8x128xf32>
    %465 = arith.addf %463, %464 : vector<8x128xf32>
    %466 = arith.mulf %455, %465 : vector<8x128xf32>
    %467 = arith.addf %447, %466 : vector<8x128xf32>
    %468 = math.tanh %467 : vector<8x128xf32>
    %cst_168 = arith.constant 1.000000e+00 : f32
    %469 = vector.broadcast %cst_168 : f32 to vector<8x128xf32>
    %470 = arith.subf %469, %462 : vector<8x128xf32>
    %471 = arith.mulf %470, %468 : vector<8x128xf32>
    %472 = arith.mulf %462, %443 : vector<8x128xf32>
    %473 = arith.addf %471, %472 : vector<8x128xf32>
    %c40_169 = arith.constant 40 : index
    %c0_170 = arith.constant 0 : index
    %474 = vector.load %arg6[%c40_169, %c0_170] : memref<64x128xf32, #tpu.memory_space<vmem>>, vector<8x128xf32>
    tpu.vector_store %arg6[%c40_169, %c0_170], %473 {strides = array<i32>} : memref<64x128xf32, #tpu.memory_space<vmem>>, vector<8x128xf32>,
    %c48_171 = arith.constant 48 : index
    %c384_172 = arith.constant 384 : index
    %475 = vector.load %arg5[%c48_171, %c384_172] : memref<64x768xf32, #tpu.memory_space<vmem>>, vector<8x128xf32>
    %c48_173 = arith.constant 48 : index
    %c512_174 = arith.constant 512 : index
    %476 = vector.load %arg5[%c48_173, %c512_174] : memref<64x768xf32, #tpu.memory_space<vmem>>, vector<8x128xf32>
    %c48_175 = arith.constant 48 : index
    %c640_176 = arith.constant 640 : index
    %477 = vector.load %arg5[%c48_175, %c640_176] : memref<64x768xf32, #tpu.memory_space<vmem>>, vector<8x128xf32>
    %cst_177 = arith.constant dense<0.000000e+00> : vector<8x384xf32>
    %478 = tpu.matmul %473, %293, %cst_177 {dimension_numbers = #tpu.dot_dimension_numbers<[1], [0], [0], [1], [0, 0, 1, 1], [], []>} : vector<8x128xf32>, vector<128x384xf32>, vector<8x384xf32> -> vector<8x384xf32>
    %479 = vector.extract_strided_slice %478 {offsets = [0, 0], sizes = [8, 128], strides = [1, 1]} : vector<8x384xf32> to vector<8x128xf32>
    %480 = arith.addf %475, %479 : vector<8x128xf32>
    %481 = arith.negf %480 : vector<8x128xf32>
    %482 = math.exp %481 : vector<8x128xf32>
    %cst_178 = arith.constant 1.000000e+00 : f32
    %483 = vector.broadcast %cst_178 : f32 to vector<8x128xf32>
    %484 = arith.addf %483, %482 : vector<8x128xf32>
    %485 = arith.divf %483, %484 : vector<8x128xf32>
    %486 = vector.extract_strided_slice %478 {offsets = [0, 128], sizes = [8, 128], strides = [1, 1]} : vector<8x384xf32> to vector<8x128xf32>
    %487 = arith.addf %476, %486 : vector<8x128xf32>
    %488 = arith.negf %487 : vector<8x128xf32>
    %489 = math.exp %488 : vector<8x128xf32>
    %cst_179 = arith.constant 1.000000e+00 : f32
    %490 = vector.broadcast %cst_179 : f32 to vector<8x128xf32>
    %491 = arith.addf %490, %489 : vector<8x128xf32>
    %492 = arith.divf %490, %491 : vector<8x128xf32>
    %493 = vector.extract_strided_slice %478 {offsets = [0, 256], sizes = [8, 128], strides = [1, 1]} : vector<8x384xf32> to vector<8x128xf32>
    %494 = vector.broadcast %294 : vector<1x128xf32> to vector<8x128xf32>
    %495 = arith.addf %493, %494 : vector<8x128xf32>
    %496 = arith.mulf %485, %495 : vector<8x128xf32>
    %497 = arith.addf %477, %496 : vector<8x128xf32>
    %498 = math.tanh %497 : vector<8x128xf32>
    %cst_180 = arith.constant 1.000000e+00 : f32
    %499 = vector.broadcast %cst_180 : f32 to vector<8x128xf32>
    %500 = arith.subf %499, %492 : vector<8x128xf32>
    %501 = arith.mulf %500, %498 : vector<8x128xf32>
    %502 = arith.mulf %492, %473 : vector<8x128xf32>
    %503 = arith.addf %501, %502 : vector<8x128xf32>
    %c48_181 = arith.constant 48 : index
    %c0_182 = arith.constant 0 : index
    %504 = vector.load %arg6[%c48_181, %c0_182] : memref<64x128xf32, #tpu.memory_space<vmem>>, vector<8x128xf32>
    tpu.vector_store %arg6[%c48_181, %c0_182], %503 {strides = array<i32>} : memref<64x128xf32, #tpu.memory_space<vmem>>, vector<8x128xf32>,
    %c56_183 = arith.constant 56 : index
    %c384_184 = arith.constant 384 : index
    %505 = vector.load %arg5[%c56_183, %c384_184] : memref<64x768xf32, #tpu.memory_space<vmem>>, vector<8x128xf32>
    %c56_185 = arith.constant 56 : index
    %c512_186 = arith.constant 512 : index
    %506 = vector.load %arg5[%c56_185, %c512_186] : memref<64x768xf32, #tpu.memory_space<vmem>>, vector<8x128xf32>
    %c56_187 = arith.constant 56 : index
    %c640_188 = arith.constant 640 : index
    %507 = vector.load %arg5[%c56_187, %c640_188] : memref<64x768xf32, #tpu.memory_space<vmem>>, vector<8x128xf32>
    %cst_189 = arith.constant dense<0.000000e+00> : vector<8x384xf32>
    %508 = tpu.matmul %503, %293, %cst_189 {dimension_numbers = #tpu.dot_dimension_numbers<[1], [0], [0], [1], [0, 0, 1, 1], [], []>} : vector<8x128xf32>, vector<128x384xf32>, vector<8x384xf32> -> vector<8x384xf32>
    %509 = vector.extract_strided_slice %508 {offsets = [0, 0], sizes = [8, 128], strides = [1, 1]} : vector<8x384xf32> to vector<8x128xf32>
    %510 = arith.addf %505, %509 : vector<8x128xf32>
    %511 = arith.negf %510 : vector<8x128xf32>
    %512 = math.exp %511 : vector<8x128xf32>
    %cst_190 = arith.constant 1.000000e+00 : f32
    %513 = vector.broadcast %cst_190 : f32 to vector<8x128xf32>
    %514 = arith.addf %513, %512 : vector<8x128xf32>
    %515 = arith.divf %513, %514 : vector<8x128xf32>
    %516 = vector.extract_strided_slice %508 {offsets = [0, 128], sizes = [8, 128], strides = [1, 1]} : vector<8x384xf32> to vector<8x128xf32>
    %517 = arith.addf %506, %516 : vector<8x128xf32>
    %518 = arith.negf %517 : vector<8x128xf32>
    %519 = math.exp %518 : vector<8x128xf32>
    %cst_191 = arith.constant 1.000000e+00 : f32
    %520 = vector.broadcast %cst_191 : f32 to vector<8x128xf32>
    %521 = arith.addf %520, %519 : vector<8x128xf32>
    %522 = arith.divf %520, %521 : vector<8x128xf32>
    %523 = vector.extract_strided_slice %508 {offsets = [0, 256], sizes = [8, 128], strides = [1, 1]} : vector<8x384xf32> to vector<8x128xf32>
    %524 = vector.broadcast %294 : vector<1x128xf32> to vector<8x128xf32>
    %525 = arith.addf %523, %524 : vector<8x128xf32>
    %526 = arith.mulf %515, %525 : vector<8x128xf32>
    %527 = arith.addf %507, %526 : vector<8x128xf32>
    %528 = math.tanh %527 : vector<8x128xf32>
    %cst_192 = arith.constant 1.000000e+00 : f32
    %529 = vector.broadcast %cst_192 : f32 to vector<8x128xf32>
    %530 = arith.subf %529, %522 : vector<8x128xf32>
    %531 = arith.mulf %530, %528 : vector<8x128xf32>
    %532 = arith.mulf %522, %503 : vector<8x128xf32>
    %533 = arith.addf %531, %532 : vector<8x128xf32>
    %c56_193 = arith.constant 56 : index
    %c0_194 = arith.constant 0 : index
    %534 = vector.load %arg6[%c56_193, %c0_194] : memref<64x128xf32, #tpu.memory_space<vmem>>, vector<8x128xf32>
    tpu.vector_store %arg6[%c56_193, %c0_194], %533 {strides = array<i32>} : memref<64x128xf32, #tpu.memory_space<vmem>>, vector<8x128xf32>,
    %c192_195 = arith.constant 192 : index
    %c0_196 = arith.constant 0 : index
    %535 = vector.load %arg2[%c192_195, %c0_196] : memref<336x768xf32, #tpu.memory_space<vmem>>, vector<128x128xf32>
    %c328_197 = arith.constant 328 : index
    %c384_198 = arith.constant 384 : index
    %536 = vector.load %arg2[%c328_197, %c384_198] : memref<336x768xf32, #tpu.memory_space<vmem>>, vector<1x128xf32>
    %c0_199 = arith.constant 0 : index
    %c0_200 = arith.constant 0 : index
    %537 = vector.load %arg6[%c0_199, %c0_200] : memref<64x128xf32, #tpu.memory_space<vmem>>, vector<64x128xf32>
    %cst_201 = arith.constant dense<0.000000e+00> : vector<64x128xf32>
    %538 = tpu.matmul %537, %535, %cst_201 {dimension_numbers = #tpu.dot_dimension_numbers<[1], [0], [0], [1], [0, 0, 1, 1], [], []>} : vector<64x128xf32>, vector<128x128xf32>, vector<64x128xf32> -> vector<64x128xf32>
    %539 = vector.broadcast %536 : vector<1x128xf32> to vector<64x128xf32>
    %540 = arith.addf %538, %539 : vector<64x128xf32>
    %541 = tpu.iota {dimensions = array<i32: 1>} : vector<64x128xi32>
    %c32_i32_202 = arith.constant 32 : i32
    %542 = vector.broadcast %c32_i32_202 : i32 to vector<64x128xi32>
    %543 = arith.cmpi slt, %541, %542 : vector<64x128xi32>
    %cst_203 = arith.constant -1.000000e+30 : f32
    %544 = vector.broadcast %cst_203 : f32 to vector<64x128xf32>
    %545 = arith.select %543, %540, %544 : vector<64x128xi1>, vector<64x128xf32>
    %cst_204 = arith.constant dense<0xFF800000> : vector<64xf32>
    %546 = vector.multi_reduction <maximumf>, %545, %cst_204 [1] : vector<64x128xf32> to vector<64xf32>
    %547 = vector.shape_cast %546 : vector<64xf32> to vector<64x1xf32>
    %548 = vector.broadcast %547 : vector<64x1xf32> to vector<64x128xf32>
    %549 = arith.subf %545, %548 : vector<64x128xf32>
    %550 = math.exp %549 : vector<64x128xf32>
    %cst_205 = arith.constant dense<0.000000e+00> : vector<64xf32>
    %551 = vector.multi_reduction <add>, %550, %cst_205 [1] : vector<64x128xf32> to vector<64xf32>
    %552 = vector.shape_cast %551 : vector<64xf32> to vector<64x1xf32>
    %553 = math.log %552 : vector<64x1xf32>
    %554 = arith.addf %547, %553 : vector<64x1xf32>
    %555 = vector.broadcast %3 : vector<64x1xi32> to vector<64x128xi32>
    %556 = arith.cmpi eq, %541, %555 : vector<64x128xi32>
    %cst_206 = arith.constant 0.000000e+00 : f32
    %557 = vector.broadcast %cst_206 : f32 to vector<64x128xf32>
    %558 = arith.select %556, %545, %557 : vector<64x128xi1>, vector<64x128xf32>
    %cst_207 = arith.constant dense<0.000000e+00> : vector<64xf32>
    %559 = vector.multi_reduction <add>, %558, %cst_207 [1] : vector<64x128xf32> to vector<64xf32>
    %560 = vector.shape_cast %559 : vector<64xf32> to vector<64x1xf32>
    %c0_i32 = arith.constant 0 : i32
    %561 = vector.broadcast %c0_i32 : i32 to vector<64x1xi32>
    %562 = arith.cmpi ne, %3, %561 : vector<64x1xi32>
    %563 = arith.extui %562 : vector<64x1xi1> to vector<64x1xi32>
    %564 = arith.sitofp %563 : vector<64x1xi32> to vector<64x1xf32>
    %565 = vector.shape_cast %564 : vector<64x1xf32> to vector<1x64x1xf32>
    %cst_208 = arith.constant dense<0.000000e+00> : vector<1xf32>
    %566 = vector.multi_reduction <add>, %565, %cst_208 [1, 2] : vector<1x64x1xf32> to vector<1xf32>
    %567 = vector.shape_cast %566 : vector<1xf32> to vector<1x1x1xf32>
    %568 = vector.extract %567[0, 0, 0] : f32 from vector<1x1x1xf32>
    %cst_209 = arith.constant 1.000000e+00 : f32
    %569 = arith.maximumf %568, %cst_209 : f32
    %570 = arith.subf %554, %560 : vector<64x1xf32>
    %571 = arith.mulf %570, %564 : vector<64x1xf32>
    %572 = vector.shape_cast %571 : vector<64x1xf32> to vector<1x64x1xf32>
    %cst_210 = arith.constant dense<0.000000e+00> : vector<1xf32>
    %573 = vector.multi_reduction <add>, %572, %cst_210 [1, 2] : vector<1x64x1xf32> to vector<1xf32>
    %574 = vector.shape_cast %573 : vector<1xf32> to vector<1x1x1xf32>
    %575 = vector.extract %574[0, 0, 0] : f32 from vector<1x1x1xf32>
    %576 = arith.divf %575, %569 : f32
    %cst_211 = arith.constant 8.000000e+00 : f32
    %577 = arith.mulf %576, %cst_211 : f32
    %c0_212 = arith.constant 0 : index
    %c0_213 = arith.constant 0 : index
    %578 = vector.load %arg4[%c0_212, %c0_213] : memref<8x1xf32, #tpu.memory_space<vmem>>, vector<8x1xf32>
    tpu.vector_store %arg4[%c0_212, %c0_213], %286 {strides = array<i32>} : memref<8x1xf32, #tpu.memory_space<vmem>>, vector<8x1xf32>,
    %579 = vector.shape_cast %286 : vector<8x1xf32> to vector<1x8x1xf32>
    %cst_214 = arith.constant dense<0.000000e+00> : vector<1xf32>
    %580 = vector.multi_reduction <add>, %579, %cst_214 [1, 2] : vector<1x8x1xf32> to vector<1xf32>
    %581 = vector.shape_cast %580 : vector<1xf32> to vector<1x1x1xf32>
    %582 = vector.extract %581[0, 0, 0] : f32 from vector<1x1x1xf32>
    %cst_215 = arith.constant 8.000000e+00 : f32
    %583 = arith.divf %582, %cst_215 : f32
    %584 = arith.addf %583, %577 : f32
    %585 = vector.broadcast %584 : f32 to vector<1x1xf32>
    %c0_216 = arith.constant 0 : index
    %c0_217 = arith.constant 0 : index
    %586 = vector.load %arg3[%c0_216, %c0_217] : memref<1x1xf32, #tpu.memory_space<vmem>>, vector<1x1xf32>
    tpu.vector_store %arg3[%c0_216, %c0_217], %585 {strides = array<i32>} : memref<1x1xf32, #tpu.memory_space<vmem>>, vector<1x1xf32>,
    return
  }
}

</mosaic_0001>

<llo_original>
// kernel: free_bits_vae_forward.1
$region0: #{free_bits_vae_forward.1}
  #allocation0 [shape = 'u32[]', space=smem, size = 0x4, offset = 0x4, fixed_abs, tag = 'smem constant byte address 0x4 - core index']
  #allocation1 [shape = 'u32[72,128]{1,0:T(1,128)}', space=vmem, size = 0x9000, scoped, tag = 'internal scratch']
  #allocation2 [shape = 'f32[64,768]{1,0:T(8,128)}', space=vmem, size = 0x30000, scoped, tag = 'scratch operand']
  #allocation3 [shape = 'f32[64,128]{1,0:T(8,128)}', space=vmem, size = 0x8000, scoped, tag = 'scratch operand']
  %s0 = inlined_call_operand.vmem [shape: s32[64,4], index: 0, kind: input, shape index: {}]
  %s1 = inlined_call_operand.vmem [shape: f32[8,8], index: 1, kind: input, shape index: {}]
  %s2 = inlined_call_operand.hbm [shape: f32[336,768], index: 2, kind: input, shape index: {}]
  %s3 = inlined_call_operand.hbm [shape: f32[1,1], index: 3, kind: output, shape index: {0}]
  %s4 = inlined_call_operand.vmem [shape: f32[8,1], index: 4, kind: output, shape index: {1}]
  %5 = xla_tuple %s3, %s4
  %s6 = sld [smem:[#allocation0]]
  $region34: #{free_bits_vae_forward.1} parent=0
    _
  %s8 = ssub.s32 1, %s6
  %s9 = scalar_select 0, %s8, %s6
  $region1: #{free_bits_vae_forward.1} parent=0
    #allocation4 [shape = 'u8[1032192]{0}', space=vmem, size = 0xfc000, scoped, tag = 'input window, operand 2, single buffered']
    #allocation5 [shape = 's32[1]{0}', space=sflag, size = 0x4, scoped, tag = 'scoped memory for free_bits_vae_forward.1']
    #allocation6 [shape = 's32[1]{0}', space=sflag, size = 0x4, scoped, tag = 'scoped memory for free_bits_vae_forward.1']
    #allocation7 [shape = 'u8[512]{0}', space=vmem, size = 0x400, scoped, tag = 'output window, operand 0, single buffered']
    %10 = vsyncpa [#allocation5], 0
    %11 = vsyncpa [#allocation6], 0
    // Predicated region
    $region2: #{free_bits_vae_forward.1} parent=1 // pred_check
      _
    $region3: #{free_bits_vae_forward.1} parent=1 // pred_check_branch
      %13 = sbr.rel (0) target = $region5
    $region4: #{free_bits_vae_forward.1} parent=1 // pred_region
      _
    $region5: #{free_bits_vae_forward.1} parent=1 // pred_fallthru
      _
    // Predicated region
    $region6: #{free_bits_vae_forward.1} parent=1 // pred_check
      _
    $region7: #{free_bits_vae_forward.1} parent=1 // pred_check_branch
      %15 = sbr.rel (0) target = $region9
    $region8: #{free_bits_vae_forward.1} parent=1 // pred_region
      _
    $region9: #{free_bits_vae_forward.1} parent=1 // pred_fallthru
      _
    // Predicated region
    $region10: #{free_bits_vae_forward.1} parent=1 // pred_check
      _
    $region11: #{free_bits_vae_forward.1} parent=1 // pred_check_branch
      %17 = sbr.rel (0) target = $region13
    $region12: #{free_bits_vae_forward.1} parent=1 // pred_region
      %19 = vsyncadd [#allocation5], 0
      %s20 = sshll.u32 %s2, 4
      %s21 = int_to_ptr.hbm [resolvable:$true] %s20
      %s22 = sshll.u32 [#allocation4], 4
      %s23 = int_to_ptr.vmem [resolvable:$true] %s22
      %28 = dma.hbm_to_vmem [thread:$0]  %s21, 32256, %s23, [#allocation5], 768, 768, 48
    $region13: #{free_bits_vae_forward.1} parent=1 // pred_fallthru
      _
    // Predicated region
    $region14: #{free_bits_vae_forward.1} parent=1 // pred_check
      _
    $region15: #{free_bits_vae_forward.1} parent=1 // pred_check_branch
      %30 = sbr.rel (0) target = $region17
    $region16: #{free_bits_vae_forward.1} parent=1 // pred_region
      %32 = dma.done [#allocation5], 32256
    $region17: #{free_bits_vae_forward.1} parent=1 // pred_fallthru
      _
    %v33 = vld [vmem:[%s0] sm:$0xff]
    %v34 = vld [vmem:[%s0 + $0x8] sm:$0xff]
    %v35 = vld [vmem:[%s0 + $0x10] sm:$0xff]
    %v36 = vld [vmem:[%s0 + $0x18] sm:$0xff]
    %v37 = vld [vmem:[%s0 + $0x20] sm:$0xff]
    %v38 = vld [vmem:[%s0 + $0x28] sm:$0xff]
    %v39 = vld [vmem:[%s0 + $0x30] sm:$0xff]
    %v40 = vld [vmem:[%s0 + $0x38] sm:$0xff]
    %v41 = vlaneseq
    %v42 = vand.u32 %v41, 127
    %43 = vset.pattern.permute.xlu0 0
    %44 = vperm.xlu0 %43, %v33
    %v45 = vpop.permute.xlu0 %44
    %46 = vset.pattern.permute.xlu0 0
    %47 = vperm.xlu0 %46, %v34
    %v48 = vpop.permute.xlu0 %47
    %49 = vset.pattern.permute.xlu0 0
    %50 = vperm.xlu0 %49, %v35
    %v51 = vpop.permute.xlu0 %50
    %52 = vset.pattern.permute.xlu0 0
    %53 = vperm.xlu0 %52, %v36
    %v54 = vpop.permute.xlu0 %53
    %55 = vset.pattern.permute.xlu0 0
    %56 = vperm.xlu0 %55, %v37
    %v57 = vpop.permute.xlu0 %56
    %58 = vset.pattern.permute.xlu0 0
    %59 = vperm.xlu0 %58, %v38
    %v60 = vpop.permute.xlu0 %59
    %61 = vset.pattern.permute.xlu0 0
    %62 = vperm.xlu0 %61, %v39
    %v63 = vpop.permute.xlu0 %62
    %64 = vset.pattern.permute.xlu0 0
    %65 = vperm.xlu0 %64, %v40
    %v66 = vpop.permute.xlu0 %65
    %vm67 = vcmp.eq.s32.totalorder %v42, %v45
    %vm68 = vcmp.eq.s32.totalorder %v42, %v48
    %vm69 = vcmp.eq.s32.totalorder %v42, %v51
    %vm70 = vcmp.eq.s32.totalorder %v42, %v54
    %vm71 = vcmp.eq.s32.totalorder %v42, %v57
    %vm72 = vcmp.eq.s32.totalorder %v42, %v60
    %vm73 = vcmp.eq.s32.totalorder %v42, %v63
    %vm74 = vcmp.eq.s32.totalorder %v42, %v66
    %v75 = vadd.s32 %v33, 32
    %v76 = vadd.s32 %v34, 32
    %v77 = vadd.s32 %v35, 32
    %v78 = vadd.s32 %v36, 32
    %v79 = vadd.s32 %v37, 32
    %v80 = vadd.s32 %v38, 32
    %v81 = vadd.s32 %v39, 32
    %v82 = vadd.s32 %v40, 32
    %83 = vset.pattern.permute.xlu0 1
    %84 = vperm.xlu0 %83, %v75
    %v85 = vpop.permute.xlu0 %84
    %86 = vset.pattern.permute.xlu0 1
    %87 = vperm.xlu0 %86, %v76
    %v88 = vpop.permute.xlu0 %87
    %89 = vset.pattern.permute.xlu0 1
    %90 = vperm.xlu0 %89, %v77
    %v91 = vpop.permute.xlu0 %90
    %92 = vset.pattern.permute.xlu0 1
    %93 = vperm.xlu0 %92, %v78
    %v94 = vpop.permute.xlu0 %93
    %95 = vset.pattern.permute.xlu0 1
    %96 = vperm.xlu0 %95, %v79
    %v97 = vpop.permute.xlu0 %96
    %98 = vset.pattern.permute.xlu0 1
    %99 = vperm.xlu0 %98, %v80
    %v100 = vpop.permute.xlu0 %99
    %101 = vset.pattern.permute.xlu0 1
    %102 = vperm.xlu0 %101, %v81
    %v103 = vpop.permute.xlu0 %102
    %104 = vset.pattern.permute.xlu0 1
    %105 = vperm.xlu0 %104, %v82
    %v106 = vpop.permute.xlu0 %105
    %vm107 = vcmp.eq.s32.totalorder %v42, %v85
    %vm108 = vcmp.eq.s32.totalorder %v42, %v88
    %vm109 = vcmp.eq.s32.totalorder %v42, %v91
    %vm110 = vcmp.eq.s32.totalorder %v42, %v94
    %vm111 = vcmp.eq.s32.totalorder %v42, %v97
    %vm112 = vcmp.eq.s32.totalorder %v42, %v100
    %vm113 = vcmp.eq.s32.totalorder %v42, %v103
    %vm114 = vcmp.eq.s32.totalorder %v42, %v106
    %vm115 = vmor %vm67, %vm107
    %vm116 = vmor %vm68, %vm108
    %vm117 = vmor %vm69, %vm109
    %vm118 = vmor %vm70, %vm110
    %vm119 = vmor %vm71, %vm111
    %vm120 = vmor %vm72, %vm112
    %vm121 = vmor %vm73, %vm113
    %vm122 = vmor %vm74, %vm114
    %v123 = vsel %vm115, 1, 0
    %v124 = vsel %vm116, 1, 0
    %v125 = vsel %vm117, 1, 0
    %v126 = vsel %vm118, 1, 0
    %v127 = vsel %vm119, 1, 0
    %v128 = vsel %vm120, 1, 0
    %v129 = vsel %vm121, 1, 0
    %v130 = vsel %vm122, 1, 0
    %v131 = vcvt.s32.f32 %v123
    %v132 = vcvt.s32.f32 %v124
    %v133 = vcvt.s32.f32 %v125
    %v134 = vcvt.s32.f32 %v126
    %v135 = vcvt.s32.f32 %v127
    %v136 = vcvt.s32.f32 %v128
    %v137 = vcvt.s32.f32 %v129
    %v138 = vcvt.s32.f32 %v130
    %v139 = vld [vmem:[#allocation4] sm:$0xff]
    %v140 = vld [vmem:[#allocation4 + $0x8] sm:$0xff]
    %v141 = vld [vmem:[#allocation4 + $0x10] sm:$0xff]
    %v142 = vld [vmem:[#allocation4 + $0x18] sm:$0xff]
    %v143 = vld [vmem:[#allocation4 + $0x20] sm:$0xff]
    %v144 = vld [vmem:[#allocation4 + $0x28] sm:$0xff]
    %v145 = vld [vmem:[#allocation4 + $0x30] sm:$0xff]
    %v146 = vld [vmem:[#allocation4 + $0x38] sm:$0xff]
    %v147 = vld [vmem:[#allocation4 + $0x40] sm:$0xff]
    %v148 = vld [vmem:[#allocation4 + $0x48] sm:$0xff]
    %v149 = vld [vmem:[#allocation4 + $0x50] sm:$0xff]
    %v150 = vld [vmem:[#allocation4 + $0x58] sm:$0xff]
    %v151 = vld [vmem:[#allocation4 + $0x60] sm:$0xff]
    %v152 = vld [vmem:[#allocation4 + $0x68] sm:$0xff]
    %v153 = vld [vmem:[#allocation4 + $0x70] sm:$0xff]
    %v154 = vld [vmem:[#allocation4 + $0x78] sm:$0xff]
    %v155 = vld [vmem:[#allocation4 + $0x80] sm:$0xff]
    %v156 = vld [vmem:[#allocation4 + $0x88] sm:$0xff]
    %v157 = vld [vmem:[#allocation4 + $0x90] sm:$0xff]
    %v158 = vld [vmem:[#allocation4 + $0x98] sm:$0xff]
    %v159 = vld [vmem:[#allocation4 + $0xa0] sm:$0xff]
    %v160 = vld [vmem:[#allocation4 + $0xa8] sm:$0xff]
    %v161 = vld [vmem:[#allocation4 + $0xb0] sm:$0xff]
    %v162 = vld [vmem:[#allocation4 + $0xb8] sm:$0xff]
    %v163 = vld [vmem:[#allocation4 + $0xc0] sm:$0xff]
    %v164 = vld [vmem:[#allocation4 + $0xc8] sm:$0xff]
    %v165 = vld [vmem:[#allocation4 + $0xd0] sm:$0xff]
    %v166 = vld [vmem:[#allocation4 + $0xd8] sm:$0xff]
    %v167 = vld [vmem:[#allocation4 + $0xe0] sm:$0xff]
    %v168 = vld [vmem:[#allocation4 + $0xe8] sm:$0xff]
    %v169 = vld [vmem:[#allocation4 + $0xf0] sm:$0xff]
    %v170 = vld [vmem:[#allocation4 + $0xf8] sm:$0xff]
    %v171 = vld [vmem:[#allocation4 + $0x100] sm:$0xff]
    %v172 = vld [vmem:[#allocation4 + $0x108] sm:$0xff]
    %v173 = vld [vmem:[#allocation4 + $0x110] sm:$0xff]
    %v174 = vld [vmem:[#allocation4 + $0x118] sm:$0xff]
    %v175 = vld [vmem:[#allocation4 + $0x120] sm:$0xff]
    %v176 = vld [vmem:[#allocation4 + $0x128] sm:$0xff]
    %v177 = vld [vmem:[#allocation4 + $0x130] sm:$0xff]
    %v178 = vld [vmem:[#allocation4 + $0x138] sm:$0xff]
    %v179 = vld [vmem:[#allocation4 + $0x140] sm:$0xff]
    %v180 = vld [vmem:[#allocation4 + $0x148] sm:$0xff]
    %v181 = vld [vmem:[#allocation4 + $0x150] sm:$0xff]
    %v182 = vld [vmem:[#allocation4 + $0x158] sm:$0xff]
    %v183 = vld [vmem:[#allocation4 + $0x160] sm:$0xff]
    %v184 = vld [vmem:[#allocation4 + $0x168] sm:$0xff]
    %v185 = vld [vmem:[#allocation4 + $0x170] sm:$0xff]
    %v186 = vld [vmem:[#allocation4 + $0x178] sm:$0xff]
    %s187 = scalar_lea.vmem [#allocation4], 1920
    %v188 = vld [vmem:[%s187] ss:$8 sm:$0xf]
    %v189 = vld [vmem:[%s187] ss:$8 sm:$0x30]
    %v190 = vor.u32 %v188, %v189
    %v192 = vperm.slane %v190, 0
    %v193 = vperm.slane %v190, 1
    %v194 = vperm.slane %v190, 2
    %v195 = vperm.slane %v190, 3
    %v196 = vperm.slane %v190, 4
    %v197 = vperm.slane %v190, 5
    %vm204 = vcmask 523264
    %v206 = vsel %vm204, %v131, 0
    %v209 = vsel %vm204, %v132, 0
    %v212 = vsel %vm204, %v133, 0
    %v215 = vsel %vm204, %v134, 0
    %v218 = vsel %vm204, %v135, 0
    %v221 = vsel %vm204, %v136, 0
    %v224 = vsel %vm204, %v137, 0
    %v227 = vsel %vm204, %v138, 0
    %229 = vmatpush.msra.mxu0 0.0
    %230 = vmatpush.msra.mxu0 0.0
    %231 = vmatpush.msra.mxu0 0.0
    %232 = vmatpush.msra.mxu0 0.0
    %233 = vmatpush.msra.mxu0 0.0
    %234 = vmatpush.msra.mxu0 0.0
    %235 = vmatpush.msra.mxu0 0.0
    %236 = vmatpush.msra.mxu0 0.0
    %237 = vmatpush.msra.mxu0 %v181
    %238 = vmatpush.msra.mxu0 %v175
    %239 = vmatpush.msra.mxu0 %v169
    %240 = vmatpush.msra.mxu0 %v163
    %241 = vmatpush.msra.mxu0 %v157
    %242 = vmatpush.msra.mxu0 %v151
    %243 = vmatpush.msra.mxu0 %v145
    %244 = vmatpush.msra.mxu0 %v139
    %245 = vmatmul.f32.gmra.mxu0 %v206
    %v246 = vpop.f32.mrf.mxu0
    %v247 = vadd.f32 %v192, %v246
    %248 = vmatmul.f32.gmra.mxu0 %v209
    %v249 = vpop.f32.mrf.mxu0
    %v250 = vadd.f32 %v192, %v249
    %251 = vmatmul.f32.gmra.mxu0 %v212
    %v252 = vpop.f32.mrf.mxu0
    %v253 = vadd.f32 %v192, %v252
    %254 = vmatmul.f32.gmra.mxu0 %v215
    %v255 = vpop.f32.mrf.mxu0
    %v256 = vadd.f32 %v192, %v255
    %257 = vmatmul.f32.gmra.mxu0 %v218
    %v258 = vpop.f32.mrf.mxu0
    %v259 = vadd.f32 %v192, %v258
    %260 = vmatmul.f32.gmra.mxu0 %v221
    %v261 = vpop.f32.mrf.mxu0
    %v262 = vadd.f32 %v192, %v261
    %263 = vmatmul.f32.gmra.mxu0 %v224
    %v264 = vpop.f32.mrf.mxu0
    %v265 = vadd.f32 %v192, %v264
    %266 = vmatmul.f32.gmra.mxu0 %v227
    %v267 = vpop.f32.mrf.mxu0
    %v268 = vadd.f32 %v192, %v267
    %269 = vdwg.mxu0
    %270 = vmatpush.msra.mxu0 0.0
    %271 = vmatpush.msra.mxu0 0.0
    %272 = vmatpush.msra.mxu0 0.0
    %273 = vmatpush.msra.mxu0 0.0
    %274 = vmatpush.msra.mxu0 0.0
    %275 = vmatpush.msra.mxu0 0.0
    %276 = vmatpush.msra.mxu0 0.0
    %277 = vmatpush.msra.mxu0 0.0
    %278 = vmatpush.msra.mxu0 %v182
    %279 = vmatpush.msra.mxu0 %v176
    %280 = vmatpush.msra.mxu0 %v170
    %281 = vmatpush.msra.mxu0 %v164
    %282 = vmatpush.msra.mxu0 %v158
    %283 = vmatpush.msra.mxu0 %v152
    %284 = vmatpush.msra.mxu0 %v146
    %285 = vmatpush.msra.mxu0 %v140
    %286 = vmatmul.f32.gmra.mxu0 %v206
    %v287 = vpop.f32.mrf.mxu0
    %v288 = vadd.f32 %v193, %v287
    %289 = vmatmul.f32.gmra.mxu0 %v209
    %v290 = vpop.f32.mrf.mxu0
    %v291 = vadd.f32 %v193, %v290
    %292 = vmatmul.f32.gmra.mxu0 %v212
    %v293 = vpop.f32.mrf.mxu0
    %v294 = vadd.f32 %v193, %v293
    %295 = vmatmul.f32.gmra.mxu0 %v215
    %v296 = vpop.f32.mrf.mxu0
    %v297 = vadd.f32 %v193, %v296
    %298 = vmatmul.f32.gmra.mxu0 %v218
    %v299 = vpop.f32.mrf.mxu0
    %v300 = vadd.f32 %v193, %v299
    %301 = vmatmul.f32.gmra.mxu0 %v221
    %v302 = vpop.f32.mrf.mxu0
    %v303 = vadd.f32 %v193, %v302
    %304 = vmatmul.f32.gmra.mxu0 %v224
    %v305 = vpop.f32.mrf.mxu0
    %v306 = vadd.f32 %v193, %v305
    %307 = vmatmul.f32.gmra.mxu0 %v227
    %v308 = vpop.f32.mrf.mxu0
    %v309 = vadd.f32 %v193, %v308
    %310 = vdwg.mxu0
    %311 = vmatpush.msra.mxu0 0.0
    %312 = vmatpush.msra.mxu0 0.0
    %313 = vmatpush.msra.mxu0 0.0
    %314 = vmatpush.msra.mxu0 0.0
    %315 = vmatpush.msra.mxu0 0.0
    %316 = vmatpush.msra.mxu0 0.0
    %317 = vmatpush.msra.mxu0 0.0
    %318 = vmatpush.msra.mxu0 0.0
    %319 = vmatpush.msra.mxu0 %v183
    %320 = vmatpush.msra.mxu0 %v177
    %321 = vmatpush.msra.mxu0 %v171
    %322 = vmatpush.msra.mxu0 %v165
    %323 = vmatpush.msra.mxu0 %v159
    %324 = vmatpush.msra.mxu0 %v153
    %325 = vmatpush.msra.mxu0 %v147
    %326 = vmatpush.msra.mxu0 %v141
    %327 = vmatmul.f32.gmra.mxu0 %v206
    %v328 = vpop.f32.mrf.mxu0
    %v329 = vadd.f32 %v194, %v328
    %330 = vmatmul.f32.gmra.mxu0 %v209
    %v331 = vpop.f32.mrf.mxu0
    %v332 = vadd.f32 %v194, %v331
    %333 = vmatmul.f32.gmra.mxu0 %v212
    %v334 = vpop.f32.mrf.mxu0
    %v335 = vadd.f32 %v194, %v334
    %336 = vmatmul.f32.gmra.mxu0 %v215
    %v337 = vpop.f32.mrf.mxu0
    %v338 = vadd.f32 %v194, %v337
    %339 = vmatmul.f32.gmra.mxu0 %v218
    %v340 = vpop.f32.mrf.mxu0
    %v341 = vadd.f32 %v194, %v340
    %342 = vmatmul.f32.gmra.mxu0 %v221
    %v343 = vpop.f32.mrf.mxu0
    %v344 = vadd.f32 %v194, %v343
    %345 = vmatmul.f32.gmra.mxu0 %v224
    %v346 = vpop.f32.mrf.mxu0
    %v347 = vadd.f32 %v194, %v346
    %348 = vmatmul.f32.gmra.mxu0 %v227
    %v349 = vpop.f32.mrf.mxu0
    %v350 = vadd.f32 %v194, %v349
    %351 = vdwg.mxu0
    %352 = vmatpush.msra.mxu0 0.0
    %353 = vmatpush.msra.mxu0 0.0
    %354 = vmatpush.msra.mxu0 0.0
    %355 = vmatpush.msra.mxu0 0.0
    %356 = vmatpush.msra.mxu0 0.0
    %357 = vmatpush.msra.mxu0 0.0
    %358 = vmatpush.msra.mxu0 0.0
    %359 = vmatpush.msra.mxu0 0.0
    %360 = vmatpush.msra.mxu0 %v184
    %361 = vmatpush.msra.mxu0 %v178
    %362 = vmatpush.msra.mxu0 %v172
    %363 = vmatpush.msra.mxu0 %v166
    %364 = vmatpush.msra.mxu0 %v160
    %365 = vmatpush.msra.mxu0 %v154
    %366 = vmatpush.msra.mxu0 %v148
    %367 = vmatpush.msra.mxu0 %v142
    %368 = vmatmul.f32.gmra.mxu0 %v206
    %v369 = vpop.f32.mrf.mxu0
    %v370 = vadd.f32 %v195, %v369
    %371 = vmatmul.f32.gmra.mxu0 %v209
    %v372 = vpop.f32.mrf.mxu0
    %v373 = vadd.f32 %v195, %v372
    %374 = vmatmul.f32.gmra.mxu0 %v212
    %v375 = vpop.f32.mrf.mxu0
    %v376 = vadd.f32 %v195, %v375
    %377 = vmatmul.f32.gmra.mxu0 %v215
    %v378 = vpop.f32.mrf.mxu0
    %v379 = vadd.f32 %v195, %v378
    %380 = vmatmul.f32.gmra.mxu0 %v218
    %v381 = vpop.f32.mrf.mxu0
    %v382 = vadd.f32 %v195, %v381
    %383 = vmatmul.f32.gmra.mxu0 %v221
    %v384 = vpop.f32.mrf.mxu0
    %v385 = vadd.f32 %v195, %v384
    %386 = vmatmul.f32.gmra.mxu0 %v224
    %v387 = vpop.f32.mrf.mxu0
    %v388 = vadd.f32 %v195, %v387
    %389 = vmatmul.f32.gmra.mxu0 %v227
    %v390 = vpop.f32.mrf.mxu0
    %v391 = vadd.f32 %v195, %v390
    %392 = vdwg.mxu0
    %393 = vmatpush.msra.mxu0 0.0
    %394 = vmatpush.msra.mxu0 0.0
    %395 = vmatpush.msra.mxu0 0.0
    %396 = vmatpush.msra.mxu0 0.0
    %397 = vmatpush.msra.mxu0 0.0
    %398 = vmatpush.msra.mxu0 0.0
    %399 = vmatpush.msra.mxu0 0.0
    %400 = vmatpush.msra.mxu0 0.0
    %401 = vmatpush.msra.mxu0 %v185
    %402 = vmatpush.msra.mxu0 %v179
    %403 = vmatpush.msra.mxu0 %v173
    %404 = vmatpush.msra.mxu0 %v167
    %405 = vmatpush.msra.mxu0 %v161
    %406 = vmatpush.msra.mxu0 %v155
    %407 = vmatpush.msra.mxu0 %v149
    %408 = vmatpush.msra.mxu0 %v143
    %409 = vmatmul.f32.gmra.mxu0 %v206
    %v410 = vpop.f32.mrf.mxu0
    %v411 = vadd.f32 %v196, %v410
    %412 = vmatmul.f32.gmra.mxu0 %v209
    %v413 = vpop.f32.mrf.mxu0
    %v414 = vadd.f32 %v196, %v413
    %415 = vmatmul.f32.gmra.mxu0 %v212
    %v416 = vpop.f32.mrf.mxu0
    %v417 = vadd.f32 %v196, %v416
    %418 = vmatmul.f32.gmra.mxu0 %v215
    %v419 = vpop.f32.mrf.mxu0
    %v420 = vadd.f32 %v196, %v419
    %421 = vmatmul.f32.gmra.mxu0 %v218
    %v422 = vpop.f32.mrf.mxu0
    %v423 = vadd.f32 %v196, %v422
    %424 = vmatmul.f32.gmra.mxu0 %v221
    %v425 = vpop.f32.mrf.mxu0
    %v426 = vadd.f32 %v196, %v425
    %427 = vmatmul.f32.gmra.mxu0 %v224
    %v428 = vpop.f32.mrf.mxu0
    %v429 = vadd.f32 %v196, %v428
    %430 = vmatmul.f32.gmra.mxu0 %v227
    %v431 = vpop.f32.mrf.mxu0
    %v432 = vadd.f32 %v196, %v431
    %433 = vdwg.mxu0
    %434 = vmatpush.msra.mxu0 0.0
    %435 = vmatpush.msra.mxu0 0.0
    %436 = vmatpush.msra.mxu0 0.0
    %437 = vmatpush.msra.mxu0 0.0
    %438 = vmatpush.msra.mxu0 0.0
    %439 = vmatpush.msra.mxu0 0.0
    %440 = vmatpush.msra.mxu0 0.0
    %441 = vmatpush.msra.mxu0 0.0
    %442 = vmatpush.msra.mxu0 %v186
    %443 = vmatpush.msra.mxu0 %v180
    %444 = vmatpush.msra.mxu0 %v174
    %445 = vmatpush.msra.mxu0 %v168
    %446 = vmatpush.msra.mxu0 %v162
    %447 = vmatpush.msra.mxu0 %v156
    %448 = vmatpush.msra.mxu0 %v150
    %449 = vmatpush.msra.mxu0 %v144
    %450 = vmatmul.f32.gmra.mxu0 %v206
    %v451 = vpop.f32.mrf.mxu0
    %v452 = vadd.f32 %v197, %v451
    %453 = vmatmul.f32.gmra.mxu0 %v209
    %v454 = vpop.f32.mrf.mxu0
    %v455 = vadd.f32 %v197, %v454
    %456 = vmatmul.f32.gmra.mxu0 %v212
    %v457 = vpop.f32.mrf.mxu0
    %v458 = vadd.f32 %v197, %v457
    %459 = vmatmul.f32.gmra.mxu0 %v215
    %v460 = vpop.f32.mrf.mxu0
    %v461 = vadd.f32 %v197, %v460
    %462 = vmatmul.f32.gmra.mxu0 %v218
    %v463 = vpop.f32.mrf.mxu0
    %v464 = vadd.f32 %v197, %v463
    %465 = vmatmul.f32.gmra.mxu0 %v221
    %v466 = vpop.f32.mrf.mxu0
    %v467 = vadd.f32 %v197, %v466
    %468 = vmatmul.f32.gmra.mxu0 %v224
    %v469 = vpop.f32.mrf.mxu0
    %v470 = vadd.f32 %v197, %v469
    %471 = vmatmul.f32.gmra.mxu0 %v227
    %v472 = vpop.f32.mrf.mxu0
    %v473 = vadd.f32 %v197, %v472
    %474 = vdwg.mxu0
    %475 = vst [vmem:[#allocation2] sm:$0xff] %v247
    %476 = vst [vmem:[#allocation2 + $0x8] sm:$0xff] %v288
    %477 = vst [vmem:[#allocation2 + $0x10] sm:$0xff] %v329
    %478 = vst [vmem:[#allocation2 + $0x18] sm:$0xff] %v370
    %479 = vst [vmem:[#allocation2 + $0x20] sm:$0xff] %v411
    %480 = vst [vmem:[#allocation2 + $0x28] sm:$0xff] %v452
    %481 = vst [vmem:[#allocation2 + $0x30] sm:$0xff] %v250
    %482 = vst [vmem:[#allocation2 + $0x38] sm:$0xff] %v291
    %483 = vst [vmem:[#allocation2 + $0x40] sm:$0xff] %v332
    %484 = vst [vmem:[#allocation2 + $0x48] sm:$0xff] %v373
    %485 = vst [vmem:[#allocation2 + $0x50] sm:$0xff] %v414
    %486 = vst [vmem:[#allocation2 + $0x58] sm:$0xff] %v455
    %487 = vst [vmem:[#allocation2 + $0x60] sm:$0xff] %v253
    %488 = vst [vmem:[#allocation2 + $0x68] sm:$0xff] %v294
    %489 = vst [vmem:[#allocation2 + $0x70] sm:$0xff] %v335
    %490 = vst [vmem:[#allocation2 + $0x78] sm:$0xff] %v376
    %491 = vst [vmem:[#allocation2 + $0x80] sm:$0xff] %v417
    %492 = vst [vmem:[#allocation2 + $0x88] sm:$0xff] %v458
    %493 = vst [vmem:[#allocation2 + $0x90] sm:$0xff] %v256
    %494 = vst [vmem:[#allocation2 + $0x98] sm:$0xff] %v297
    %495 = vst [vmem:[#allocation2 + $0xa0] sm:$0xff] %v338
    %496 = vst [vmem:[#allocation2 + $0xa8] sm:$0xff] %v379
    %497 = vst [vmem:[#allocation2 + $0xb0] sm:$0xff] %v420
    %498 = vst [vmem:[#allocation2 + $0xb8] sm:$0xff] %v461
    %499 = vst [vmem:[#allocation2 + $0xc0] sm:$0xff] %v259
    %500 = vst [vmem:[#allocation2 + $0xc8] sm:$0xff] %v300
    %501 = vst [vmem:[#allocation2 + $0xd0] sm:$0xff] %v341
    %502 = vst [vmem:[#allocation2 + $0xd8] sm:$0xff] %v382
    %503 = vst [vmem:[#allocation2 + $0xe0] sm:$0xff] %v423
    %504 = vst [vmem:[#allocation2 + $0xe8] sm:$0xff] %v464
    %505 = vst [vmem:[#allocation2 + $0xf0] sm:$0xff] %v262
    %506 = vst [vmem:[#allocation2 + $0xf8] sm:$0xff] %v303
    %507 = vst [vmem:[#allocation2 + $0x100] sm:$0xff] %v344
    %508 = vst [vmem:[#allocation2 + $0x108] sm:$0xff] %v385
    %509 = vst [vmem:[#allocation2 + $0x110] sm:$0xff] %v426
    %510 = vst [vmem:[#allocation2 + $0x118] sm:$0xff] %v467
    %511 = vst [vmem:[#allocation2 + $0x120] sm:$0xff] %v265
    %512 = vst [vmem:[#allocation2 + $0x128] sm:$0xff] %v306
    %513 = vst [vmem:[#allocation2 + $0x130] sm:$0xff] %v347
    %514 = vst [vmem:[#allocation2 + $0x138] sm:$0xff] %v388
    %515 = vst [vmem:[#allocation2 + $0x140] sm:$0xff] %v429
    %516 = vst [vmem:[#allocation2 + $0x148] sm:$0xff] %v470
    %517 = vst [vmem:[#allocation2 + $0x150] sm:$0xff] %v268
    %518 = vst [vmem:[#allocation2 + $0x158] sm:$0xff] %v309
    %519 = vst [vmem:[#allocation2 + $0x160] sm:$0xff] %v350
    %520 = vst [vmem:[#allocation2 + $0x168] sm:$0xff] %v391
    %521 = vst [vmem:[#allocation2 + $0x170] sm:$0xff] %v432
    %522 = vst [vmem:[#allocation2 + $0x178] sm:$0xff] %v473
    %v523 = vld [vmem:[#allocation4 + $0x180] sm:$0xff]
    %v524 = vld [vmem:[#allocation4 + $0x188] sm:$0xff]
    %v525 = vld [vmem:[#allocation4 + $0x190] sm:$0xff]
    %v526 = vld [vmem:[#allocation4 + $0x1b0] sm:$0xff]
    %v527 = vld [vmem:[#allocation4 + $0x1b8] sm:$0xff]
    %v528 = vld [vmem:[#allocation4 + $0x1c0] sm:$0xff]
    %v529 = vld [vmem:[#allocation4 + $0x1e0] sm:$0xff]
    %v530 = vld [vmem:[#allocation4 + $0x1e8] sm:$0xff]
    %v531 = vld [vmem:[#allocation4 + $0x1f0] sm:$0xff]
    %v532 = vld [vmem:[#allocation4 + $0x210] sm:$0xff]
    %v533 = vld [vmem:[#allocation4 + $0x218] sm:$0xff]
    %v534 = vld [vmem:[#allocation4 + $0x220] sm:$0xff]
    %v535 = vld [vmem:[#allocation4 + $0x240] sm:$0xff]
    %v536 = vld [vmem:[#allocation4 + $0x248] sm:$0xff]
    %v537 = vld [vmem:[#allocation4 + $0x250] sm:$0xff]
    %v538 = vld [vmem:[#allocation4 + $0x270] sm:$0xff]
    %v539 = vld [vmem:[#allocation4 + $0x278] sm:$0xff]
    %v540 = vld [vmem:[#allocation4 + $0x280] sm:$0xff]
    %v541 = vld [vmem:[#allocation4 + $0x2a0] sm:$0xff]
    %v542 = vld [vmem:[#allocation4 + $0x2a8] sm:$0xff]
    %v543 = vld [vmem:[#allocation4 + $0x2b0] sm:$0xff]
    %v544 = vld [vmem:[#allocation4 + $0x2d0] sm:$0xff]
    %v545 = vld [vmem:[#allocation4 + $0x2d8] sm:$0xff]
    %v546 = vld [vmem:[#allocation4 + $0x2e0] sm:$0xff]
    %v547 = vld [vmem:[#allocation4 + $0x300] sm:$0xff]
    %v548 = vld [vmem:[#allocation4 + $0x308] sm:$0xff]
    %v549 = vld [vmem:[#allocation4 + $0x310] sm:$0xff]
    %v550 = vld [vmem:[#allocation4 + $0x330] sm:$0xff]
    %v551 = vld [vmem:[#allocation4 + $0x338] sm:$0xff]
    %v552 = vld [vmem:[#allocation4 + $0x340] sm:$0xff]
    %v553 = vld [vmem:[#allocation4 + $0x360] sm:$0xff]
    %v554 = vld [vmem:[#allocation4 + $0x368] sm:$0xff]
    %v555 = vld [vmem:[#allocation4 + $0x370] sm:$0xff]
    %v556 = vld [vmem:[#allocation4 + $0x390] sm:$0xff]
    %v557 = vld [vmem:[#allocation4 + $0x398] sm:$0xff]
    %v558 = vld [vmem:[#allocation4 + $0x3a0] sm:$0xff]
    %v559 = vld [vmem:[#allocation4 + $0x3c0] sm:$0xff]
    %v560 = vld [vmem:[#allocation4 + $0x3c8] sm:$0xff]
    %v561 = vld [vmem:[#allocation4 + $0x3d0] sm:$0xff]
    %v562 = vld [vmem:[#allocation4 + $0x3f0] sm:$0xff]
    %v563 = vld [vmem:[#allocation4 + $0x3f8] sm:$0xff]
    %v564 = vld [vmem:[#allocation4 + $0x400] sm:$0xff]
    %v565 = vld [vmem:[#allocation4 + $0x420] sm:$0xff]
    %v566 = vld [vmem:[#allocation4 + $0x428] sm:$0xff]
    %v567 = vld [vmem:[#allocation4 + $0x430] sm:$0xff]
    %v568 = vld [vmem:[#allocation4 + $0x450] sm:$0xff]
    %v569 = vld [vmem:[#allocation4 + $0x458] sm:$0xff]
    %v570 = vld [vmem:[#allocation4 + $0x460] sm:$0xff]
    %v571 = vld [vmem:[#allocation4 + $0x7b0] ss:$0 sm:$0xff]
    %v572 = vld [vmem:[#allocation2] sm:$0xff]
    %v573 = vld [vmem:[#allocation2 + $0x8] sm:$0xff]
    %v574 = vld [vmem:[#allocation2 + $0x10] sm:$0xff]
    %575 = vmatpush.msra.mxu0 %v568
    %576 = vmatpush.msra.mxu0 %v565
    %577 = vmatpush.msra.mxu0 %v562
    %578 = vmatpush.msra.mxu0 %v559
    %579 = vmatpush.msra.mxu0 %v556
    %580 = vmatpush.msra.mxu0 %v553
    %581 = vmatpush.msra.mxu0 %v550
    %582 = vmatpush.msra.mxu0 %v547
    %583 = vmatpush.msra.mxu0 %v544
    %584 = vmatpush.msra.mxu0 %v541
    %585 = vmatpush.msra.mxu0 %v538
    %586 = vmatpush.msra.mxu0 %v535
    %587 = vmatpush.msra.mxu0 %v532
    %588 = vmatpush.msra.mxu0 %v529
    %589 = vmatpush.msra.mxu0 %v526
    %590 = vmatpush.msra.mxu0 %v523
    %591 = vmatmul.f32.gmra.mxu0 0.0
    %v592 = vpop.f32.mrf.mxu0
    %v593 = vadd.f32 0.0, %v592
    %594 = vdwg.mxu0
    %595 = vmatpush.msra.mxu0 %v569
    %596 = vmatpush.msra.mxu0 %v566
    %597 = vmatpush.msra.mxu0 %v563
    %598 = vmatpush.msra.mxu0 %v560
    %599 = vmatpush.msra.mxu0 %v557
    %600 = vmatpush.msra.mxu0 %v554
    %601 = vmatpush.msra.mxu0 %v551
    %602 = vmatpush.msra.mxu0 %v548
    %603 = vmatpush.msra.mxu0 %v545
    %604 = vmatpush.msra.mxu0 %v542
    %605 = vmatpush.msra.mxu0 %v539
    %606 = vmatpush.msra.mxu0 %v536
    %607 = vmatpush.msra.mxu0 %v533
    %608 = vmatpush.msra.mxu0 %v530
    %609 = vmatpush.msra.mxu0 %v527
    %610 = vmatpush.msra.mxu0 %v524
    %611 = vmatmul.f32.gmra.mxu0 0.0
    %v612 = vpop.f32.mrf.mxu0
    %v613 = vadd.f32 0.0, %v612
    %614 = vdwg.mxu0
    %615 = vmatpush.msra.mxu0 %v570
    %616 = vmatpush.msra.mxu0 %v567
    %617 = vmatpush.msra.mxu0 %v564
    %618 = vmatpush.msra.mxu0 %v561
    %619 = vmatpush.msra.mxu0 %v558
    %620 = vmatpush.msra.mxu0 %v555
    %621 = vmatpush.msra.mxu0 %v552
    %622 = vmatpush.msra.mxu0 %v549
    %623 = vmatpush.msra.mxu0 %v546
    %624 = vmatpush.msra.mxu0 %v543
    %625 = vmatpush.msra.mxu0 %v540
    %626 = vmatpush.msra.mxu0 %v537
    %627 = vmatpush.msra.mxu0 %v534
    %628 = vmatpush.msra.mxu0 %v531
    %629 = vmatpush.msra.mxu0 %v528
    %630 = vmatpush.msra.mxu0 %v525
    %631 = vmatmul.f32.gmra.mxu0 0.0
    %v632 = vpop.f32.mrf.mxu0
    %v633 = vadd.f32 0.0, %v632
    %634 = vdwg.mxu0
    %v635 = vadd.f32 %v572, %v593
    %v636 = vxor.u32 %v635, 2147483648
    %v637 = vmul.f32 %v636, 1.442695
    %v638 = vpow.pop %v637
    %v639 = vadd.f32 %v638, 1.0
    %v640 = vrcp.pop %v639
    %v641 = vmul.f32 %v639, %v640
    %v642 = vsub.f32 1.0, %v641
    %v643 = vmul.f32 %v640, %v642
    %v644 = vadd.f32 %v640, %v643
    %vm645 = vweird.f32 %v639
    %vm646 = vweird.f32 %v640
    %vm647 = vmor %vm645, %vm646
    %v648 = vsel %vm647, %v640, %v644
    %v649 = vand.u32 2147483647, %v639
    %vm650 = vcmp.eq.f32.partialorder %v649, 8.507059e+37
    %v651 = vand.u32 %v639, 2147483648
    %v652 = vor.u32 1.1754944e-38, %v651
    %v653 = vsel %vm650, %v652, %v648
    %v654 = vmul.f32 1.0, %v653
    %v655 = vadd.f32 %v573, %v613
    %v656 = vxor.u32 %v655, 2147483648
    %v657 = vmul.f32 %v656, 1.442695
    %v658 = vpow.pop %v657
    %v659 = vadd.f32 %v658, 1.0
    %v660 = vrcp.pop %v659
    %v661 = vmul.f32 %v659, %v660
    %v662 = vsub.f32 1.0, %v661
    %v663 = vmul.f32 %v660, %v662
    %v664 = vadd.f32 %v660, %v663
    %vm665 = vweird.f32 %v659
    %vm666 = vweird.f32 %v660
    %vm667 = vmor %vm665, %vm666
    %v668 = vsel %vm667, %v660, %v664
    %v669 = vand.u32 2147483647, %v659
    %vm670 = vcmp.eq.f32.partialorder %v669, 8.507059e+37
    %v671 = vand.u32 %v659, 2147483648
    %v672 = vor.u32 1.1754944e-38, %v671
    %v673 = vsel %vm670, %v672, %v668
    %v674 = vmul.f32 1.0, %v673
    %v675 = vadd.f32 %v633, %v571
    %v676 = vmul.f32 %v654, %v675
    %v677 = vadd.f32 %v574, %v676
    %v678 = vtanh.pop %v677
    %v679 = vsub.f32 1.0, %v674
    %v680 = vmul.f32 %v679, %v678
    %v681 = vmul.f32 %v674, 0.0
    %v682 = vadd.f32 %v680, %v681
    %v683 = vld [vmem:[#allocation2 + $0x30] sm:$0xff]
    %v684 = vld [vmem:[#allocation2 + $0x38] sm:$0xff]
    %v685 = vld [vmem:[#allocation2 + $0x40] sm:$0xff]
    %686 = vmatpush.msra.mxu0 %v568
    %687 = vmatpush.msra.mxu0 %v565
    %688 = vmatpush.msra.mxu0 %v562
    %689 = vmatpush.msra.mxu0 %v559
    %690 = vmatpush.msra.mxu0 %v556
    %691 = vmatpush.msra.mxu0 %v553
    %692 = vmatpush.msra.mxu0 %v550
    %693 = vmatpush.msra.mxu0 %v547
    %694 = vmatpush.msra.mxu0 %v544
    %695 = vmatpush.msra.mxu0 %v541
    %696 = vmatpush.msra.mxu0 %v538
    %697 = vmatpush.msra.mxu0 %v535
    %698 = vmatpush.msra.mxu0 %v532
    %699 = vmatpush.msra.mxu0 %v529
    %700 = vmatpush.msra.mxu0 %v526
    %701 = vmatpush.msra.mxu0 %v523
    %702 = vmatmul.f32.gmra.mxu0 %v682
    %v703 = vpop.f32.mrf.mxu0
    %v704 = vadd.f32 0.0, %v703
    %705 = vdwg.mxu0
    %706 = vmatpush.msra.mxu0 %v569
    %707 = vmatpush.msra.mxu0 %v566
    %708 = vmatpush.msra.mxu0 %v563
    %709 = vmatpush.msra.mxu0 %v560
    %710 = vmatpush.msra.mxu0 %v557
    %711 = vmatpush.msra.mxu0 %v554
    %712 = vmatpush.msra.mxu0 %v551
    %713 = vmatpush.msra.mxu0 %v548
    %714 = vmatpush.msra.mxu0 %v545
    %715 = vmatpush.msra.mxu0 %v542
    %716 = vmatpush.msra.mxu0 %v539
    %717 = vmatpush.msra.mxu0 %v536
    %718 = vmatpush.msra.mxu0 %v533
    %719 = vmatpush.msra.mxu0 %v530
    %720 = vmatpush.msra.mxu0 %v527
    %721 = vmatpush.msra.mxu0 %v524
    %722 = vmatmul.f32.gmra.mxu0 %v682
    %v723 = vpop.f32.mrf.mxu0
    %v724 = vadd.f32 0.0, %v723
    %725 = vdwg.mxu0
    %726 = vmatpush.msra.mxu0 %v570
    %727 = vmatpush.msra.mxu0 %v567
    %728 = vmatpush.msra.mxu0 %v564
    %729 = vmatpush.msra.mxu0 %v561
    %730 = vmatpush.msra.mxu0 %v558
    %731 = vmatpush.msra.mxu0 %v555
    %732 = vmatpush.msra.mxu0 %v552
    %733 = vmatpush.msra.mxu0 %v549
    %734 = vmatpush.msra.mxu0 %v546
    %735 = vmatpush.msra.mxu0 %v543
    %736 = vmatpush.msra.mxu0 %v540
    %737 = vmatpush.msra.mxu0 %v537
    %738 = vmatpush.msra.mxu0 %v534
    %739 = vmatpush.msra.mxu0 %v531
    %740 = vmatpush.msra.mxu0 %v528
    %741 = vmatpush.msra.mxu0 %v525
    %742 = vmatmul.f32.gmra.mxu0 %v682
    %v743 = vpop.f32.mrf.mxu0
    %v744 = vadd.f32 0.0, %v743
    %745 = vdwg.mxu0
    %v746 = vadd.f32 %v683, %v704
    %v747 = vxor.u32 %v746, 2147483648
    %v748 = vmul.f32 %v747, 1.442695
    %v749 = vpow.pop %v748
    %v750 = vadd.f32 %v749, 1.0
    %v751 = vrcp.pop %v750
    %v752 = vmul.f32 %v750, %v751
    %v753 = vsub.f32 1.0, %v752
    %v754 = vmul.f32 %v751, %v753
    %v755 = vadd.f32 %v751, %v754
    %vm756 = vweird.f32 %v750
    %vm757 = vweird.f32 %v751
    %vm758 = vmor %vm756, %vm757
    %v759 = vsel %vm758, %v751, %v755
    %v760 = vand.u32 2147483647, %v750
    %vm761 = vcmp.eq.f32.partialorder %v760, 8.507059e+37
    %v762 = vand.u32 %v750, 2147483648
    %v763 = vor.u32 1.1754944e-38, %v762
    %v764 = vsel %vm761, %v763, %v759
    %v765 = vmul.f32 1.0, %v764
    %v766 = vadd.f32 %v684, %v724
    %v767 = vxor.u32 %v766, 2147483648
    %v768 = vmul.f32 %v767, 1.442695
    %v769 = vpow.pop %v768
    %v770 = vadd.f32 %v769, 1.0
    %v771 = vrcp.pop %v770
    %v772 = vmul.f32 %v770, %v771
    %v773 = vsub.f32 1.0, %v772
    %v774 = vmul.f32 %v771, %v773
    %v775 = vadd.f32 %v771, %v774
    %vm776 = vweird.f32 %v770
    %vm777 = vweird.f32 %v771
    %vm778 = vmor %vm776, %vm777
    %v779 = vsel %vm778, %v771, %v775
    %v780 = vand.u32 2147483647, %v770
    %vm781 = vcmp.eq.f32.partialorder %v780, 8.507059e+37
    %v782 = vand.u32 %v770, 2147483648
    %v783 = vor.u32 1.1754944e-38, %v782
    %v784 = vsel %vm781, %v783, %v779
    %v785 = vmul.f32 1.0, %v784
    %v786 = vadd.f32 %v744, %v571
    %v787 = vmul.f32 %v765, %v786
    %v788 = vadd.f32 %v685, %v787
    %v789 = vtanh.pop %v788
    %v790 = vsub.f32 1.0, %v785
    %v791 = vmul.f32 %v790, %v789
    %v792 = vmul.f32 %v785, %v682
    %v793 = vadd.f32 %v791, %v792
    %v794 = vld [vmem:[#allocation2 + $0x60] sm:$0xff]
    %v795 = vld [vmem:[#allocation2 + $0x68] sm:$0xff]
    %v796 = vld [vmem:[#allocation2 + $0x70] sm:$0xff]
    %797 = vmatpush.msra.mxu0 %v568
    %798 = vmatpush.msra.mxu0 %v565
    %799 = vmatpush.msra.mxu0 %v562
    %800 = vmatpush.msra.mxu0 %v559
    %801 = vmatpush.msra.mxu0 %v556
    %802 = vmatpush.msra.mxu0 %v553
    %803 = vmatpush.msra.mxu0 %v550
    %804 = vmatpush.msra.mxu0 %v547
    %805 = vmatpush.msra.mxu0 %v544
    %806 = vmatpush.msra.mxu0 %v541
    %807 = vmatpush.msra.mxu0 %v538
    %808 = vmatpush.msra.mxu0 %v535
    %809 = vmatpush.msra.mxu0 %v532
    %810 = vmatpush.msra.mxu0 %v529
    %811 = vmatpush.msra.mxu0 %v526
    %812 = vmatpush.msra.mxu0 %v523
    %813 = vmatmul.f32.gmra.mxu0 %v793
    %v814 = vpop.f32.mrf.mxu0
    %v815 = vadd.f32 0.0, %v814
    %816 = vdwg.mxu0
    %817 = vmatpush.msra.mxu0 %v569
    %818 = vmatpush.msra.mxu0 %v566
    %819 = vmatpush.msra.mxu0 %v563
    %820 = vmatpush.msra.mxu0 %v560
    %821 = vmatpush.msra.mxu0 %v557
    %822 = vmatpush.msra.mxu0 %v554
    %823 = vmatpush.msra.mxu0 %v551
    %824 = vmatpush.msra.mxu0 %v548
    %825 = vmatpush.msra.mxu0 %v545
    %826 = vmatpush.msra.mxu0 %v542
    %827 = vmatpush.msra.mxu0 %v539
    %828 = vmatpush.msra.mxu0 %v536
    %829 = vmatpush.msra.mxu0 %v533
    %830 = vmatpush.msra.mxu0 %v530
    %831 = vmatpush.msra.mxu0 %v527
    %832 = vmatpush.msra.mxu0 %v524
    %833 = vmatmul.f32.gmra.mxu0 %v793
    %v834 = vpop.f32.mrf.mxu0
    %v835 = vadd.f32 0.0, %v834
    %836 = vdwg.mxu0
    %837 = vmatpush.msra.mxu0 %v570
    %838 = vmatpush.msra.mxu0 %v567
    %839 = vmatpush.msra.mxu0 %v564
    %840 = vmatpush.msra.mxu0 %v561
    %841 = vmatpush.msra.mxu0 %v558
    %842 = vmatpush.msra.mxu0 %v555
    %843 = vmatpush.msra.mxu0 %v552
    %844 = vmatpush.msra.mxu0 %v549
    %845 = vmatpush.msra.mxu0 %v546
    %846 = vmatpush.msra.mxu0 %v543
    %847 = vmatpush.msra.mxu0 %v540
    %848 = vmatpush.msra.mxu0 %v537
    %849 = vmatpush.msra.mxu0 %v534
    %850 = vmatpush.msra.mxu0 %v531
    %851 = vmatpush.msra.mxu0 %v528
    %852 = vmatpush.msra.mxu0 %v525
    %853 = vmatmul.f32.gmra.mxu0 %v793
    %v854 = vpop.f32.mrf.mxu0
    %v855 = vadd.f32 0.0, %v854
    %856 = vdwg.mxu0
    %v857 = vadd.f32 %v794, %v815
    %v858 = vxor.u32 %v857, 2147483648
    %v859 = vmul.f32 %v858, 1.442695
    %v860 = vpow.pop %v859
    %v861 = vadd.f32 %v860, 1.0
    %v862 = vrcp.pop %v861
    %v863 = vmul.f32 %v861, %v862
    %v864 = vsub.f32 1.0, %v863
    %v865 = vmul.f32 %v862, %v864
    %v866 = vadd.f32 %v862, %v865
    %vm867 = vweird.f32 %v861
    %vm868 = vweird.f32 %v862
    %vm869 = vmor %vm867, %vm868
    %v870 = vsel %vm869, %v862, %v866
    %v871 = vand.u32 2147483647, %v861
    %vm872 = vcmp.eq.f32.partialorder %v871, 8.507059e+37
    %v873 = vand.u32 %v861, 2147483648
    %v874 = vor.u32 1.1754944e-38, %v873
    %v875 = vsel %vm872, %v874, %v870
    %v876 = vmul.f32 1.0, %v875
    %v877 = vadd.f32 %v795, %v835
    %v878 = vxor.u32 %v877, 2147483648
    %v879 = vmul.f32 %v878, 1.442695
    %v880 = vpow.pop %v879
    %v881 = vadd.f32 %v880, 1.0
    %v882 = vrcp.pop %v881
    %v883 = vmul.f32 %v881, %v882
    %v884 = vsub.f32 1.0, %v883
    %v885 = vmul.f32 %v882, %v884
    %v886 = vadd.f32 %v882, %v885
    %vm887 = vweird.f32 %v881
    %vm888 = vweird.f32 %v882
    %vm889 = vmor %vm887, %vm888
    %v890 = vsel %vm889, %v882, %v886
    %v891 = vand.u32 2147483647, %v881
    %vm892 = vcmp.eq.f32.partialorder %v891, 8.507059e+37
    %v893 = vand.u32 %v881, 2147483648
    %v894 = vor.u32 1.1754944e-38, %v893
    %v895 = vsel %vm892, %v894, %v890
    %v896 = vmul.f32 1.0, %v895
    %v897 = vadd.f32 %v855, %v571
    %v898 = vmul.f32 %v876, %v897
    %v899 = vadd.f32 %v796, %v898
    %v900 = vtanh.pop %v899
    %v901 = vsub.f32 1.0, %v896
    %v902 = vmul.f32 %v901, %v900
    %v903 = vmul.f32 %v896, %v793
    %v904 = vadd.f32 %v902, %v903
    %v905 = vld [vmem:[#allocation2 + $0x90] sm:$0xff]
    %v906 = vld [vmem:[#allocation2 + $0x98] sm:$0xff]
    %v907 = vld [vmem:[#allocation2 + $0xa0] sm:$0xff]
    %908 = vmatpush.msra.mxu0 %v568
    %909 = vmatpush.msra.mxu0 %v565
    %910 = vmatpush.msra.mxu0 %v562
    %911 = vmatpush.msra.mxu0 %v559
    %912 = vmatpush.msra.mxu0 %v556
    %913 = vmatpush.msra.mxu0 %v553
    %914 = vmatpush.msra.mxu0 %v550
    %915 = vmatpush.msra.mxu0 %v547
    %916 = vmatpush.msra.mxu0 %v544
    %917 = vmatpush.msra.mxu0 %v541
    %918 = vmatpush.msra.mxu0 %v538
    %919 = vmatpush.msra.mxu0 %v535
    %920 = vmatpush.msra.mxu0 %v532
    %921 = vmatpush.msra.mxu0 %v529
    %922 = vmatpush.msra.mxu0 %v526
    %923 = vmatpush.msra.mxu0 %v523
    %924 = vmatmul.f32.gmra.mxu0 %v904
    %v925 = vpop.f32.mrf.mxu0
    %v926 = vadd.f32 0.0, %v925
    %927 = vdwg.mxu0
    %928 = vmatpush.msra.mxu0 %v569
    %929 = vmatpush.msra.mxu0 %v566
    %930 = vmatpush.msra.mxu0 %v563
    %931 = vmatpush.msra.mxu0 %v560
    %932 = vmatpush.msra.mxu0 %v557
    %933 = vmatpush.msra.mxu0 %v554
    %934 = vmatpush.msra.mxu0 %v551
    %935 = vmatpush.msra.mxu0 %v548
    %936 = vmatpush.msra.mxu0 %v545
    %937 = vmatpush.msra.mxu0 %v542
    %938 = vmatpush.msra.mxu0 %v539
    %939 = vmatpush.msra.mxu0 %v536
    %940 = vmatpush.msra.mxu0 %v533
    %941 = vmatpush.msra.mxu0 %v530
    %942 = vmatpush.msra.mxu0 %v527
    %943 = vmatpush.msra.mxu0 %v524
    %944 = vmatmul.f32.gmra.mxu0 %v904
    %v945 = vpop.f32.mrf.mxu0
    %v946 = vadd.f32 0.0, %v945
    %947 = vdwg.mxu0
    %948 = vmatpush.msra.mxu0 %v570
    %949 = vmatpush.msra.mxu0 %v567
    %950 = vmatpush.msra.mxu0 %v564
    %951 = vmatpush.msra.mxu0 %v561
    %952 = vmatpush.msra.mxu0 %v558
    %953 = vmatpush.msra.mxu0 %v555
    %954 = vmatpush.msra.mxu0 %v552
    %955 = vmatpush.msra.mxu0 %v549
    %956 = vmatpush.msra.mxu0 %v546
    %957 = vmatpush.msra.mxu0 %v543
    %958 = vmatpush.msra.mxu0 %v540
    %959 = vmatpush.msra.mxu0 %v537
    %960 = vmatpush.msra.mxu0 %v534
    %961 = vmatpush.msra.mxu0 %v531
    %962 = vmatpush.msra.mxu0 %v528
    %963 = vmatpush.msra.mxu0 %v525
    %964 = vmatmul.f32.gmra.mxu0 %v904
    %v965 = vpop.f32.mrf.mxu0
    %v966 = vadd.f32 0.0, %v965
    %967 = vdwg.mxu0
    %v968 = vadd.f32 %v905, %v926
    %v969 = vxor.u32 %v968, 2147483648
    %v970 = vmul.f32 %v969, 1.442695
    %v971 = vpow.pop %v970
    %v972 = vadd.f32 %v971, 1.0
    %v973 = vrcp.pop %v972
    %v974 = vmul.f32 %v972, %v973
    %v975 = vsub.f32 1.0, %v974
    %v976 = vmul.f32 %v973, %v975
    %v977 = vadd.f32 %v973, %v976
    %vm978 = vweird.f32 %v972
    %vm979 = vweird.f32 %v973
    %vm980 = vmor %vm978, %vm979
    %v981 = vsel %vm980, %v973, %v977
    %v982 = vand.u32 2147483647, %v972
    %vm983 = vcmp.eq.f32.partialorder %v982, 8.507059e+37
    %v984 = vand.u32 %v972, 2147483648
    %v985 = vor.u32 1.1754944e-38, %v984
    %v986 = vsel %vm983, %v985, %v981
    %v987 = vmul.f32 1.0, %v986
    %v988 = vadd.f32 %v906, %v946
    %v989 = vxor.u32 %v988, 2147483648
    %v990 = vmul.f32 %v989, 1.442695
    %v991 = vpow.pop %v990
    %v992 = vadd.f32 %v991, 1.0
    %v993 = vrcp.pop %v992
    %v994 = vmul.f32 %v992, %v993
    %v995 = vsub.f32 1.0, %v994
    %v996 = vmul.f32 %v993, %v995
    %v997 = vadd.f32 %v993, %v996
    %vm998 = vweird.f32 %v992
    %vm999 = vweird.f32 %v993
    %vm1000 = vmor %vm998, %vm999
    %v1001 = vsel %vm1000, %v993, %v997
    %v1002 = vand.u32 2147483647, %v992
    %vm1003 = vcmp.eq.f32.partialorder %v1002, 8.507059e+37
    %v1004 = vand.u32 %v992, 2147483648
    %v1005 = vor.u32 1.1754944e-38, %v1004
    %v1006 = vsel %vm1003, %v1005, %v1001
    %v1007 = vmul.f32 1.0, %v1006
    %v1008 = vadd.f32 %v966, %v571
    %v1009 = vmul.f32 %v987, %v1008
    %v1010 = vadd.f32 %v907, %v1009
    %v1011 = vtanh.pop %v1010
    %v1012 = vsub.f32 1.0, %v1007
    %v1013 = vmul.f32 %v1012, %v1011
    %v1014 = vmul.f32 %v1007, %v904
    %v1015 = vadd.f32 %v1013, %v1014
    %v1016 = vld [vmem:[#allocation2 + $0xc0] sm:$0xff]
    %v1017 = vld [vmem:[#allocation2 + $0xc8] sm:$0xff]
    %v1018 = vld [vmem:[#allocation2 + $0xd0] sm:$0xff]
    %1019 = vmatpush.msra.mxu0 %v568
    %1020 = vmatpush.msra.mxu0 %v565
    %1021 = vmatpush.msra.mxu0 %v562
    %1022 = vmatpush.msra.mxu0 %v559
    %1023 = vmatpush.msra.mxu0 %v556
    %1024 = vmatpush.msra.mxu0 %v553
    %1025 = vmatpush.msra.mxu0 %v550
    %1026 = vmatpush.msra.mxu0 %v547
    %1027 = vmatpush.msra.mxu0 %v544
    %1028 = vmatpush.msra.mxu0 %v541
    %1029 = vmatpush.msra.mxu0 %v538
    %1030 = vmatpush.msra.mxu0 %v535
    %1031 = vmatpush.msra.mxu0 %v532
    %1032 = vmatpush.msra.mxu0 %v529
    %1033 = vmatpush.msra.mxu0 %v526
    %1034 = vmatpush.msra.mxu0 %v523
    %1035 = vmatmul.f32.gmra.mxu0 %v1015
    %v1036 = vpop.f32.mrf.mxu0
    %v1037 = vadd.f32 0.0, %v1036
    %1038 = vdwg.mxu0
    %1039 = vmatpush.msra.mxu0 %v569
    %1040 = vmatpush.msra.mxu0 %v566
    %1041 = vmatpush.msra.mxu0 %v563
    %1042 = vmatpush.msra.mxu0 %v560
    %1043 = vmatpush.msra.mxu0 %v557
    %1044 = vmatpush.msra.mxu0 %v554
    %1045 = vmatpush.msra.mxu0 %v551
    %1046 = vmatpush.msra.mxu0 %v548
    %1047 = vmatpush.msra.mxu0 %v545
    %1048 = vmatpush.msra.mxu0 %v542
    %1049 = vmatpush.msra.mxu0 %v539
    %1050 = vmatpush.msra.mxu0 %v536
    %1051 = vmatpush.msra.mxu0 %v533
    %1052 = vmatpush.msra.mxu0 %v530
    %1053 = vmatpush.msra.mxu0 %v527
    %1054 = vmatpush.msra.mxu0 %v524
    %1055 = vmatmul.f32.gmra.mxu0 %v1015
    %v1056 = vpop.f32.mrf.mxu0
    %v1057 = vadd.f32 0.0, %v1056
    %1058 = vdwg.mxu0
    %1059 = vmatpush.msra.mxu0 %v570
    %1060 = vmatpush.msra.mxu0 %v567
    %1061 = vmatpush.msra.mxu0 %v564
    %1062 = vmatpush.msra.mxu0 %v561
    %1063 = vmatpush.msra.mxu0 %v558
    %1064 = vmatpush.msra.mxu0 %v555
    %1065 = vmatpush.msra.mxu0 %v552
    %1066 = vmatpush.msra.mxu0 %v549
    %1067 = vmatpush.msra.mxu0 %v546
    %1068 = vmatpush.msra.mxu0 %v543
    %1069 = vmatpush.msra.mxu0 %v540
    %1070 = vmatpush.msra.mxu0 %v537
    %1071 = vmatpush.msra.mxu0 %v534
    %1072 = vmatpush.msra.mxu0 %v531
    %1073 = vmatpush.msra.mxu0 %v528
    %1074 = vmatpush.msra.mxu0 %v525
    %1075 = vmatmul.f32.gmra.mxu0 %v1015
    %v1076 = vpop.f32.mrf.mxu0
    %v1077 = vadd.f32 0.0, %v1076
    %1078 = vdwg.mxu0
    %v1079 = vadd.f32 %v1016, %v1037
    %v1080 = vxor.u32 %v1079, 2147483648
    %v1081 = vmul.f32 %v1080, 1.442695
    %v1082 = vpow.pop %v1081
    %v1083 = vadd.f32 %v1082, 1.0
    %v1084 = vrcp.pop %v1083
    %v1085 = vmul.f32 %v1083, %v1084
    %v1086 = vsub.f32 1.0, %v1085
    %v1087 = vmul.f32 %v1084, %v1086
    %v1088 = vadd.f32 %v1084, %v1087
    %vm1089 = vweird.f32 %v1083
    %vm1090 = vweird.f32 %v1084
    %vm1091 = vmor %vm1089, %vm1090
    %v1092 = vsel %vm1091, %v1084, %v1088
    %v1093 = vand.u32 2147483647, %v1083
    %vm1094 = vcmp.eq.f32.partialorder %v1093, 8.507059e+37
    %v1095 = vand.u32 %v1083, 2147483648
    %v1096 = vor.u32 1.1754944e-38, %v1095
    %v1097 = vsel %vm1094, %v1096, %v1092
    %v1098 = vmul.f32 1.0, %v1097
    %v1099 = vadd.f32 %v1017, %v1057
    %v1100 = vxor.u32 %v1099, 2147483648
    %v1101 = vmul.f32 %v1100, 1.442695
    %v1102 = vpow.pop %v1101
    %v1103 = vadd.f32 %v1102, 1.0
    %v1104 = vrcp.pop %v1103
    %v1105 = vmul.f32 %v1103, %v1104
    %v1106 = vsub.f32 1.0, %v1105
    %v1107 = vmul.f32 %v1104, %v1106
    %v1108 = vadd.f32 %v1104, %v1107
    %vm1109 = vweird.f32 %v1103
    %vm1110 = vweird.f32 %v1104
    %vm1111 = vmor %vm1109, %vm1110
    %v1112 = vsel %vm1111, %v1104, %v1108
    %v1113 = vand.u32 2147483647, %v1103
    %vm1114 = vcmp.eq.f32.partialorder %v1113, 8.507059e+37
    %v1115 = vand.u32 %v1103, 2147483648
    %v1116 = vor.u32 1.1754944e-38, %v1115
    %v1117 = vsel %vm1114, %v1116, %v1112
    %v1118 = vmul.f32 1.0, %v1117
    %v1119 = vadd.f32 %v1077, %v571
    %v1120 = vmul.f32 %v1098, %v1119
    %v1121 = vadd.f32 %v1018, %v1120
    %v1122 = vtanh.pop %v1121
    %v1123 = vsub.f32 1.0, %v1118
    %v1124 = vmul.f32 %v1123, %v1122
    %v1125 = vmul.f32 %v1118, %v1015
    %v1126 = vadd.f32 %v1124, %v1125
    %v1127 = vld [vmem:[#allocation2 + $0xf0] sm:$0xff]
    %v1128 = vld [vmem:[#allocation2 + $0xf8] sm:$0xff]
    %v1129 = vld [vmem:[#allocation2 + $0x100] sm:$0xff]
    %1130 = vmatpush.msra.mxu0 %v568
    %1131 = vmatpush.msra.mxu0 %v565
    %1132 = vmatpush.msra.mxu0 %v562
    %1133 = vmatpush.msra.mxu0 %v559
    %1134 = vmatpush.msra.mxu0 %v556
    %1135 = vmatpush.msra.mxu0 %v553
    %1136 = vmatpush.msra.mxu0 %v550
    %1137 = vmatpush.msra.mxu0 %v547
    %1138 = vmatpush.msra.mxu0 %v544
    %1139 = vmatpush.msra.mxu0 %v541
    %1140 = vmatpush.msra.mxu0 %v538
    %1141 = vmatpush.msra.mxu0 %v535
    %1142 = vmatpush.msra.mxu0 %v532
    %1143 = vmatpush.msra.mxu0 %v529
    %1144 = vmatpush.msra.mxu0 %v526
    %1145 = vmatpush.msra.mxu0 %v523
    %1146 = vmatmul.f32.gmra.mxu0 %v1126
    %v1147 = vpop.f32.mrf.mxu0
    %v1148 = vadd.f32 0.0, %v1147
    %1149 = vdwg.mxu0
    %1150 = vmatpush.msra.mxu0 %v569
    %1151 = vmatpush.msra.mxu0 %v566
    %1152 = vmatpush.msra.mxu0 %v563
    %1153 = vmatpush.msra.mxu0 %v560
    %1154 = vmatpush.msra.mxu0 %v557
    %1155 = vmatpush.msra.mxu0 %v554
    %1156 = vmatpush.msra.mxu0 %v551
    %1157 = vmatpush.msra.mxu0 %v548
    %1158 = vmatpush.msra.mxu0 %v545
    %1159 = vmatpush.msra.mxu0 %v542
    %1160 = vmatpush.msra.mxu0 %v539
    %1161 = vmatpush.msra.mxu0 %v536
    %1162 = vmatpush.msra.mxu0 %v533
    %1163 = vmatpush.msra.mxu0 %v530
    %1164 = vmatpush.msra.mxu0 %v527
    %1165 = vmatpush.msra.mxu0 %v524
    %1166 = vmatmul.f32.gmra.mxu0 %v1126
    %v1167 = vpop.f32.mrf.mxu0
    %v1168 = vadd.f32 0.0, %v1167
    %1169 = vdwg.mxu0
    %1170 = vmatpush.msra.mxu0 %v570
    %1171 = vmatpush.msra.mxu0 %v567
    %1172 = vmatpush.msra.mxu0 %v564
    %1173 = vmatpush.msra.mxu0 %v561
    %1174 = vmatpush.msra.mxu0 %v558
    %1175 = vmatpush.msra.mxu0 %v555
    %1176 = vmatpush.msra.mxu0 %v552
    %1177 = vmatpush.msra.mxu0 %v549
    %1178 = vmatpush.msra.mxu0 %v546
    %1179 = vmatpush.msra.mxu0 %v543
    %1180 = vmatpush.msra.mxu0 %v540
    %1181 = vmatpush.msra.mxu0 %v537
    %1182 = vmatpush.msra.mxu0 %v534
    %1183 = vmatpush.msra.mxu0 %v531
    %1184 = vmatpush.msra.mxu0 %v528
    %1185 = vmatpush.msra.mxu0 %v525
    %1186 = vmatmul.f32.gmra.mxu0 %v1126
    %v1187 = vpop.f32.mrf.mxu0
    %v1188 = vadd.f32 0.0, %v1187
    %1189 = vdwg.mxu0
    %v1190 = vadd.f32 %v1127, %v1148
    %v1191 = vxor.u32 %v1190, 2147483648
    %v1192 = vmul.f32 %v1191, 1.442695
    %v1193 = vpow.pop %v1192
    %v1194 = vadd.f32 %v1193, 1.0
    %v1195 = vrcp.pop %v1194
    %v1196 = vmul.f32 %v1194, %v1195
    %v1197 = vsub.f32 1.0, %v1196
    %v1198 = vmul.f32 %v1195, %v1197
    %v1199 = vadd.f32 %v1195, %v1198
    %vm1200 = vweird.f32 %v1194
    %vm1201 = vweird.f32 %v1195
    %vm1202 = vmor %vm1200, %vm1201
    %v1203 = vsel %vm1202, %v1195, %v1199
    %v1204 = vand.u32 2147483647, %v1194
    %vm1205 = vcmp.eq.f32.partialorder %v1204, 8.507059e+37
    %v1206 = vand.u32 %v1194, 2147483648
    %v1207 = vor.u32 1.1754944e-38, %v1206
    %v1208 = vsel %vm1205, %v1207, %v1203
    %v1209 = vmul.f32 1.0, %v1208
    %v1210 = vadd.f32 %v1128, %v1168
    %v1211 = vxor.u32 %v1210, 2147483648
    %v1212 = vmul.f32 %v1211, 1.442695
    %v1213 = vpow.pop %v1212
    %v1214 = vadd.f32 %v1213, 1.0
    %v1215 = vrcp.pop %v1214
    %v1216 = vmul.f32 %v1214, %v1215
    %v1217 = vsub.f32 1.0, %v1216
    %v1218 = vmul.f32 %v1215, %v1217
    %v1219 = vadd.f32 %v1215, %v1218
    %vm1220 = vweird.f32 %v1214
    %vm1221 = vweird.f32 %v1215
    %vm1222 = vmor %vm1220, %vm1221
    %v1223 = vsel %vm1222, %v1215, %v1219
    %v1224 = vand.u32 2147483647, %v1214
    %vm1225 = vcmp.eq.f32.partialorder %v1224, 8.507059e+37
    %v1226 = vand.u32 %v1214, 2147483648
    %v1227 = vor.u32 1.1754944e-38, %v1226
    %v1228 = vsel %vm1225, %v1227, %v1223
    %v1229 = vmul.f32 1.0, %v1228
    %v1230 = vadd.f32 %v1188, %v571
    %v1231 = vmul.f32 %v1209, %v1230
    %v1232 = vadd.f32 %v1129, %v1231
    %v1233 = vtanh.pop %v1232
    %v1234 = vsub.f32 1.0, %v1229
    %v1235 = vmul.f32 %v1234, %v1233
    %v1236 = vmul.f32 %v1229, %v1126
    %v1237 = vadd.f32 %v1235, %v1236
    %v1238 = vld [vmem:[#allocation2 + $0x120] sm:$0xff]
    %v1239 = vld [vmem:[#allocation2 + $0x128] sm:$0xff]
    %v1240 = vld [vmem:[#allocation2 + $0x130] sm:$0xff]
    %1241 = vmatpush.msra.mxu0 %v568
    %1242 = vmatpush.msra.mxu0 %v565
    %1243 = vmatpush.msra.mxu0 %v562
    %1244 = vmatpush.msra.mxu0 %v559
    %1245 = vmatpush.msra.mxu0 %v556
    %1246 = vmatpush.msra.mxu0 %v553
    %1247 = vmatpush.msra.mxu0 %v550
    %1248 = vmatpush.msra.mxu0 %v547
    %1249 = vmatpush.msra.mxu0 %v544
    %1250 = vmatpush.msra.mxu0 %v541
    %1251 = vmatpush.msra.mxu0 %v538
    %1252 = vmatpush.msra.mxu0 %v535
    %1253 = vmatpush.msra.mxu0 %v532
    %1254 = vmatpush.msra.mxu0 %v529
    %1255 = vmatpush.msra.mxu0 %v526
    %1256 = vmatpush.msra.mxu0 %v523
    %1257 = vmatmul.f32.gmra.mxu0 %v1237
    %v1258 = vpop.f32.mrf.mxu0
    %v1259 = vadd.f32 0.0, %v1258
    %1260 = vdwg.mxu0
    %1261 = vmatpush.msra.mxu0 %v569
    %1262 = vmatpush.msra.mxu0 %v566
    %1263 = vmatpush.msra.mxu0 %v563
    %1264 = vmatpush.msra.mxu0 %v560
    %1265 = vmatpush.msra.mxu0 %v557
    %1266 = vmatpush.msra.mxu0 %v554
    %1267 = vmatpush.msra.mxu0 %v551
    %1268 = vmatpush.msra.mxu0 %v548
    %1269 = vmatpush.msra.mxu0 %v545
    %1270 = vmatpush.msra.mxu0 %v542
    %1271 = vmatpush.msra.mxu0 %v539
    %1272 = vmatpush.msra.mxu0 %v536
    %1273 = vmatpush.msra.mxu0 %v533
    %1274 = vmatpush.msra.mxu0 %v530
    %1275 = vmatpush.msra.mxu0 %v527
    %1276 = vmatpush.msra.mxu0 %v524
    %1277 = vmatmul.f32.gmra.mxu0 %v1237
    %v1278 = vpop.f32.mrf.mxu0
    %v1279 = vadd.f32 0.0, %v1278
    %1280 = vdwg.mxu0
    %1281 = vmatpush.msra.mxu0 %v570
    %1282 = vmatpush.msra.mxu0 %v567
    %1283 = vmatpush.msra.mxu0 %v564
    %1284 = vmatpush.msra.mxu0 %v561
    %1285 = vmatpush.msra.mxu0 %v558
    %1286 = vmatpush.msra.mxu0 %v555
    %1287 = vmatpush.msra.mxu0 %v552
    %1288 = vmatpush.msra.mxu0 %v549
    %1289 = vmatpush.msra.mxu0 %v546
    %1290 = vmatpush.msra.mxu0 %v543
    %1291 = vmatpush.msra.mxu0 %v540
    %1292 = vmatpush.msra.mxu0 %v537
    %1293 = vmatpush.msra.mxu0 %v534
    %1294 = vmatpush.msra.mxu0 %v531
    %1295 = vmatpush.msra.mxu0 %v528
    %1296 = vmatpush.msra.mxu0 %v525
    %1297 = vmatmul.f32.gmra.mxu0 %v1237
    %v1298 = vpop.f32.mrf.mxu0
    %v1299 = vadd.f32 0.0, %v1298
    %1300 = vdwg.mxu0
    %v1301 = vadd.f32 %v1238, %v1259
    %v1302 = vxor.u32 %v1301, 2147483648
    %v1303 = vmul.f32 %v1302, 1.442695
    %v1304 = vpow.pop %v1303
    %v1305 = vadd.f32 %v1304, 1.0
    %v1306 = vrcp.pop %v1305
    %v1307 = vmul.f32 %v1305, %v1306
    %v1308 = vsub.f32 1.0, %v1307
    %v1309 = vmul.f32 %v1306, %v1308
    %v1310 = vadd.f32 %v1306, %v1309
    %vm1311 = vweird.f32 %v1305
    %vm1312 = vweird.f32 %v1306
    %vm1313 = vmor %vm1311, %vm1312
    %v1314 = vsel %vm1313, %v1306, %v1310
    %v1315 = vand.u32 2147483647, %v1305
    %vm1316 = vcmp.eq.f32.partialorder %v1315, 8.507059e+37
    %v1317 = vand.u32 %v1305, 2147483648
    %v1318 = vor.u32 1.1754944e-38, %v1317
    %v1319 = vsel %vm1316, %v1318, %v1314
    %v1320 = vmul.f32 1.0, %v1319
    %v1321 = vadd.f32 %v1239, %v1279
    %v1322 = vxor.u32 %v1321, 2147483648
    %v1323 = vmul.f32 %v1322, 1.442695
    %v1324 = vpow.pop %v1323
    %v1325 = vadd.f32 %v1324, 1.0
    %v1326 = vrcp.pop %v1325
    %v1327 = vmul.f32 %v1325, %v1326
    %v1328 = vsub.f32 1.0, %v1327
    %v1329 = vmul.f32 %v1326, %v1328
    %v1330 = vadd.f32 %v1326, %v1329
    %vm1331 = vweird.f32 %v1325
    %vm1332 = vweird.f32 %v1326
    %vm1333 = vmor %vm1331, %vm1332
    %v1334 = vsel %vm1333, %v1326, %v1330
    %v1335 = vand.u32 2147483647, %v1325
    %vm1336 = vcmp.eq.f32.partialorder %v1335, 8.507059e+37
    %v1337 = vand.u32 %v1325, 2147483648
    %v1338 = vor.u32 1.1754944e-38, %v1337
    %v1339 = vsel %vm1336, %v1338, %v1334
    %v1340 = vmul.f32 1.0, %v1339
    %v1341 = vadd.f32 %v1299, %v571
    %v1342 = vmul.f32 %v1320, %v1341
    %v1343 = vadd.f32 %v1240, %v1342
    %v1344 = vtanh.pop %v1343
    %v1345 = vsub.f32 1.0, %v1340
    %v1346 = vmul.f32 %v1345, %v1344
    %v1347 = vmul.f32 %v1340, %v1237
    %v1348 = vadd.f32 %v1346, %v1347
    %v1349 = vld [vmem:[#allocation2 + $0x150] sm:$0xff]
    %v1350 = vld [vmem:[#allocation2 + $0x158] sm:$0xff]
    %v1351 = vld [vmem:[#allocation2 + $0x160] sm:$0xff]
    %1352 = vmatpush.msra.mxu0 %v568
    %1353 = vmatpush.msra.mxu0 %v565
    %1354 = vmatpush.msra.mxu0 %v562
    %1355 = vmatpush.msra.mxu0 %v559
    %1356 = vmatpush.msra.mxu0 %v556
    %1357 = vmatpush.msra.mxu0 %v553
    %1358 = vmatpush.msra.mxu0 %v550
    %1359 = vmatpush.msra.mxu0 %v547
    %1360 = vmatpush.msra.mxu0 %v544
    %1361 = vmatpush.msra.mxu0 %v541
    %1362 = vmatpush.msra.mxu0 %v538
    %1363 = vmatpush.msra.mxu0 %v535
    %1364 = vmatpush.msra.mxu0 %v532
    %1365 = vmatpush.msra.mxu0 %v529
    %1366 = vmatpush.msra.mxu0 %v526
    %1367 = vmatpush.msra.mxu0 %v523
    %1368 = vmatmul.f32.gmra.mxu0 %v1348
    %v1369 = vpop.f32.mrf.mxu0
    %v1370 = vadd.f32 0.0, %v1369
    %1371 = vdwg.mxu0
    %1372 = vmatpush.msra.mxu0 %v569
    %1373 = vmatpush.msra.mxu0 %v566
    %1374 = vmatpush.msra.mxu0 %v563
    %1375 = vmatpush.msra.mxu0 %v560
    %1376 = vmatpush.msra.mxu0 %v557
    %1377 = vmatpush.msra.mxu0 %v554
    %1378 = vmatpush.msra.mxu0 %v551
    %1379 = vmatpush.msra.mxu0 %v548
    %1380 = vmatpush.msra.mxu0 %v545
    %1381 = vmatpush.msra.mxu0 %v542
    %1382 = vmatpush.msra.mxu0 %v539
    %1383 = vmatpush.msra.mxu0 %v536
    %1384 = vmatpush.msra.mxu0 %v533
    %1385 = vmatpush.msra.mxu0 %v530
    %1386 = vmatpush.msra.mxu0 %v527
    %1387 = vmatpush.msra.mxu0 %v524
    %1388 = vmatmul.f32.gmra.mxu0 %v1348
    %v1389 = vpop.f32.mrf.mxu0
    %v1390 = vadd.f32 0.0, %v1389
    %1391 = vdwg.mxu0
    %1392 = vmatpush.msra.mxu0 %v570
    %1393 = vmatpush.msra.mxu0 %v567
    %1394 = vmatpush.msra.mxu0 %v564
    %1395 = vmatpush.msra.mxu0 %v561
    %1396 = vmatpush.msra.mxu0 %v558
    %1397 = vmatpush.msra.mxu0 %v555
    %1398 = vmatpush.msra.mxu0 %v552
    %1399 = vmatpush.msra.mxu0 %v549
    %1400 = vmatpush.msra.mxu0 %v546
    %1401 = vmatpush.msra.mxu0 %v543
    %1402 = vmatpush.msra.mxu0 %v540
    %1403 = vmatpush.msra.mxu0 %v537
    %1404 = vmatpush.msra.mxu0 %v534
    %1405 = vmatpush.msra.mxu0 %v531
    %1406 = vmatpush.msra.mxu0 %v528
    %1407 = vmatpush.msra.mxu0 %v525
    %1408 = vmatmul.f32.gmra.mxu0 %v1348
    %v1409 = vpop.f32.mrf.mxu0
    %v1410 = vadd.f32 0.0, %v1409
    %1411 = vdwg.mxu0
    %v1412 = vadd.f32 %v1349, %v1370
    %v1413 = vxor.u32 %v1412, 2147483648
    %v1414 = vmul.f32 %v1413, 1.442695
    %v1415 = vpow.pop %v1414
    %v1416 = vadd.f32 %v1415, 1.0
    %v1417 = vrcp.pop %v1416
    %v1418 = vmul.f32 %v1416, %v1417
    %v1419 = vsub.f32 1.0, %v1418
    %v1420 = vmul.f32 %v1417, %v1419
    %v1421 = vadd.f32 %v1417, %v1420
    %vm1422 = vweird.f32 %v1416
    %vm1423 = vweird.f32 %v1417
    %vm1424 = vmor %vm1422, %vm1423
    %v1425 = vsel %vm1424, %v1417, %v1421
    %v1426 = vand.u32 2147483647, %v1416
    %vm1427 = vcmp.eq.f32.partialorder %v1426, 8.507059e+37
    %v1428 = vand.u32 %v1416, 2147483648
    %v1429 = vor.u32 1.1754944e-38, %v1428
    %v1430 = vsel %vm1427, %v1429, %v1425
    %v1431 = vmul.f32 1.0, %v1430
    %v1432 = vadd.f32 %v1350, %v1390
    %v1433 = vxor.u32 %v1432, 2147483648
    %v1434 = vmul.f32 %v1433, 1.442695
    %v1435 = vpow.pop %v1434
    %v1436 = vadd.f32 %v1435, 1.0
    %v1437 = vrcp.pop %v1436
    %v1438 = vmul.f32 %v1436, %v1437
    %v1439 = vsub.f32 1.0, %v1438
    %v1440 = vmul.f32 %v1437, %v1439
    %v1441 = vadd.f32 %v1437, %v1440
    %vm1442 = vweird.f32 %v1436
    %vm1443 = vweird.f32 %v1437
    %vm1444 = vmor %vm1442, %vm1443
    %v1445 = vsel %vm1444, %v1437, %v1441
    %v1446 = vand.u32 2147483647, %v1436
    %vm1447 = vcmp.eq.f32.partialorder %v1446, 8.507059e+37
    %v1448 = vand.u32 %v1436, 2147483648
    %v1449 = vor.u32 1.1754944e-38, %v1448
    %v1450 = vsel %vm1447, %v1449, %v1445
    %v1451 = vmul.f32 1.0, %v1450
    %v1452 = vadd.f32 %v1410, %v571
    %v1453 = vmul.f32 %v1431, %v1452
    %v1454 = vadd.f32 %v1351, %v1453
    %v1455 = vtanh.pop %v1454
    %v1456 = vsub.f32 1.0, %v1451
    %v1457 = vmul.f32 %v1456, %v1455
    %v1458 = vmul.f32 %v1451, %v1348
    %v1459 = vadd.f32 %v1457, %v1458
    %v1460 = vld [vmem:[#allocation4 + $0x488] sm:$0xff]
    %v1461 = vld [vmem:[#allocation4 + $0x4b8] sm:$0xff]
    %v1462 = vld [vmem:[#allocation4 + $0x4e8] sm:$0xff]
    %v1463 = vld [vmem:[#allocation4 + $0x518] sm:$0xff]
    %v1464 = vld [vmem:[#allocation4 + $0x548] sm:$0xff]
    %v1465 = vld [vmem:[#allocation4 + $0x578] sm:$0xff]
    %v1466 = vld [vmem:[#allocation4 + $0x5a8] sm:$0xff]
    %v1467 = vld [vmem:[#allocation4 + $0x5d8] sm:$0xff]
    %v1468 = vld [vmem:[#allocation4 + $0x608] sm:$0xff]
    %v1469 = vld [vmem:[#allocation4 + $0x638] sm:$0xff]
    %v1470 = vld [vmem:[#allocation4 + $0x668] sm:$0xff]
    %v1471 = vld [vmem:[#allocation4 + $0x698] sm:$0xff]
    %v1472 = vld [vmem:[#allocation4 + $0x6c8] sm:$0xff]
    %v1473 = vld [vmem:[#allocation4 + $0x6f8] sm:$0xff]
    %v1474 = vld [vmem:[#allocation4 + $0x728] sm:$0xff]
    %v1475 = vld [vmem:[#allocation4 + $0x758] sm:$0xff]
    %v1476 = vld [vmem:[#allocation4 + $0x7d0] ss:$0 sm:$0xff]
    %1477 = vmatpush.msra.mxu0 %v1475
    %1478 = vmatpush.msra.mxu0 %v1474
    %1479 = vmatpush.msra.mxu0 %v1473
    %1480 = vmatpush.msra.mxu0 %v1472
    %1481 = vmatpush.msra.mxu0 %v1471
    %1482 = vmatpush.msra.mxu0 %v1470
    %1483 = vmatpush.msra.mxu0 %v1469
    %1484 = vmatpush.msra.mxu0 %v1468
    %1485 = vmatpush.msra.mxu0 %v1467
    %1486 = vmatpush.msra.mxu0 %v1466
    %1487 = vmatpush.msra.mxu0 %v1465
    %1488 = vmatpush.msra.mxu0 %v1464
    %1489 = vmatpush.msra.mxu0 %v1463
    %1490 = vmatpush.msra.mxu0 %v1462
    %1491 = vmatpush.msra.mxu0 %v1461
    %1492 = vmatpush.msra.mxu0 %v1460
    %1493 = vmatmul.f32.gmra.mxu0 %v1459
    %v1494 = vpop.f32.mrf.mxu0
    %v1495 = vadd.f32 %v1476, %v1494
    %1496 = vdwg.mxu0
    %vm1497 = vcmp.gt.f32.partialorder %v1495, 20.0
    %v1498 = vmin.f32 %v1495, 20.0
    %v1499 = vmul.f32 %v1498, 1.442695
    %v1500 = vpow.pop %v1499
    %v1501 = vadd.f32 %v1500, 1.0
    %v1502 = vlog2.pop %v1501
    %v1503 = vmul.f32 %v1502, 0.6931472
    %v1504 = vmul.f32 -0.5, %v1500
    %v1505 = vadd.f32 %v1504, 1.0
    %v1506 = vmul.f32 %v1505, %v1500
    %v1507 = vand.u32 2147483647, %v1500
    %vm1508 = vcmp.lt.f32.partialorder %v1507, 0.0004427343
    %v1509 = vsel %vm1508, %v1506, %v1503
    %v1510 = vsel %vm1497, %v1495, %v1509
    %v1511 = vld [vmem:[%s1] sm:$0xff]
    %1513 = vrot.lane.b32.xlu0 %v1511, 8
    %v1514 = vpop.permute.xlu0 %1513
    %v1516 = vmul.f32 %v1510, %v1514
    %1518 = vrot.lane.b32.xlu0 %v1516, 120
    %v1519 = vpop.permute.xlu0 %1518
    %v1521 = vadd.f32 %v1495, %v1519
    %v1522 = vlog2.pop %v1510
    %v1523 = vmul.f32 %v1522, 0.6931472
    %v1524 = vsub.f32 0.0, %v1523
    %v1525 = vmul.f32 %v1510, %v1510
    %v1526 = vmul.f32 %v1495, %v1495
    %1528 = vrot.lane.b32.xlu0 %v1526, 8
    %v1529 = vpop.permute.xlu0 %1528
    %v1531 = vadd.f32 %v1525, %v1529
    %v1532 = vsub.f32 %v1531, 1.0
    %v1533 = vmul.f32 %v1532, 0.5
    %v1534 = vadd.f32 %v1524, %v1533
    %v1535 = vmax.f32 %v1534, 1.0
    %1537 = vrot.lane.b32.xlu0 %v1535, 120
    %v1538 = vpop.permute.xlu0 %1537
    %vm1540 = vcmask 64512
    %v1541 = vsel %vm1540, %v1538, 0.0
    %1542 = vadd.xlane.f32.xlu0 %v1541
    %v1543 = vpop.xlane.xlu0 %1542
    %v1544 = vld [vmem:[#allocation4 + $0x490] sm:$0xff]
    %v1545 = vld [vmem:[#allocation4 + $0x7c0] ss:$0 sm:$0xff]
    %v1547 = vsel %vm1540, %v1521, 0
    %1549 = vmatpush.msra.mxu0 0.0
    %1550 = vmatpush.msra.mxu0 0.0
    %1551 = vmatpush.msra.mxu0 0.0
    %1552 = vmatpush.msra.mxu0 0.0
    %1553 = vmatpush.msra.mxu0 0.0
    %1554 = vmatpush.msra.mxu0 0.0
    %1555 = vmatpush.msra.mxu0 0.0
    %1556 = vmatpush.msra.mxu0 0.0
    %1557 = vmatpush.msra.mxu0 0.0
    %1558 = vmatpush.msra.mxu0 0.0
    %1559 = vmatpush.msra.mxu0 0.0
    %1560 = vmatpush.msra.mxu0 0.0
    %1561 = vmatpush.msra.mxu0 0.0
    %1562 = vmatpush.msra.mxu0 0.0
    %1563 = vmatpush.msra.mxu0 0.0
    %1564 = vmatpush.msra.mxu0 %v1544
    %1565 = vmatmul.f32.gmra.mxu0 %v1547
    %v1566 = vpop.f32.mrf.mxu0
    %v1567 = vadd.f32 %v1545, %v1566
    %1568 = vdwg.mxu0
    %v1569 = vtanh.pop %v1567
    %v1570 = vld [vmem:[#allocation4 + $0x198] sm:$0xff]
    %v1571 = vld [vmem:[#allocation4 + $0x1a0] sm:$0xff]
    %v1572 = vld [vmem:[#allocation4 + $0x1a8] sm:$0xff]
    %v1573 = vld [vmem:[#allocation4 + $0x1c8] sm:$0xff]
    %v1574 = vld [vmem:[#allocation4 + $0x1d0] sm:$0xff]
    %v1575 = vld [vmem:[#allocation4 + $0x1d8] sm:$0xff]
    %v1576 = vld [vmem:[#allocation4 + $0x1f8] sm:$0xff]
    %v1577 = vld [vmem:[#allocation4 + $0x200] sm:$0xff]
    %v1578 = vld [vmem:[#allocation4 + $0x208] sm:$0xff]
    %v1579 = vld [vmem:[#allocation4 + $0x228] sm:$0xff]
    %v1580 = vld [vmem:[#allocation4 + $0x230] sm:$0xff]
    %v1581 = vld [vmem:[#allocation4 + $0x238] sm:$0xff]
    %v1582 = vld [vmem:[#allocation4 + $0x258] sm:$0xff]
    %v1583 = vld [vmem:[#allocation4 + $0x260] sm:$0xff]
    %v1584 = vld [vmem:[#allocation4 + $0x268] sm:$0xff]
    %v1585 = vld [vmem:[#allocation4 + $0x288] sm:$0xff]
    %v1586 = vld [vmem:[#allocation4 + $0x290] sm:$0xff]
    %v1587 = vld [vmem:[#allocation4 + $0x298] sm:$0xff]
    %v1588 = vld [vmem:[#allocation4 + $0x2b8] sm:$0xff]
    %v1589 = vld [vmem:[#allocation4 + $0x2c0] sm:$0xff]
    %v1590 = vld [vmem:[#allocation4 + $0x2c8] sm:$0xff]
    %v1591 = vld [vmem:[#allocation4 + $0x2e8] sm:$0xff]
    %v1592 = vld [vmem:[#allocation4 + $0x2f0] sm:$0xff]
    %v1593 = vld [vmem:[#allocation4 + $0x2f8] sm:$0xff]
    %v1594 = vld [vmem:[#allocation4 + $0x318] sm:$0xff]
    %v1595 = vld [vmem:[#allocation4 + $0x320] sm:$0xff]
    %v1596 = vld [vmem:[#allocation4 + $0x328] sm:$0xff]
    %v1597 = vld [vmem:[#allocation4 + $0x348] sm:$0xff]
    %v1598 = vld [vmem:[#allocation4 + $0x350] sm:$0xff]
    %v1599 = vld [vmem:[#allocation4 + $0x358] sm:$0xff]
    %v1600 = vld [vmem:[#allocation4 + $0x378] sm:$0xff]
    %v1601 = vld [vmem:[#allocation4 + $0x380] sm:$0xff]
    %v1602 = vld [vmem:[#allocation4 + $0x388] sm:$0xff]
    %v1603 = vld [vmem:[#allocation4 + $0x3a8] sm:$0xff]
    %v1604 = vld [vmem:[#allocation4 + $0x3b0] sm:$0xff]
    %v1605 = vld [vmem:[#allocation4 + $0x3b8] sm:$0xff]
    %v1606 = vld [vmem:[#allocation4 + $0x3d8] sm:$0xff]
    %v1607 = vld [vmem:[#allocation4 + $0x3e0] sm:$0xff]
    %v1608 = vld [vmem:[#allocation4 + $0x3e8] sm:$0xff]
    %v1609 = vld [vmem:[#allocation4 + $0x408] sm:$0xff]
    %v1610 = vld [vmem:[#allocation4 + $0x410] sm:$0xff]
    %v1611 = vld [vmem:[#allocation4 + $0x418] sm:$0xff]
    %v1612 = vld [vmem:[#allocation4 + $0x438] sm:$0xff]
    %v1613 = vld [vmem:[#allocation4 + $0x440] sm:$0xff]
    %v1614 = vld [vmem:[#allocation4 + $0x448] sm:$0xff]
    %v1615 = vld [vmem:[#allocation4 + $0x468] sm:$0xff]
    %v1616 = vld [vmem:[#allocation4 + $0x470] sm:$0xff]
    %v1617 = vld [vmem:[#allocation4 + $0x478] sm:$0xff]
    %v1618 = vld [vmem:[#allocation4 + $0x7b8] ss:$0 sm:$0xff]
    %v1619 = vld [vmem:[#allocation2 + $0x18] sm:$0xff]
    %v1620 = vld [vmem:[#allocation2 + $0x20] sm:$0xff]
    %v1621 = vld [vmem:[#allocation2 + $0x28] sm:$0xff]
    %1622 = vmatpush.msra.mxu0 %v1615
    %1623 = vmatpush.msra.mxu0 %v1612
    %1624 = vmatpush.msra.mxu0 %v1609
    %1625 = vmatpush.msra.mxu0 %v1606
    %1626 = vmatpush.msra.mxu0 %v1603
    %1627 = vmatpush.msra.mxu0 %v1600
    %1628 = vmatpush.msra.mxu0 %v1597
    %1629 = vmatpush.msra.mxu0 %v1594
    %1630 = vmatpush.msra.mxu0 %v1591
    %1631 = vmatpush.msra.mxu0 %v1588
    %1632 = vmatpush.msra.mxu0 %v1585
    %1633 = vmatpush.msra.mxu0 %v1582
    %1634 = vmatpush.msra.mxu0 %v1579
    %1635 = vmatpush.msra.mxu0 %v1576
    %1636 = vmatpush.msra.mxu0 %v1573
    %1637 = vmatpush.msra.mxu0 %v1570
    %1638 = vmatmul.f32.gmra.mxu0 %v1569
    %v1639 = vpop.f32.mrf.mxu0
    %v1640 = vadd.f32 0.0, %v1639
    %1641 = vdwg.mxu0
    %1642 = vmatpush.msra.mxu0 %v1616
    %1643 = vmatpush.msra.mxu0 %v1613
    %1644 = vmatpush.msra.mxu0 %v1610
    %1645 = vmatpush.msra.mxu0 %v1607
    %1646 = vmatpush.msra.mxu0 %v1604
    %1647 = vmatpush.msra.mxu0 %v1601
    %1648 = vmatpush.msra.mxu0 %v1598
    %1649 = vmatpush.msra.mxu0 %v1595
    %1650 = vmatpush.msra.mxu0 %v1592
    %1651 = vmatpush.msra.mxu0 %v1589
    %1652 = vmatpush.msra.mxu0 %v1586
    %1653 = vmatpush.msra.mxu0 %v1583
    %1654 = vmatpush.msra.mxu0 %v1580
    %1655 = vmatpush.msra.mxu0 %v1577
    %1656 = vmatpush.msra.mxu0 %v1574
    %1657 = vmatpush.msra.mxu0 %v1571
    %1658 = vmatmul.f32.gmra.mxu0 %v1569
    %v1659 = vpop.f32.mrf.mxu0
    %v1660 = vadd.f32 0.0, %v1659
    %1661 = vdwg.mxu0
    %1662 = vmatpush.msra.mxu0 %v1617
    %1663 = vmatpush.msra.mxu0 %v1614
    %1664 = vmatpush.msra.mxu0 %v1611
    %1665 = vmatpush.msra.mxu0 %v1608
    %1666 = vmatpush.msra.mxu0 %v1605
    %1667 = vmatpush.msra.mxu0 %v1602
    %1668 = vmatpush.msra.mxu0 %v1599
    %1669 = vmatpush.msra.mxu0 %v1596
    %1670 = vmatpush.msra.mxu0 %v1593
    %1671 = vmatpush.msra.mxu0 %v1590
    %1672 = vmatpush.msra.mxu0 %v1587
    %1673 = vmatpush.msra.mxu0 %v1584
    %1674 = vmatpush.msra.mxu0 %v1581
    %1675 = vmatpush.msra.mxu0 %v1578
    %1676 = vmatpush.msra.mxu0 %v1575
    %1677 = vmatpush.msra.mxu0 %v1572
    %1678 = vmatmul.f32.gmra.mxu0 %v1569
    %v1679 = vpop.f32.mrf.mxu0
    %v1680 = vadd.f32 0.0, %v1679
    %1681 = vdwg.mxu0
    %v1682 = vadd.f32 %v1619, %v1640
    %v1683 = vxor.u32 %v1682, 2147483648
    %v1684 = vmul.f32 %v1683, 1.442695
    %v1685 = vpow.pop %v1684
    %v1686 = vadd.f32 %v1685, 1.0
    %v1687 = vrcp.pop %v1686
    %v1688 = vmul.f32 %v1686, %v1687
    %v1689 = vsub.f32 1.0, %v1688
    %v1690 = vmul.f32 %v1687, %v1689
    %v1691 = vadd.f32 %v1687, %v1690
    %vm1692 = vweird.f32 %v1686
    %vm1693 = vweird.f32 %v1687
    %vm1694 = vmor %vm1692, %vm1693
    %v1695 = vsel %vm1694, %v1687, %v1691
    %v1696 = vand.u32 2147483647, %v1686
    %vm1697 = vcmp.eq.f32.partialorder %v1696, 8.507059e+37
    %v1698 = vand.u32 %v1686, 2147483648
    %v1699 = vor.u32 1.1754944e-38, %v1698
    %v1700 = vsel %vm1697, %v1699, %v1695
    %v1701 = vmul.f32 1.0, %v1700
    %v1702 = vadd.f32 %v1620, %v1660
    %v1703 = vxor.u32 %v1702, 2147483648
    %v1704 = vmul.f32 %v1703, 1.442695
    %v1705 = vpow.pop %v1704
    %v1706 = vadd.f32 %v1705, 1.0
    %v1707 = vrcp.pop %v1706
    %v1708 = vmul.f32 %v1706, %v1707
    %v1709 = vsub.f32 1.0, %v1708
    %v1710 = vmul.f32 %v1707, %v1709
    %v1711 = vadd.f32 %v1707, %v1710
    %vm1712 = vweird.f32 %v1706
    %vm1713 = vweird.f32 %v1707
    %vm1714 = vmor %vm1712, %vm1713
    %v1715 = vsel %vm1714, %v1707, %v1711
    %v1716 = vand.u32 2147483647, %v1706
    %vm1717 = vcmp.eq.f32.partialorder %v1716, 8.507059e+37
    %v1718 = vand.u32 %v1706, 2147483648
    %v1719 = vor.u32 1.1754944e-38, %v1718
    %v1720 = vsel %vm1717, %v1719, %v1715
    %v1721 = vmul.f32 1.0, %v1720
    %v1722 = vadd.f32 %v1680, %v1618
    %v1723 = vmul.f32 %v1701, %v1722
    %v1724 = vadd.f32 %v1621, %v1723
    %v1725 = vtanh.pop %v1724
    %v1726 = vsub.f32 1.0, %v1721
    %v1727 = vmul.f32 %v1726, %v1725
    %v1728 = vmul.f32 %v1721, %v1569
    %v1729 = vadd.f32 %v1727, %v1728
    %1730 = vst [vmem:[#allocation3] sm:$0xff] %v1729
    %v1731 = vld [vmem:[#allocation2 + $0x48] sm:$0xff]
    %v1732 = vld [vmem:[#allocation2 + $0x50] sm:$0xff]
    %v1733 = vld [vmem:[#allocation2 + $0x58] sm:$0xff]
    %1734 = vmatpush.msra.mxu0 %v1615
    %1735 = vmatpush.msra.mxu0 %v1612
    %1736 = vmatpush.msra.mxu0 %v1609
    %1737 = vmatpush.msra.mxu0 %v1606
    %1738 = vmatpush.msra.mxu0 %v1603
    %1739 = vmatpush.msra.mxu0 %v1600
    %1740 = vmatpush.msra.mxu0 %v1597
    %1741 = vmatpush.msra.mxu0 %v1594
    %1742 = vmatpush.msra.mxu0 %v1591
    %1743 = vmatpush.msra.mxu0 %v1588
    %1744 = vmatpush.msra.mxu0 %v1585
    %1745 = vmatpush.msra.mxu0 %v1582
    %1746 = vmatpush.msra.mxu0 %v1579
    %1747 = vmatpush.msra.mxu0 %v1576
    %1748 = vmatpush.msra.mxu0 %v1573
    %1749 = vmatpush.msra.mxu0 %v1570
    %1750 = vmatmul.f32.gmra.mxu0 %v1729
    %v1751 = vpop.f32.mrf.mxu0
    %v1752 = vadd.f32 0.0, %v1751
    %1753 = vdwg.mxu0
    %1754 = vmatpush.msra.mxu0 %v1616
    %1755 = vmatpush.msra.mxu0 %v1613
    %1756 = vmatpush.msra.mxu0 %v1610
    %1757 = vmatpush.msra.mxu0 %v1607
    %1758 = vmatpush.msra.mxu0 %v1604
    %1759 = vmatpush.msra.mxu0 %v1601
    %1760 = vmatpush.msra.mxu0 %v1598
    %1761 = vmatpush.msra.mxu0 %v1595
    %1762 = vmatpush.msra.mxu0 %v1592
    %1763 = vmatpush.msra.mxu0 %v1589
    %1764 = vmatpush.msra.mxu0 %v1586
    %1765 = vmatpush.msra.mxu0 %v1583
    %1766 = vmatpush.msra.mxu0 %v1580
    %1767 = vmatpush.msra.mxu0 %v1577
    %1768 = vmatpush.msra.mxu0 %v1574
    %1769 = vmatpush.msra.mxu0 %v1571
    %1770 = vmatmul.f32.gmra.mxu0 %v1729
    %v1771 = vpop.f32.mrf.mxu0
    %v1772 = vadd.f32 0.0, %v1771
    %1773 = vdwg.mxu0
    %1774 = vmatpush.msra.mxu0 %v1617
    %1775 = vmatpush.msra.mxu0 %v1614
    %1776 = vmatpush.msra.mxu0 %v1611
    %1777 = vmatpush.msra.mxu0 %v1608
    %1778 = vmatpush.msra.mxu0 %v1605
    %1779 = vmatpush.msra.mxu0 %v1602
    %1780 = vmatpush.msra.mxu0 %v1599
    %1781 = vmatpush.msra.mxu0 %v1596
    %1782 = vmatpush.msra.mxu0 %v1593
    %1783 = vmatpush.msra.mxu0 %v1590
    %1784 = vmatpush.msra.mxu0 %v1587
    %1785 = vmatpush.msra.mxu0 %v1584
    %1786 = vmatpush.msra.mxu0 %v1581
    %1787 = vmatpush.msra.mxu0 %v1578
    %1788 = vmatpush.msra.mxu0 %v1575
    %1789 = vmatpush.msra.mxu0 %v1572
    %1790 = vmatmul.f32.gmra.mxu0 %v1729
    %v1791 = vpop.f32.mrf.mxu0
    %v1792 = vadd.f32 0.0, %v1791
    %1793 = vdwg.mxu0
    %v1794 = vadd.f32 %v1731, %v1752
    %v1795 = vxor.u32 %v1794, 2147483648
    %v1796 = vmul.f32 %v1795, 1.442695
    %v1797 = vpow.pop %v1796
    %v1798 = vadd.f32 %v1797, 1.0
    %v1799 = vrcp.pop %v1798
    %v1800 = vmul.f32 %v1798, %v1799
    %v1801 = vsub.f32 1.0, %v1800
    %v1802 = vmul.f32 %v1799, %v1801
    %v1803 = vadd.f32 %v1799, %v1802
    %vm1804 = vweird.f32 %v1798
    %vm1805 = vweird.f32 %v1799
    %vm1806 = vmor %vm1804, %vm1805
    %v1807 = vsel %vm1806, %v1799, %v1803
    %v1808 = vand.u32 2147483647, %v1798
    %vm1809 = vcmp.eq.f32.partialorder %v1808, 8.507059e+37
    %v1810 = vand.u32 %v1798, 2147483648
    %v1811 = vor.u32 1.1754944e-38, %v1810
    %v1812 = vsel %vm1809, %v1811, %v1807
    %v1813 = vmul.f32 1.0, %v1812
    %v1814 = vadd.f32 %v1732, %v1772
    %v1815 = vxor.u32 %v1814, 2147483648
    %v1816 = vmul.f32 %v1815, 1.442695
    %v1817 = vpow.pop %v1816
    %v1818 = vadd.f32 %v1817, 1.0
    %v1819 = vrcp.pop %v1818
    %v1820 = vmul.f32 %v1818, %v1819
    %v1821 = vsub.f32 1.0, %v1820
    %v1822 = vmul.f32 %v1819, %v1821
    %v1823 = vadd.f32 %v1819, %v1822
    %vm1824 = vweird.f32 %v1818
    %vm1825 = vweird.f32 %v1819
    %vm1826 = vmor %vm1824, %vm1825
    %v1827 = vsel %vm1826, %v1819, %v1823
    %v1828 = vand.u32 2147483647, %v1818
    %vm1829 = vcmp.eq.f32.partialorder %v1828, 8.507059e+37
    %v1830 = vand.u32 %v1818, 2147483648
    %v1831 = vor.u32 1.1754944e-38, %v1830
    %v1832 = vsel %vm1829, %v1831, %v1827
    %v1833 = vmul.f32 1.0, %v1832
    %v1834 = vadd.f32 %v1792, %v1618
    %v1835 = vmul.f32 %v1813, %v1834
    %v1836 = vadd.f32 %v1733, %v1835
    %v1837 = vtanh.pop %v1836
    %v1838 = vsub.f32 1.0, %v1833
    %v1839 = vmul.f32 %v1838, %v1837
    %v1840 = vmul.f32 %v1833, %v1729
    %v1841 = vadd.f32 %v1839, %v1840
    %1842 = vst [vmem:[#allocation3 + $0x8] sm:$0xff] %v1841
    %v1843 = vld [vmem:[#allocation2 + $0x78] sm:$0xff]
    %v1844 = vld [vmem:[#allocation2 + $0x80] sm:$0xff]
    %v1845 = vld [vmem:[#allocation2 + $0x88] sm:$0xff]
    %1846 = vmatpush.msra.mxu0 %v1615
    %1847 = vmatpush.msra.mxu0 %v1612
    %1848 = vmatpush.msra.mxu0 %v1609
    %1849 = vmatpush.msra.mxu0 %v1606
    %1850 = vmatpush.msra.mxu0 %v1603
    %1851 = vmatpush.msra.mxu0 %v1600
    %1852 = vmatpush.msra.mxu0 %v1597
    %1853 = vmatpush.msra.mxu0 %v1594
    %1854 = vmatpush.msra.mxu0 %v1591
    %1855 = vmatpush.msra.mxu0 %v1588
    %1856 = vmatpush.msra.mxu0 %v1585
    %1857 = vmatpush.msra.mxu0 %v1582
    %1858 = vmatpush.msra.mxu0 %v1579
    %1859 = vmatpush.msra.mxu0 %v1576
    %1860 = vmatpush.msra.mxu0 %v1573
    %1861 = vmatpush.msra.mxu0 %v1570
    %1862 = vmatmul.f32.gmra.mxu0 %v1841
    %v1863 = vpop.f32.mrf.mxu0
    %v1864 = vadd.f32 0.0, %v1863
    %1865 = vdwg.mxu0
    %1866 = vmatpush.msra.mxu0 %v1616
    %1867 = vmatpush.msra.mxu0 %v1613
    %1868 = vmatpush.msra.mxu0 %v1610
    %1869 = vmatpush.msra.mxu0 %v1607
    %1870 = vmatpush.msra.mxu0 %v1604
    %1871 = vmatpush.msra.mxu0 %v1601
    %1872 = vmatpush.msra.mxu0 %v1598
    %1873 = vmatpush.msra.mxu0 %v1595
    %1874 = vmatpush.msra.mxu0 %v1592
    %1875 = vmatpush.msra.mxu0 %v1589
    %1876 = vmatpush.msra.mxu0 %v1586
    %1877 = vmatpush.msra.mxu0 %v1583
    %1878 = vmatpush.msra.mxu0 %v1580
    %1879 = vmatpush.msra.mxu0 %v1577
    %1880 = vmatpush.msra.mxu0 %v1574
    %1881 = vmatpush.msra.mxu0 %v1571
    %1882 = vmatmul.f32.gmra.mxu0 %v1841
    %v1883 = vpop.f32.mrf.mxu0
    %v1884 = vadd.f32 0.0, %v1883
    %1885 = vdwg.mxu0
    %1886 = vmatpush.msra.mxu0 %v1617
    %1887 = vmatpush.msra.mxu0 %v1614
    %1888 = vmatpush.msra.mxu0 %v1611
    %1889 = vmatpush.msra.mxu0 %v1608
    %1890 = vmatpush.msra.mxu0 %v1605
    %1891 = vmatpush.msra.mxu0 %v1602
    %1892 = vmatpush.msra.mxu0 %v1599
    %1893 = vmatpush.msra.mxu0 %v1596
    %1894 = vmatpush.msra.mxu0 %v1593
    %1895 = vmatpush.msra.mxu0 %v1590
    %1896 = vmatpush.msra.mxu0 %v1587
    %1897 = vmatpush.msra.mxu0 %v1584
    %1898 = vmatpush.msra.mxu0 %v1581
    %1899 = vmatpush.msra.mxu0 %v1578
    %1900 = vmatpush.msra.mxu0 %v1575
    %1901 = vmatpush.msra.mxu0 %v1572
    %1902 = vmatmul.f32.gmra.mxu0 %v1841
    %v1903 = vpop.f32.mrf.mxu0
    %v1904 = vadd.f32 0.0, %v1903
    %1905 = vdwg.mxu0
    %v1906 = vadd.f32 %v1843, %v1864
    %v1907 = vxor.u32 %v1906, 2147483648
    %v1908 = vmul.f32 %v1907, 1.442695
    %v1909 = vpow.pop %v1908
    %v1910 = vadd.f32 %v1909, 1.0
    %v1911 = vrcp.pop %v1910
    %v1912 = vmul.f32 %v1910, %v1911
    %v1913 = vsub.f32 1.0, %v1912
    %v1914 = vmul.f32 %v1911, %v1913
    %v1915 = vadd.f32 %v1911, %v1914
    %vm1916 = vweird.f32 %v1910
    %vm1917 = vweird.f32 %v1911
    %vm1918 = vmor %vm1916, %vm1917
    %v1919 = vsel %vm1918, %v1911, %v1915
    %v1920 = vand.u32 2147483647, %v1910
    %vm1921 = vcmp.eq.f32.partialorder %v1920, 8.507059e+37
    %v1922 = vand.u32 %v1910, 2147483648
    %v1923 = vor.u32 1.1754944e-38, %v1922
    %v1924 = vsel %vm1921, %v1923, %v1919
    %v1925 = vmul.f32 1.0, %v1924
    %v1926 = vadd.f32 %v1844, %v1884
    %v1927 = vxor.u32 %v1926, 2147483648
    %v1928 = vmul.f32 %v1927, 1.442695
    %v1929 = vpow.pop %v1928
    %v1930 = vadd.f32 %v1929, 1.0
    %v1931 = vrcp.pop %v1930
    %v1932 = vmul.f32 %v1930, %v1931
    %v1933 = vsub.f32 1.0, %v1932
    %v1934 = vmul.f32 %v1931, %v1933
    %v1935 = vadd.f32 %v1931, %v1934
    %vm1936 = vweird.f32 %v1930
    %vm1937 = vweird.f32 %v1931
    %vm1938 = vmor %vm1936, %vm1937
    %v1939 = vsel %vm1938, %v1931, %v1935
    %v1940 = vand.u32 2147483647, %v1930
    %vm1941 = vcmp.eq.f32.partialorder %v1940, 8.507059e+37
    %v1942 = vand.u32 %v1930, 2147483648
    %v1943 = vor.u32 1.1754944e-38, %v1942
    %v1944 = vsel %vm1941, %v1943, %v1939
    %v1945 = vmul.f32 1.0, %v1944
    %v1946 = vadd.f32 %v1904, %v1618
    %v1947 = vmul.f32 %v1925, %v1946
    %v1948 = vadd.f32 %v1845, %v1947
    %v1949 = vtanh.pop %v1948
    %v1950 = vsub.f32 1.0, %v1945
    %v1951 = vmul.f32 %v1950, %v1949
    %v1952 = vmul.f32 %v1945, %v1841
    %v1953 = vadd.f32 %v1951, %v1952
    %1954 = vst [vmem:[#allocation3 + $0x10] sm:$0xff] %v1953
    %v1955 = vld [vmem:[#allocation2 + $0xa8] sm:$0xff]
    %v1956 = vld [vmem:[#allocation2 + $0xb0] sm:$0xff]
    %v1957 = vld [vmem:[#allocation2 + $0xb8] sm:$0xff]
    %1958 = vmatpush.msra.mxu0 %v1615
    %1959 = vmatpush.msra.mxu0 %v1612
    %1960 = vmatpush.msra.mxu0 %v1609
    %1961 = vmatpush.msra.mxu0 %v1606
    %1962 = vmatpush.msra.mxu0 %v1603
    %1963 = vmatpush.msra.mxu0 %v1600
    %1964 = vmatpush.msra.mxu0 %v1597
    %1965 = vmatpush.msra.mxu0 %v1594
    %1966 = vmatpush.msra.mxu0 %v1591
    %1967 = vmatpush.msra.mxu0 %v1588
    %1968 = vmatpush.msra.mxu0 %v1585
    %1969 = vmatpush.msra.mxu0 %v1582
    %1970 = vmatpush.msra.mxu0 %v1579
    %1971 = vmatpush.msra.mxu0 %v1576
    %1972 = vmatpush.msra.mxu0 %v1573
    %1973 = vmatpush.msra.mxu0 %v1570
    %1974 = vmatmul.f32.gmra.mxu0 %v1953
    %v1975 = vpop.f32.mrf.mxu0
    %v1976 = vadd.f32 0.0, %v1975
    %1977 = vdwg.mxu0
    %1978 = vmatpush.msra.mxu0 %v1616
    %1979 = vmatpush.msra.mxu0 %v1613
    %1980 = vmatpush.msra.mxu0 %v1610
    %1981 = vmatpush.msra.mxu0 %v1607
    %1982 = vmatpush.msra.mxu0 %v1604
    %1983 = vmatpush.msra.mxu0 %v1601
    %1984 = vmatpush.msra.mxu0 %v1598
    %1985 = vmatpush.msra.mxu0 %v1595
    %1986 = vmatpush.msra.mxu0 %v1592
    %1987 = vmatpush.msra.mxu0 %v1589
    %1988 = vmatpush.msra.mxu0 %v1586
    %1989 = vmatpush.msra.mxu0 %v1583
    %1990 = vmatpush.msra.mxu0 %v1580
    %1991 = vmatpush.msra.mxu0 %v1577
    %1992 = vmatpush.msra.mxu0 %v1574
    %1993 = vmatpush.msra.mxu0 %v1571
    %1994 = vmatmul.f32.gmra.mxu0 %v1953
    %v1995 = vpop.f32.mrf.mxu0
    %v1996 = vadd.f32 0.0, %v1995
    %1997 = vdwg.mxu0
    %1998 = vmatpush.msra.mxu0 %v1617
    %1999 = vmatpush.msra.mxu0 %v1614
    %2000 = vmatpush.msra.mxu0 %v1611
    %2001 = vmatpush.msra.mxu0 %v1608
    %2002 = vmatpush.msra.mxu0 %v1605
    %2003 = vmatpush.msra.mxu0 %v1602
    %2004 = vmatpush.msra.mxu0 %v1599
    %2005 = vmatpush.msra.mxu0 %v1596
    %2006 = vmatpush.msra.mxu0 %v1593
    %2007 = vmatpush.msra.mxu0 %v1590
    %2008 = vmatpush.msra.mxu0 %v1587
    %2009 = vmatpush.msra.mxu0 %v1584
    %2010 = vmatpush.msra.mxu0 %v1581
    %2011 = vmatpush.msra.mxu0 %v1578
    %2012 = vmatpush.msra.mxu0 %v1575
    %2013 = vmatpush.msra.mxu0 %v1572
    %2014 = vmatmul.f32.gmra.mxu0 %v1953
    %v2015 = vpop.f32.mrf.mxu0
    %v2016 = vadd.f32 0.0, %v2015
    %2017 = vdwg.mxu0
    %v2018 = vadd.f32 %v1955, %v1976
    %v2019 = vxor.u32 %v2018, 2147483648
    %v2020 = vmul.f32 %v2019, 1.442695
    %v2021 = vpow.pop %v2020
    %v2022 = vadd.f32 %v2021, 1.0
    %v2023 = vrcp.pop %v2022
    %v2024 = vmul.f32 %v2022, %v2023
    %v2025 = vsub.f32 1.0, %v2024
    %v2026 = vmul.f32 %v2023, %v2025
    %v2027 = vadd.f32 %v2023, %v2026
    %vm2028 = vweird.f32 %v2022
    %vm2029 = vweird.f32 %v2023
    %vm2030 = vmor %vm2028, %vm2029
    %v2031 = vsel %vm2030, %v2023, %v2027
    %v2032 = vand.u32 2147483647, %v2022
    %vm2033 = vcmp.eq.f32.partialorder %v2032, 8.507059e+37
    %v2034 = vand.u32 %v2022, 2147483648
    %v2035 = vor.u32 1.1754944e-38, %v2034
    %v2036 = vsel %vm2033, %v2035, %v2031
    %v2037 = vmul.f32 1.0, %v2036
    %v2038 = vadd.f32 %v1956, %v1996
    %v2039 = vxor.u32 %v2038, 2147483648
    %v2040 = vmul.f32 %v2039, 1.442695
    %v2041 = vpow.pop %v2040
    %v2042 = vadd.f32 %v2041, 1.0
    %v2043 = vrcp.pop %v2042
    %v2044 = vmul.f32 %v2042, %v2043
    %v2045 = vsub.f32 1.0, %v2044
    %v2046 = vmul.f32 %v2043, %v2045
    %v2047 = vadd.f32 %v2043, %v2046
    %vm2048 = vweird.f32 %v2042
    %vm2049 = vweird.f32 %v2043
    %vm2050 = vmor %vm2048, %vm2049
    %v2051 = vsel %vm2050, %v2043, %v2047
    %v2052 = vand.u32 2147483647, %v2042
    %vm2053 = vcmp.eq.f32.partialorder %v2052, 8.507059e+37
    %v2054 = vand.u32 %v2042, 2147483648
    %v2055 = vor.u32 1.1754944e-38, %v2054
    %v2056 = vsel %vm2053, %v2055, %v2051
    %v2057 = vmul.f32 1.0, %v2056
    %v2058 = vadd.f32 %v2016, %v1618
    %v2059 = vmul.f32 %v2037, %v2058
    %v2060 = vadd.f32 %v1957, %v2059
    %v2061 = vtanh.pop %v2060
    %v2062 = vsub.f32 1.0, %v2057
    %v2063 = vmul.f32 %v2062, %v2061
    %v2064 = vmul.f32 %v2057, %v1953
    %v2065 = vadd.f32 %v2063, %v2064
    %2066 = vst [vmem:[#allocation3 + $0x18] sm:$0xff] %v2065
    %v2067 = vld [vmem:[#allocation2 + $0xd8] sm:$0xff]
    %v2068 = vld [vmem:[#allocation2 + $0xe0] sm:$0xff]
    %v2069 = vld [vmem:[#allocation2 + $0xe8] sm:$0xff]
    %2070 = vmatpush.msra.mxu0 %v1615
    %2071 = vmatpush.msra.mxu0 %v1612
    %2072 = vmatpush.msra.mxu0 %v1609
    %2073 = vmatpush.msra.mxu0 %v1606
    %2074 = vmatpush.msra.mxu0 %v1603
    %2075 = vmatpush.msra.mxu0 %v1600
    %2076 = vmatpush.msra.mxu0 %v1597
    %2077 = vmatpush.msra.mxu0 %v1594
    %2078 = vmatpush.msra.mxu0 %v1591
    %2079 = vmatpush.msra.mxu0 %v1588
    %2080 = vmatpush.msra.mxu0 %v1585
    %2081 = vmatpush.msra.mxu0 %v1582
    %2082 = vmatpush.msra.mxu0 %v1579
    %2083 = vmatpush.msra.mxu0 %v1576
    %2084 = vmatpush.msra.mxu0 %v1573
    %2085 = vmatpush.msra.mxu0 %v1570
    %2086 = vmatmul.f32.gmra.mxu0 %v2065
    %v2087 = vpop.f32.mrf.mxu0
    %v2088 = vadd.f32 0.0, %v2087
    %2089 = vdwg.mxu0
    %2090 = vmatpush.msra.mxu0 %v1616
    %2091 = vmatpush.msra.mxu0 %v1613
    %2092 = vmatpush.msra.mxu0 %v1610
    %2093 = vmatpush.msra.mxu0 %v1607
    %2094 = vmatpush.msra.mxu0 %v1604
    %2095 = vmatpush.msra.mxu0 %v1601
    %2096 = vmatpush.msra.mxu0 %v1598
    %2097 = vmatpush.msra.mxu0 %v1595
    %2098 = vmatpush.msra.mxu0 %v1592
    %2099 = vmatpush.msra.mxu0 %v1589
    %2100 = vmatpush.msra.mxu0 %v1586
    %2101 = vmatpush.msra.mxu0 %v1583
    %2102 = vmatpush.msra.mxu0 %v1580
    %2103 = vmatpush.msra.mxu0 %v1577
    %2104 = vmatpush.msra.mxu0 %v1574
    %2105 = vmatpush.msra.mxu0 %v1571
    %2106 = vmatmul.f32.gmra.mxu0 %v2065
    %v2107 = vpop.f32.mrf.mxu0
    %v2108 = vadd.f32 0.0, %v2107
    %2109 = vdwg.mxu0
    %2110 = vmatpush.msra.mxu0 %v1617
    %2111 = vmatpush.msra.mxu0 %v1614
    %2112 = vmatpush.msra.mxu0 %v1611
    %2113 = vmatpush.msra.mxu0 %v1608
    %2114 = vmatpush.msra.mxu0 %v1605
    %2115 = vmatpush.msra.mxu0 %v1602
    %2116 = vmatpush.msra.mxu0 %v1599
    %2117 = vmatpush.msra.mxu0 %v1596
    %2118 = vmatpush.msra.mxu0 %v1593
    %2119 = vmatpush.msra.mxu0 %v1590
    %2120 = vmatpush.msra.mxu0 %v1587
    %2121 = vmatpush.msra.mxu0 %v1584
    %2122 = vmatpush.msra.mxu0 %v1581
    %2123 = vmatpush.msra.mxu0 %v1578
    %2124 = vmatpush.msra.mxu0 %v1575
    %2125 = vmatpush.msra.mxu0 %v1572
    %2126 = vmatmul.f32.gmra.mxu0 %v2065
    %v2127 = vpop.f32.mrf.mxu0
    %v2128 = vadd.f32 0.0, %v2127
    %2129 = vdwg.mxu0
    %v2130 = vadd.f32 %v2067, %v2088
    %v2131 = vxor.u32 %v2130, 2147483648
    %v2132 = vmul.f32 %v2131, 1.442695
    %v2133 = vpow.pop %v2132
    %v2134 = vadd.f32 %v2133, 1.0
    %v2135 = vrcp.pop %v2134
    %v2136 = vmul.f32 %v2134, %v2135
    %v2137 = vsub.f32 1.0, %v2136
    %v2138 = vmul.f32 %v2135, %v2137
    %v2139 = vadd.f32 %v2135, %v2138
    %vm2140 = vweird.f32 %v2134
    %vm2141 = vweird.f32 %v2135
    %vm2142 = vmor %vm2140, %vm2141
    %v2143 = vsel %vm2142, %v2135, %v2139
    %v2144 = vand.u32 2147483647, %v2134
    %vm2145 = vcmp.eq.f32.partialorder %v2144, 8.507059e+37
    %v2146 = vand.u32 %v2134, 2147483648
    %v2147 = vor.u32 1.1754944e-38, %v2146
    %v2148 = vsel %vm2145, %v2147, %v2143
    %v2149 = vmul.f32 1.0, %v2148
    %v2150 = vadd.f32 %v2068, %v2108
    %v2151 = vxor.u32 %v2150, 2147483648
    %v2152 = vmul.f32 %v2151, 1.442695
    %v2153 = vpow.pop %v2152
    %v2154 = vadd.f32 %v2153, 1.0
    %v2155 = vrcp.pop %v2154
    %v2156 = vmul.f32 %v2154, %v2155
    %v2157 = vsub.f32 1.0, %v2156
    %v2158 = vmul.f32 %v2155, %v2157
    %v2159 = vadd.f32 %v2155, %v2158
    %vm2160 = vweird.f32 %v2154
    %vm2161 = vweird.f32 %v2155
    %vm2162 = vmor %vm2160, %vm2161
    %v2163 = vsel %vm2162, %v2155, %v2159
    %v2164 = vand.u32 2147483647, %v2154
    %vm2165 = vcmp.eq.f32.partialorder %v2164, 8.507059e+37
    %v2166 = vand.u32 %v2154, 2147483648
    %v2167 = vor.u32 1.1754944e-38, %v2166
    %v2168 = vsel %vm2165, %v2167, %v2163
    %v2169 = vmul.f32 1.0, %v2168
    %v2170 = vadd.f32 %v2128, %v1618
    %v2171 = vmul.f32 %v2149, %v2170
    %v2172 = vadd.f32 %v2069, %v2171
    %v2173 = vtanh.pop %v2172
    %v2174 = vsub.f32 1.0, %v2169
    %v2175 = vmul.f32 %v2174, %v2173
    %v2176 = vmul.f32 %v2169, %v2065
    %v2177 = vadd.f32 %v2175, %v2176
    %2178 = vst [vmem:[#allocation3 + $0x20] sm:$0xff] %v2177
    %v2179 = vld [vmem:[#allocation2 + $0x108] sm:$0xff]
    %v2180 = vld [vmem:[#allocation2 + $0x110] sm:$0xff]
    %v2181 = vld [vmem:[#allocation2 + $0x118] sm:$0xff]
    %2182 = vmatpush.msra.mxu0 %v1615
    %2183 = vmatpush.msra.mxu0 %v1612
    %2184 = vmatpush.msra.mxu0 %v1609
    %2185 = vmatpush.msra.mxu0 %v1606
    %2186 = vmatpush.msra.mxu0 %v1603
    %2187 = vmatpush.msra.mxu0 %v1600
    %2188 = vmatpush.msra.mxu0 %v1597
    %2189 = vmatpush.msra.mxu0 %v1594
    %2190 = vmatpush.msra.mxu0 %v1591
    %2191 = vmatpush.msra.mxu0 %v1588
    %2192 = vmatpush.msra.mxu0 %v1585
    %2193 = vmatpush.msra.mxu0 %v1582
    %2194 = vmatpush.msra.mxu0 %v1579
    %2195 = vmatpush.msra.mxu0 %v1576
    %2196 = vmatpush.msra.mxu0 %v1573
    %2197 = vmatpush.msra.mxu0 %v1570
    %2198 = vmatmul.f32.gmra.mxu0 %v2177
    %v2199 = vpop.f32.mrf.mxu0
    %v2200 = vadd.f32 0.0, %v2199
    %2201 = vdwg.mxu0
    %2202 = vmatpush.msra.mxu0 %v1616
    %2203 = vmatpush.msra.mxu0 %v1613
    %2204 = vmatpush.msra.mxu0 %v1610
    %2205 = vmatpush.msra.mxu0 %v1607
    %2206 = vmatpush.msra.mxu0 %v1604
    %2207 = vmatpush.msra.mxu0 %v1601
    %2208 = vmatpush.msra.mxu0 %v1598
    %2209 = vmatpush.msra.mxu0 %v1595
    %2210 = vmatpush.msra.mxu0 %v1592
    %2211 = vmatpush.msra.mxu0 %v1589
    %2212 = vmatpush.msra.mxu0 %v1586
    %2213 = vmatpush.msra.mxu0 %v1583
    %2214 = vmatpush.msra.mxu0 %v1580
    %2215 = vmatpush.msra.mxu0 %v1577
    %2216 = vmatpush.msra.mxu0 %v1574
    %2217 = vmatpush.msra.mxu0 %v1571
    %2218 = vmatmul.f32.gmra.mxu0 %v2177
    %v2219 = vpop.f32.mrf.mxu0
    %v2220 = vadd.f32 0.0, %v2219
    %2221 = vdwg.mxu0
    %2222 = vmatpush.msra.mxu0 %v1617
    %2223 = vmatpush.msra.mxu0 %v1614
    %2224 = vmatpush.msra.mxu0 %v1611
    %2225 = vmatpush.msra.mxu0 %v1608
    %2226 = vmatpush.msra.mxu0 %v1605
    %2227 = vmatpush.msra.mxu0 %v1602
    %2228 = vmatpush.msra.mxu0 %v1599
    %2229 = vmatpush.msra.mxu0 %v1596
    %2230 = vmatpush.msra.mxu0 %v1593
    %2231 = vmatpush.msra.mxu0 %v1590
    %2232 = vmatpush.msra.mxu0 %v1587
    %2233 = vmatpush.msra.mxu0 %v1584
    %2234 = vmatpush.msra.mxu0 %v1581
    %2235 = vmatpush.msra.mxu0 %v1578
    %2236 = vmatpush.msra.mxu0 %v1575
    %2237 = vmatpush.msra.mxu0 %v1572
    %2238 = vmatmul.f32.gmra.mxu0 %v2177
    %v2239 = vpop.f32.mrf.mxu0
    %v2240 = vadd.f32 0.0, %v2239
    %2241 = vdwg.mxu0
    %v2242 = vadd.f32 %v2179, %v2200
    %v2243 = vxor.u32 %v2242, 2147483648
    %v2244 = vmul.f32 %v2243, 1.442695
    %v2245 = vpow.pop %v2244
    %v2246 = vadd.f32 %v2245, 1.0
    %v2247 = vrcp.pop %v2246
    %v2248 = vmul.f32 %v2246, %v2247
    %v2249 = vsub.f32 1.0, %v2248
    %v2250 = vmul.f32 %v2247, %v2249
    %v2251 = vadd.f32 %v2247, %v2250
    %vm2252 = vweird.f32 %v2246
    %vm2253 = vweird.f32 %v2247
    %vm2254 = vmor %vm2252, %vm2253
    %v2255 = vsel %vm2254, %v2247, %v2251
    %v2256 = vand.u32 2147483647, %v2246
    %vm2257 = vcmp.eq.f32.partialorder %v2256, 8.507059e+37
    %v2258 = vand.u32 %v2246, 2147483648
    %v2259 = vor.u32 1.1754944e-38, %v2258
    %v2260 = vsel %vm2257, %v2259, %v2255
    %v2261 = vmul.f32 1.0, %v2260
    %v2262 = vadd.f32 %v2180, %v2220
    %v2263 = vxor.u32 %v2262, 2147483648
    %v2264 = vmul.f32 %v2263, 1.442695
    %v2265 = vpow.pop %v2264
    %v2266 = vadd.f32 %v2265, 1.0
    %v2267 = vrcp.pop %v2266
    %v2268 = vmul.f32 %v2266, %v2267
    %v2269 = vsub.f32 1.0, %v2268
    %v2270 = vmul.f32 %v2267, %v2269
    %v2271 = vadd.f32 %v2267, %v2270
    %vm2272 = vweird.f32 %v2266
    %vm2273 = vweird.f32 %v2267
    %vm2274 = vmor %vm2272, %vm2273
    %v2275 = vsel %vm2274, %v2267, %v2271
    %v2276 = vand.u32 2147483647, %v2266
    %vm2277 = vcmp.eq.f32.partialorder %v2276, 8.507059e+37
    %v2278 = vand.u32 %v2266, 2147483648
    %v2279 = vor.u32 1.1754944e-38, %v2278
    %v2280 = vsel %vm2277, %v2279, %v2275
    %v2281 = vmul.f32 1.0, %v2280
    %v2282 = vadd.f32 %v2240, %v1618
    %v2283 = vmul.f32 %v2261, %v2282
    %v2284 = vadd.f32 %v2181, %v2283
    %v2285 = vtanh.pop %v2284
    %v2286 = vsub.f32 1.0, %v2281
    %v2287 = vmul.f32 %v2286, %v2285
    %v2288 = vmul.f32 %v2281, %v2177
    %v2289 = vadd.f32 %v2287, %v2288
    %2290 = vst [vmem:[#allocation3 + $0x28] sm:$0xff] %v2289
    %v2291 = vld [vmem:[#allocation2 + $0x138] sm:$0xff]
    %v2292 = vld [vmem:[#allocation2 + $0x140] sm:$0xff]
    %v2293 = vld [vmem:[#allocation2 + $0x148] sm:$0xff]
    %2294 = vmatpush.msra.mxu0 %v1615
    %2295 = vmatpush.msra.mxu0 %v1612
    %2296 = vmatpush.msra.mxu0 %v1609
    %2297 = vmatpush.msra.mxu0 %v1606
    %2298 = vmatpush.msra.mxu0 %v1603
    %2299 = vmatpush.msra.mxu0 %v1600
    %2300 = vmatpush.msra.mxu0 %v1597
    %2301 = vmatpush.msra.mxu0 %v1594
    %2302 = vmatpush.msra.mxu0 %v1591
    %2303 = vmatpush.msra.mxu0 %v1588
    %2304 = vmatpush.msra.mxu0 %v1585
    %2305 = vmatpush.msra.mxu0 %v1582
    %2306 = vmatpush.msra.mxu0 %v1579
    %2307 = vmatpush.msra.mxu0 %v1576
    %2308 = vmatpush.msra.mxu0 %v1573
    %2309 = vmatpush.msra.mxu0 %v1570
    %2310 = vmatmul.f32.gmra.mxu0 %v2289
    %v2311 = vpop.f32.mrf.mxu0
    %v2312 = vadd.f32 0.0, %v2311
    %2313 = vdwg.mxu0
    %2314 = vmatpush.msra.mxu0 %v1616
    %2315 = vmatpush.msra.mxu0 %v1613
    %2316 = vmatpush.msra.mxu0 %v1610
    %2317 = vmatpush.msra.mxu0 %v1607
    %2318 = vmatpush.msra.mxu0 %v1604
    %2319 = vmatpush.msra.mxu0 %v1601
    %2320 = vmatpush.msra.mxu0 %v1598
    %2321 = vmatpush.msra.mxu0 %v1595
    %2322 = vmatpush.msra.mxu0 %v1592
    %2323 = vmatpush.msra.mxu0 %v1589
    %2324 = vmatpush.msra.mxu0 %v1586
    %2325 = vmatpush.msra.mxu0 %v1583
    %2326 = vmatpush.msra.mxu0 %v1580
    %2327 = vmatpush.msra.mxu0 %v1577
    %2328 = vmatpush.msra.mxu0 %v1574
    %2329 = vmatpush.msra.mxu0 %v1571
    %2330 = vmatmul.f32.gmra.mxu0 %v2289
    %v2331 = vpop.f32.mrf.mxu0
    %v2332 = vadd.f32 0.0, %v2331
    %2333 = vdwg.mxu0
    %2334 = vmatpush.msra.mxu0 %v1617
    %2335 = vmatpush.msra.mxu0 %v1614
    %2336 = vmatpush.msra.mxu0 %v1611
    %2337 = vmatpush.msra.mxu0 %v1608
    %2338 = vmatpush.msra.mxu0 %v1605
    %2339 = vmatpush.msra.mxu0 %v1602
    %2340 = vmatpush.msra.mxu0 %v1599
    %2341 = vmatpush.msra.mxu0 %v1596
    %2342 = vmatpush.msra.mxu0 %v1593
    %2343 = vmatpush.msra.mxu0 %v1590
    %2344 = vmatpush.msra.mxu0 %v1587
    %2345 = vmatpush.msra.mxu0 %v1584
    %2346 = vmatpush.msra.mxu0 %v1581
    %2347 = vmatpush.msra.mxu0 %v1578
    %2348 = vmatpush.msra.mxu0 %v1575
    %2349 = vmatpush.msra.mxu0 %v1572
    %2350 = vmatmul.f32.gmra.mxu0 %v2289
    %v2351 = vpop.f32.mrf.mxu0
    %v2352 = vadd.f32 0.0, %v2351
    %2353 = vdwg.mxu0
    %v2354 = vadd.f32 %v2291, %v2312
    %v2355 = vxor.u32 %v2354, 2147483648
    %v2356 = vmul.f32 %v2355, 1.442695
    %v2357 = vpow.pop %v2356
    %v2358 = vadd.f32 %v2357, 1.0
    %v2359 = vrcp.pop %v2358
    %v2360 = vmul.f32 %v2358, %v2359
    %v2361 = vsub.f32 1.0, %v2360
    %v2362 = vmul.f32 %v2359, %v2361
    %v2363 = vadd.f32 %v2359, %v2362
    %vm2364 = vweird.f32 %v2358
    %vm2365 = vweird.f32 %v2359
    %vm2366 = vmor %vm2364, %vm2365
    %v2367 = vsel %vm2366, %v2359, %v2363
    %v2368 = vand.u32 2147483647, %v2358
    %vm2369 = vcmp.eq.f32.partialorder %v2368, 8.507059e+37
    %v2370 = vand.u32 %v2358, 2147483648
    %v2371 = vor.u32 1.1754944e-38, %v2370
    %v2372 = vsel %vm2369, %v2371, %v2367
    %v2373 = vmul.f32 1.0, %v2372
    %v2374 = vadd.f32 %v2292, %v2332
    %v2375 = vxor.u32 %v2374, 2147483648
    %v2376 = vmul.f32 %v2375, 1.442695
    %v2377 = vpow.pop %v2376
    %v2378 = vadd.f32 %v2377, 1.0
    %v2379 = vrcp.pop %v2378
    %v2380 = vmul.f32 %v2378, %v2379
    %v2381 = vsub.f32 1.0, %v2380
    %v2382 = vmul.f32 %v2379, %v2381
    %v2383 = vadd.f32 %v2379, %v2382
    %vm2384 = vweird.f32 %v2378
    %vm2385 = vweird.f32 %v2379
    %vm2386 = vmor %vm2384, %vm2385
    %v2387 = vsel %vm2386, %v2379, %v2383
    %v2388 = vand.u32 2147483647, %v2378
    %vm2389 = vcmp.eq.f32.partialorder %v2388, 8.507059e+37
    %v2390 = vand.u32 %v2378, 2147483648
    %v2391 = vor.u32 1.1754944e-38, %v2390
    %v2392 = vsel %vm2389, %v2391, %v2387
    %v2393 = vmul.f32 1.0, %v2392
    %v2394 = vadd.f32 %v2352, %v1618
    %v2395 = vmul.f32 %v2373, %v2394
    %v2396 = vadd.f32 %v2293, %v2395
    %v2397 = vtanh.pop %v2396
    %v2398 = vsub.f32 1.0, %v2393
    %v2399 = vmul.f32 %v2398, %v2397
    %v2400 = vmul.f32 %v2393, %v2289
    %v2401 = vadd.f32 %v2399, %v2400
    %2402 = vst [vmem:[#allocation3 + $0x30] sm:$0xff] %v2401
    %v2403 = vld [vmem:[#allocation2 + $0x168] sm:$0xff]
    %v2404 = vld [vmem:[#allocation2 + $0x170] sm:$0xff]
    %v2405 = vld [vmem:[#allocation2 + $0x178] sm:$0xff]
    %2406 = vmatpush.msra.mxu0 %v1615
    %2407 = vmatpush.msra.mxu0 %v1612
    %2408 = vmatpush.msra.mxu0 %v1609
    %2409 = vmatpush.msra.mxu0 %v1606
    %2410 = vmatpush.msra.mxu0 %v1603
    %2411 = vmatpush.msra.mxu0 %v1600
    %2412 = vmatpush.msra.mxu0 %v1597
    %2413 = vmatpush.msra.mxu0 %v1594
    %2414 = vmatpush.msra.mxu0 %v1591
    %2415 = vmatpush.msra.mxu0 %v1588
    %2416 = vmatpush.msra.mxu0 %v1585
    %2417 = vmatpush.msra.mxu0 %v1582
    %2418 = vmatpush.msra.mxu0 %v1579
    %2419 = vmatpush.msra.mxu0 %v1576
    %2420 = vmatpush.msra.mxu0 %v1573
    %2421 = vmatpush.msra.mxu0 %v1570
    %2422 = vmatmul.f32.gmra.mxu0 %v2401
    %v2423 = vpop.f32.mrf.mxu0
    %v2424 = vadd.f32 0.0, %v2423
    %2425 = vdwg.mxu0
    %2426 = vmatpush.msra.mxu0 %v1616
    %2427 = vmatpush.msra.mxu0 %v1613
    %2428 = vmatpush.msra.mxu0 %v1610
    %2429 = vmatpush.msra.mxu0 %v1607
    %2430 = vmatpush.msra.mxu0 %v1604
    %2431 = vmatpush.msra.mxu0 %v1601
    %2432 = vmatpush.msra.mxu0 %v1598
    %2433 = vmatpush.msra.mxu0 %v1595
    %2434 = vmatpush.msra.mxu0 %v1592
    %2435 = vmatpush.msra.mxu0 %v1589
    %2436 = vmatpush.msra.mxu0 %v1586
    %2437 = vmatpush.msra.mxu0 %v1583
    %2438 = vmatpush.msra.mxu0 %v1580
    %2439 = vmatpush.msra.mxu0 %v1577
    %2440 = vmatpush.msra.mxu0 %v1574
    %2441 = vmatpush.msra.mxu0 %v1571
    %2442 = vmatmul.f32.gmra.mxu0 %v2401
    %v2443 = vpop.f32.mrf.mxu0
    %v2444 = vadd.f32 0.0, %v2443
    %2445 = vdwg.mxu0
    %2446 = vmatpush.msra.mxu0 %v1617
    %2447 = vmatpush.msra.mxu0 %v1614
    %2448 = vmatpush.msra.mxu0 %v1611
    %2449 = vmatpush.msra.mxu0 %v1608
    %2450 = vmatpush.msra.mxu0 %v1605
    %2451 = vmatpush.msra.mxu0 %v1602
    %2452 = vmatpush.msra.mxu0 %v1599
    %2453 = vmatpush.msra.mxu0 %v1596
    %2454 = vmatpush.msra.mxu0 %v1593
    %2455 = vmatpush.msra.mxu0 %v1590
    %2456 = vmatpush.msra.mxu0 %v1587
    %2457 = vmatpush.msra.mxu0 %v1584
    %2458 = vmatpush.msra.mxu0 %v1581
    %2459 = vmatpush.msra.mxu0 %v1578
    %2460 = vmatpush.msra.mxu0 %v1575
    %2461 = vmatpush.msra.mxu0 %v1572
    %2462 = vmatmul.f32.gmra.mxu0 %v2401
    %v2463 = vpop.f32.mrf.mxu0
    %v2464 = vadd.f32 0.0, %v2463
    %2465 = vdwg.mxu0
    %v2466 = vadd.f32 %v2403, %v2424
    %v2467 = vxor.u32 %v2466, 2147483648
    %v2468 = vmul.f32 %v2467, 1.442695
    %v2469 = vpow.pop %v2468
    %v2470 = vadd.f32 %v2469, 1.0
    %v2471 = vrcp.pop %v2470
    %v2472 = vmul.f32 %v2470, %v2471
    %v2473 = vsub.f32 1.0, %v2472
    %v2474 = vmul.f32 %v2471, %v2473
    %v2475 = vadd.f32 %v2471, %v2474
    %vm2476 = vweird.f32 %v2470
    %vm2477 = vweird.f32 %v2471
    %vm2478 = vmor %vm2476, %vm2477
    %v2479 = vsel %vm2478, %v2471, %v2475
    %v2480 = vand.u32 2147483647, %v2470
    %vm2481 = vcmp.eq.f32.partialorder %v2480, 8.507059e+37
    %v2482 = vand.u32 %v2470, 2147483648
    %v2483 = vor.u32 1.1754944e-38, %v2482
    %v2484 = vsel %vm2481, %v2483, %v2479
    %v2485 = vmul.f32 1.0, %v2484
    %v2486 = vadd.f32 %v2404, %v2444
    %v2487 = vxor.u32 %v2486, 2147483648
    %v2488 = vmul.f32 %v2487, 1.442695
    %v2489 = vpow.pop %v2488
    %v2490 = vadd.f32 %v2489, 1.0
    %v2491 = vrcp.pop %v2490
    %v2492 = vmul.f32 %v2490, %v2491
    %v2493 = vsub.f32 1.0, %v2492
    %v2494 = vmul.f32 %v2491, %v2493
    %v2495 = vadd.f32 %v2491, %v2494
    %vm2496 = vweird.f32 %v2490
    %vm2497 = vweird.f32 %v2491
    %vm2498 = vmor %vm2496, %vm2497
    %v2499 = vsel %vm2498, %v2491, %v2495
    %v2500 = vand.u32 2147483647, %v2490
    %vm2501 = vcmp.eq.f32.partialorder %v2500, 8.507059e+37
    %v2502 = vand.u32 %v2490, 2147483648
    %v2503 = vor.u32 1.1754944e-38, %v2502
    %v2504 = vsel %vm2501, %v2503, %v2499
    %v2505 = vmul.f32 1.0, %v2504
    %v2506 = vadd.f32 %v2464, %v1618
    %v2507 = vmul.f32 %v2485, %v2506
    %v2508 = vadd.f32 %v2405, %v2507
    %v2509 = vtanh.pop %v2508
    %v2510 = vsub.f32 1.0, %v2505
    %v2511 = vmul.f32 %v2510, %v2509
    %v2512 = vmul.f32 %v2505, %v2401
    %v2513 = vadd.f32 %v2511, %v2512
    %2514 = vst [vmem:[#allocation3 + $0x38] sm:$0xff] %v2513
    %v2515 = vld [vmem:[#allocation4 + $0x480] sm:$0xff]
    %v2516 = vld [vmem:[#allocation4 + $0x4b0] sm:$0xff]
    %v2517 = vld [vmem:[#allocation4 + $0x4e0] sm:$0xff]
    %v2518 = vld [vmem:[#allocation4 + $0x510] sm:$0xff]
    %v2519 = vld [vmem:[#allocation4 + $0x540] sm:$0xff]
    %v2520 = vld [vmem:[#allocation4 + $0x570] sm:$0xff]
    %v2521 = vld [vmem:[#allocation4 + $0x5a0] sm:$0xff]
    %v2522 = vld [vmem:[#allocation4 + $0x5d0] sm:$0xff]
    %v2523 = vld [vmem:[#allocation4 + $0x600] sm:$0xff]
    %v2524 = vld [vmem:[#allocation4 + $0x630] sm:$0xff]
    %v2525 = vld [vmem:[#allocation4 + $0x660] sm:$0xff]
    %v2526 = vld [vmem:[#allocation4 + $0x690] sm:$0xff]
    %v2527 = vld [vmem:[#allocation4 + $0x6c0] sm:$0xff]
    %v2528 = vld [vmem:[#allocation4 + $0x6f0] sm:$0xff]
    %v2529 = vld [vmem:[#allocation4 + $0x720] sm:$0xff]
    %v2530 = vld [vmem:[#allocation4 + $0x750] sm:$0xff]
    %v2531 = vld [vmem:[#allocation4 + $0x7c8] ss:$0 sm:$0xff]
    %v2532 = vld [vmem:[#allocation3] sm:$0xff]
    %v2533 = vld [vmem:[#allocation3 + $0x8] sm:$0xff]
    %v2534 = vld [vmem:[#allocation3 + $0x10] sm:$0xff]
    %v2535 = vld [vmem:[#allocation3 + $0x18] sm:$0xff]
    %v2536 = vld [vmem:[#allocation3 + $0x20] sm:$0xff]
    %v2537 = vld [vmem:[#allocation3 + $0x28] sm:$0xff]
    %v2538 = vld [vmem:[#allocation3 + $0x30] sm:$0xff]
    %v2539 = vld [vmem:[#allocation3 + $0x38] sm:$0xff]
    %2540 = vmatpush.msra.mxu0 %v2530
    %2541 = vmatpush.msra.mxu0 %v2529
    %2542 = vmatpush.msra.mxu0 %v2528
    %2543 = vmatpush.msra.mxu0 %v2527
    %2544 = vmatpush.msra.mxu0 %v2526
    %2545 = vmatpush.msra.mxu0 %v2525
    %2546 = vmatpush.msra.mxu0 %v2524
    %2547 = vmatpush.msra.mxu0 %v2523
    %2548 = vmatpush.msra.mxu0 %v2522
    %2549 = vmatpush.msra.mxu0 %v2521
    %2550 = vmatpush.msra.mxu0 %v2520
    %2551 = vmatpush.msra.mxu0 %v2519
    %2552 = vmatpush.msra.mxu0 %v2518
    %2553 = vmatpush.msra.mxu0 %v2517
    %2554 = vmatpush.msra.mxu0 %v2516
    %2555 = vmatpush.msra.mxu0 %v2515
    %2556 = vmatmul.f32.gmra.mxu0 %v2532
    %v2557 = vpop.f32.mrf.mxu0
    %v2558 = vadd.f32 %v2531, %v2557
    %2559 = vmatmul.f32.gmra.mxu0 %v2533
    %v2560 = vpop.f32.mrf.mxu0
    %v2561 = vadd.f32 %v2531, %v2560
    %2562 = vmatmul.f32.gmra.mxu0 %v2534
    %v2563 = vpop.f32.mrf.mxu0
    %v2564 = vadd.f32 %v2531, %v2563
    %2565 = vmatmul.f32.gmra.mxu0 %v2535
    %v2566 = vpop.f32.mrf.mxu0
    %v2567 = vadd.f32 %v2531, %v2566
    %2568 = vmatmul.f32.gmra.mxu0 %v2536
    %v2569 = vpop.f32.mrf.mxu0
    %v2570 = vadd.f32 %v2531, %v2569
    %2571 = vmatmul.f32.gmra.mxu0 %v2537
    %v2572 = vpop.f32.mrf.mxu0
    %v2573 = vadd.f32 %v2531, %v2572
    %2574 = vmatmul.f32.gmra.mxu0 %v2538
    %v2575 = vpop.f32.mrf.mxu0
    %v2576 = vadd.f32 %v2531, %v2575
    %2577 = vmatmul.f32.gmra.mxu0 %v2539
    %v2578 = vpop.f32.mrf.mxu0
    %v2579 = vadd.f32 %v2531, %v2578
    %2580 = vdwg.mxu0
    %vm2581 = vcmp.lt.s32.totalorder %v42, 32
    %v2582 = vsel %vm2581, %v2558, -1e+30
    %v2583 = vsel %vm2581, %v2561, -1e+30
    %v2584 = vsel %vm2581, %v2564, -1e+30
    %v2585 = vsel %vm2581, %v2567, -1e+30
    %v2586 = vsel %vm2581, %v2570, -1e+30
    %v2587 = vsel %vm2581, %v2573, -1e+30
    %v2588 = vsel %vm2581, %v2576, -1e+30
    %v2589 = vsel %vm2581, %v2579, -1e+30
    %2590 = vmax.xlane.f32.xlu0 %v2582
    %v2591 = vpop.xlane.xlu0 %2590
    %2592 = vmax.xlane.f32.xlu0 %v2583
    %v2593 = vpop.xlane.xlu0 %2592
    %2594 = vmax.xlane.f32.xlu0 %v2584
    %v2595 = vpop.xlane.xlu0 %2594
    %2596 = vmax.xlane.f32.xlu0 %v2585
    %v2597 = vpop.xlane.xlu0 %2596
    %2598 = vmax.xlane.f32.xlu0 %v2586
    %v2599 = vpop.xlane.xlu0 %2598
    %2600 = vmax.xlane.f32.xlu0 %v2587
    %v2601 = vpop.xlane.xlu0 %2600
    %2602 = vmax.xlane.f32.xlu0 %v2588
    %v2603 = vpop.xlane.xlu0 %2602
    %2604 = vmax.xlane.f32.xlu0 %v2589
    %v2605 = vpop.xlane.xlu0 %2604
    %v2606 = vsub.f32 %v2582, %v2591
    %v2607 = vsub.f32 %v2583, %v2593
    %v2608 = vsub.f32 %v2584, %v2595
    %v2609 = vsub.f32 %v2585, %v2597
    %v2610 = vsub.f32 %v2586, %v2599
    %v2611 = vsub.f32 %v2587, %v2601
    %v2612 = vsub.f32 %v2588, %v2603
    %v2613 = vsub.f32 %v2589, %v2605
    %v2614 = vmul.f32 %v2606, 1.442695
    %v2615 = vpow.pop %v2614
    %v2616 = vmul.f32 %v2607, 1.442695
    %v2617 = vpow.pop %v2616
    %v2618 = vmul.f32 %v2608, 1.442695
    %v2619 = vpow.pop %v2618
    %v2620 = vmul.f32 %v2609, 1.442695
    %v2621 = vpow.pop %v2620
    %v2622 = vmul.f32 %v2610, 1.442695
    %v2623 = vpow.pop %v2622
    %v2624 = vmul.f32 %v2611, 1.442695
    %v2625 = vpow.pop %v2624
    %v2626 = vmul.f32 %v2612, 1.442695
    %v2627 = vpow.pop %v2626
    %v2628 = vmul.f32 %v2613, 1.442695
    %v2629 = vpow.pop %v2628
    %2630 = vadd.xlane.f32.xlu0 %v2615
    %v2631 = vpop.xlane.xlu0 %2630
    %2632 = vadd.xlane.f32.xlu0 %v2617
    %v2633 = vpop.xlane.xlu0 %2632
    %2634 = vadd.xlane.f32.xlu0 %v2619
    %v2635 = vpop.xlane.xlu0 %2634
    %2636 = vadd.xlane.f32.xlu0 %v2621
    %v2637 = vpop.xlane.xlu0 %2636
    %2638 = vadd.xlane.f32.xlu0 %v2623
    %v2639 = vpop.xlane.xlu0 %2638
    %2640 = vadd.xlane.f32.xlu0 %v2625
    %v2641 = vpop.xlane.xlu0 %2640
    %2642 = vadd.xlane.f32.xlu0 %v2627
    %v2643 = vpop.xlane.xlu0 %2642
    %2644 = vadd.xlane.f32.xlu0 %v2629
    %v2645 = vpop.xlane.xlu0 %2644
    %v2646 = vlog2.pop %v2631
    %v2647 = vmul.f32 %v2646, 0.6931472
    %v2648 = vlog2.pop %v2633
    %v2649 = vmul.f32 %v2648, 0.6931472
    %v2650 = vlog2.pop %v2635
    %v2651 = vmul.f32 %v2650, 0.6931472
    %v2652 = vlog2.pop %v2637
    %v2653 = vmul.f32 %v2652, 0.6931472
    %v2654 = vlog2.pop %v2639
    %v2655 = vmul.f32 %v2654, 0.6931472
    %v2656 = vlog2.pop %v2641
    %v2657 = vmul.f32 %v2656, 0.6931472
    %v2658 = vlog2.pop %v2643
    %v2659 = vmul.f32 %v2658, 0.6931472
    %v2660 = vlog2.pop %v2645
    %v2661 = vmul.f32 %v2660, 0.6931472
    %v2662 = vadd.f32 %v2591, %v2647
    %v2663 = vadd.f32 %v2593, %v2649
    %v2664 = vadd.f32 %v2595, %v2651
    %v2665 = vadd.f32 %v2597, %v2653
    %v2666 = vadd.f32 %v2599, %v2655
    %v2667 = vadd.f32 %v2601, %v2657
    %v2668 = vadd.f32 %v2603, %v2659
    %v2669 = vadd.f32 %v2605, %v2661
    %2670 = vset.pattern.permute.xlu0 2
    %2671 = vperm.xlu0 %2670, %v33
    %v2672 = vpop.permute.xlu0 %2671
    %2673 = vset.pattern.permute.xlu0 2
    %2674 = vperm.xlu0 %2673, %v34
    %v2675 = vpop.permute.xlu0 %2674
    %2676 = vset.pattern.permute.xlu0 2
    %2677 = vperm.xlu0 %2676, %v35
    %v2678 = vpop.permute.xlu0 %2677
    %2679 = vset.pattern.permute.xlu0 2
    %2680 = vperm.xlu0 %2679, %v36
    %v2681 = vpop.permute.xlu0 %2680
    %2682 = vset.pattern.permute.xlu0 2
    %2683 = vperm.xlu0 %2682, %v37
    %v2684 = vpop.permute.xlu0 %2683
    %2685 = vset.pattern.permute.xlu0 2
    %2686 = vperm.xlu0 %2685, %v38
    %v2687 = vpop.permute.xlu0 %2686
    %2688 = vset.pattern.permute.xlu0 2
    %2689 = vperm.xlu0 %2688, %v39
    %v2690 = vpop.permute.xlu0 %2689
    %2691 = vset.pattern.permute.xlu0 2
    %2692 = vperm.xlu0 %2691, %v40
    %v2693 = vpop.permute.xlu0 %2692
    %vm2694 = vcmp.eq.s32.totalorder %v42, %v2672
    %vm2695 = vcmp.eq.s32.totalorder %v42, %v2675
    %vm2696 = vcmp.eq.s32.totalorder %v42, %v2678
    %vm2697 = vcmp.eq.s32.totalorder %v42, %v2681
    %vm2698 = vcmp.eq.s32.totalorder %v42, %v2684
    %vm2699 = vcmp.eq.s32.totalorder %v42, %v2687
    %vm2700 = vcmp.eq.s32.totalorder %v42, %v2690
    %vm2701 = vcmp.eq.s32.totalorder %v42, %v2693
    %v2702 = vsel %vm2694, %v2582, 0.0
    %v2703 = vsel %vm2695, %v2583, 0.0
    %v2704 = vsel %vm2696, %v2584, 0.0
    %v2705 = vsel %vm2697, %v2585, 0.0
    %v2706 = vsel %vm2698, %v2586, 0.0
    %v2707 = vsel %vm2699, %v2587, 0.0
    %v2708 = vsel %vm2700, %v2588, 0.0
    %v2709 = vsel %vm2701, %v2589, 0.0
    %2710 = vadd.xlane.f32.xlu0 %v2702
    %v2711 = vpop.xlane.xlu0 %2710
    %2712 = vadd.xlane.f32.xlu0 %v2703
    %v2713 = vpop.xlane.xlu0 %2712
    %2714 = vadd.xlane.f32.xlu0 %v2704
    %v2715 = vpop.xlane.xlu0 %2714
    %2716 = vadd.xlane.f32.xlu0 %v2705
    %v2717 = vpop.xlane.xlu0 %2716
    %2718 = vadd.xlane.f32.xlu0 %v2706
    %v2719 = vpop.xlane.xlu0 %2718
    %2720 = vadd.xlane.f32.xlu0 %v2707
    %v2721 = vpop.xlane.xlu0 %2720
    %2722 = vadd.xlane.f32.xlu0 %v2708
    %v2723 = vpop.xlane.xlu0 %2722
    %2724 = vadd.xlane.f32.xlu0 %v2709
    %v2725 = vpop.xlane.xlu0 %2724
    %vm2726 = vcmp.ne.s32.totalorder %v33, 0
    %vm2727 = vcmp.ne.s32.totalorder %v34, 0
    %vm2728 = vcmp.ne.s32.totalorder %v35, 0
    %vm2729 = vcmp.ne.s32.totalorder %v36, 0
    %vm2730 = vcmp.ne.s32.totalorder %v37, 0
    %vm2731 = vcmp.ne.s32.totalorder %v38, 0
    %vm2732 = vcmp.ne.s32.totalorder %v39, 0
    %vm2733 = vcmp.ne.s32.totalorder %v40, 0
    %v2734 = vsel %vm2726, 1, 0
    %v2735 = vsel %vm2727, 1, 0
    %v2736 = vsel %vm2728, 1, 0
    %v2737 = vsel %vm2729, 1, 0
    %v2738 = vsel %vm2730, 1, 0
    %v2739 = vsel %vm2731, 1, 0
    %v2740 = vsel %vm2732, 1, 0
    %v2741 = vsel %vm2733, 1, 0
    %v2742 = vcvt.s32.f32 %v2734
    %v2743 = vcvt.s32.f32 %v2735
    %v2744 = vcvt.s32.f32 %v2736
    %v2745 = vcvt.s32.f32 %v2737
    %v2746 = vcvt.s32.f32 %v2738
    %v2747 = vcvt.s32.f32 %v2739
    %v2748 = vcvt.s32.f32 %v2740
    %v2749 = vcvt.s32.f32 %v2741
    %2758 = vrot.lane.b32.xlu0 %v2742, 126
    %v2759 = vpop.permute.xlu0 %2758
    %2760 = vrot.lane.b32.xlu0 %v2743, 126
    %v2761 = vpop.permute.xlu0 %2760
    %2762 = vrot.lane.b32.xlu0 %v2744, 126
    %v2763 = vpop.permute.xlu0 %2762
    %2764 = vrot.lane.b32.xlu0 %v2745, 126
    %v2765 = vpop.permute.xlu0 %2764
    %2766 = vrot.lane.b32.xlu0 %v2746, 126
    %v2767 = vpop.permute.xlu0 %2766
    %2768 = vrot.lane.b32.xlu0 %v2747, 126
    %v2769 = vpop.permute.xlu0 %2768
    %2770 = vrot.lane.b32.xlu0 %v2748, 126
    %v2771 = vpop.permute.xlu0 %2770
    %2772 = vrot.lane.b32.xlu0 %v2749, 126
    %v2773 = vpop.permute.xlu0 %2772
    %vm2782 = vcmask 7168
    %v2783 = vsel %vm2782, %v2759, 0.0
    %v2784 = vsel %vm2782, %v2761, 0.0
    %v2785 = vadd.f32 %v2783, %v2784
    %v2786 = vsel %vm2782, %v2763, 0.0
    %v2787 = vadd.f32 %v2785, %v2786
    %v2788 = vsel %vm2782, %v2765, 0.0
    %v2789 = vadd.f32 %v2787, %v2788
    %v2790 = vsel %vm2782, %v2767, 0.0
    %v2791 = vadd.f32 %v2789, %v2790
    %v2792 = vsel %vm2782, %v2769, 0.0
    %v2793 = vadd.f32 %v2791, %v2792
    %v2794 = vsel %vm2782, %v2771, 0.0
    %v2795 = vadd.f32 %v2793, %v2794
    %v2796 = vsel %vm2782, %v2773, 0.0
    %v2797 = vadd.f32 %v2795, %v2796
    %2798 = vadd.xlane.f32.xlu0 %v2797
    %v2799 = vpop.xlane.xlu0 %2798
    %v2800 = vrot.slane %v2799, 4
    %v2801 = vadd.f32 %v2799, %v2800
    %v2802 = vrot.slane %v2801, 2
    %v2803 = vadd.f32 %v2801, %v2802
    %v2804 = vrot.slane %v2803, 1
    %v2805 = vadd.f32 %v2803, %v2804
    %s2806 = vtos %v2805
    %s2807 = smax.f32 %s2806, 1.0
    %v2808 = vsub.f32 %v2662, %v2711
    %v2809 = vsub.f32 %v2663, %v2713
    %v2810 = vsub.f32 %v2664, %v2715
    %v2811 = vsub.f32 %v2665, %v2717
    %v2812 = vsub.f32 %v2666, %v2719
    %v2813 = vsub.f32 %v2667, %v2721
    %v2814 = vsub.f32 %v2668, %v2723
    %v2815 = vsub.f32 %v2669, %v2725
    %v2816 = vmul.f32 %v2808, %v2742
    %v2817 = vmul.f32 %v2809, %v2743
    %v2818 = vmul.f32 %v2810, %v2744
    %v2819 = vmul.f32 %v2811, %v2745
    %v2820 = vmul.f32 %v2812, %v2746
    %v2821 = vmul.f32 %v2813, %v2747
    %v2822 = vmul.f32 %v2814, %v2748
    %v2823 = vmul.f32 %v2815, %v2749
    %2832 = vrot.lane.b32.xlu0 %v2816, 126
    %v2833 = vpop.permute.xlu0 %2832
    %2834 = vrot.lane.b32.xlu0 %v2817, 126
    %v2835 = vpop.permute.xlu0 %2834
    %2836 = vrot.lane.b32.xlu0 %v2818, 126
    %v2837 = vpop.permute.xlu0 %2836
    %2838 = vrot.lane.b32.xlu0 %v2819, 126
    %v2839 = vpop.permute.xlu0 %2838
    %2840 = vrot.lane.b32.xlu0 %v2820, 126
    %v2841 = vpop.permute.xlu0 %2840
    %2842 = vrot.lane.b32.xlu0 %v2821, 126
    %v2843 = vpop.permute.xlu0 %2842
    %2844 = vrot.lane.b32.xlu0 %v2822, 126
    %v2845 = vpop.permute.xlu0 %2844
    %2846 = vrot.lane.b32.xlu0 %v2823, 126
    %v2847 = vpop.permute.xlu0 %2846
    %v2856 = vsel %vm2782, %v2833, 0.0
    %v2857 = vsel %vm2782, %v2835, 0.0
    %v2858 = vadd.f32 %v2856, %v2857
    %v2859 = vsel %vm2782, %v2837, 0.0
    %v2860 = vadd.f32 %v2858, %v2859
    %v2861 = vsel %vm2782, %v2839, 0.0
    %v2862 = vadd.f32 %v2860, %v2861
    %v2863 = vsel %vm2782, %v2841, 0.0
    %v2864 = vadd.f32 %v2862, %v2863
    %v2865 = vsel %vm2782, %v2843, 0.0
    %v2866 = vadd.f32 %v2864, %v2865
    %v2867 = vsel %vm2782, %v2845, 0.0
    %v2868 = vadd.f32 %v2866, %v2867
    %v2869 = vsel %vm2782, %v2847, 0.0
    %v2870 = vadd.f32 %v2868, %v2869
    %2871 = vadd.xlane.f32.xlu0 %v2870
    %v2872 = vpop.xlane.xlu0 %2871
    %v2873 = vrot.slane %v2872, 4
    %v2874 = vadd.f32 %v2872, %v2873
    %v2875 = vrot.slane %v2874, 2
    %v2876 = vadd.f32 %v2874, %v2875
    %v2877 = vrot.slane %v2876, 1
    %v2878 = vadd.f32 %v2876, %v2877
    %s2879 = vtos %v2878
    %v2880 = vstv %s2807
    %v2881 = vrcp.pop %v2880
    %v2882 = vmul.f32 %v2880, %v2881
    %v2883 = vsub.f32 1.0, %v2882
    %v2884 = vmul.f32 %v2881, %v2883
    %v2885 = vadd.f32 %v2881, %v2884
    %vm2886 = vweird.f32 %v2880
    %vm2887 = vweird.f32 %v2881
    %vm2888 = vmor %vm2886, %vm2887
    %v2889 = vsel %vm2888, %v2881, %v2885
    %v2890 = vand.u32 2147483647, %v2880
    %vm2891 = vcmp.eq.f32.partialorder %v2890, 8.507059e+37
    %v2892 = vand.u32 %v2880, 2147483648
    %v2893 = vor.u32 1.1754944e-38, %v2892
    %v2894 = vsel %vm2891, %v2893, %v2889
    %s2895 = vtos %v2894
    %s2896 = smul.f32 %s2879, %s2895
    %s2897 = smul.f32 %s2896, 8.0
    %2898 = vst.msk [vmem:[%s4] sm:$0xff] %vm2782, %v1543
    %v2899 = vsel %vm2782, %v1543, 0.0
    %2900 = vadd.xlane.f32.xlu0 %v2899
    %v2901 = vpop.xlane.xlu0 %2900
    %v2902 = vrot.slane %v2901, 4
    %v2903 = vadd.f32 %v2901, %v2902
    %v2904 = vrot.slane %v2903, 2
    %v2905 = vadd.f32 %v2903, %v2904
    %v2906 = vrot.slane %v2905, 1
    %v2907 = vadd.f32 %v2905, %v2906
    %s2908 = vtos %v2907
    %v2909 = vrcp.pop 8.0
    %v2910 = vmul.f32 8.0, %v2909
    %v2911 = vsub.f32 1.0, %v2910
    %v2912 = vmul.f32 %v2909, %v2911
    %v2913 = vadd.f32 %v2909, %v2912
    %vm2914 = vweird.f32 %v2909
    %v2915 = vsel %vm2914, %v2909, %v2913
    %s2916 = vtos %v2915
    %s2917 = smul.f32 %s2908, %s2916
    %s2918 = sadd.f32 %s2917, %s2897
    %v2919 = vstv %s2918
    %vm2920 = vcmask 0
    %2921 = vst.msk [vmem:[#allocation7] sm:$0x1] %vm2920, %v2919
    // Predicated region
    $region18: #{free_bits_vae_forward.1} parent=1 // pred_check
      _
    $region19: #{free_bits_vae_forward.1} parent=1 // pred_check_branch
      %2923 = sbr.rel (0) target = $region21
    $region20: #{free_bits_vae_forward.1} parent=1 // pred_region
      %2925 = vsyncadd [#allocation6], 0
      %s2927 = sshll.u32 [#allocation7], 4
      %s2928 = int_to_ptr.vmem [resolvable:$true] %s2927
      %s2929 = sshll.u32 %s3, 4
      %s2930 = int_to_ptr.hbm [resolvable:$true] %s2929
      %2932 = dma.vmem_to_hbm [thread:$0]  %s2928, 16, %s2930, [#allocation6]
    $region21: #{free_bits_vae_forward.1} parent=1 // pred_fallthru
      _
    // Predicated region
    $region22: #{free_bits_vae_forward.1} parent=1 // pred_check
      _
    $region23: #{free_bits_vae_forward.1} parent=1 // pred_check_branch
      %2934 = sbr.rel (0) target = $region25
    $region24: #{free_bits_vae_forward.1} parent=1 // pred_region
      _
    $region25: #{free_bits_vae_forward.1} parent=1 // pred_fallthru
      _
    // Predicated region
    $region26: #{free_bits_vae_forward.1} parent=1 // pred_check
      _
    $region27: #{free_bits_vae_forward.1} parent=1 // pred_check_branch
      %2936 = sbr.rel (0) target = $region29
    $region28: #{free_bits_vae_forward.1} parent=1 // pred_region
      %2938 = dma.done [#allocation6], 16
    $region29: #{free_bits_vae_forward.1} parent=1 // pred_fallthru
      _
    // Predicated region
    $region30: #{free_bits_vae_forward.1} parent=1 // pred_check
      _
    $region31: #{free_bits_vae_forward.1} parent=1 // pred_check_branch
      %2940 = sbr.rel (0) target = $region33
    $region32: #{free_bits_vae_forward.1} parent=1 // pred_region
      _
    $region33: #{free_bits_vae_forward.1} parent=1 // pred_fallthru
      _
    %2941 = vsyncpa [#allocation5], 1
    %2942 = vsyncpa [#allocation6], 1

</llo_original>
